<compile_context>
chip_gen: v5e
topology: v5e:2x2
jax: 0.10.0
libtpu: 0.0.40
codegen_flags: <defaults>
</compile_context>

<pallas_src>
import functools
import math

import jax
import jax.numpy as jnp
from jax import lax
from jax.experimental import pallas as pl
from jax.experimental.pallas import tpu as pltpu


# ------------------------------ Pallas kernel --------------------------------

def _attention_block_kernel(x_ref, g_ref, bt_ref, win_ref, bin_ref,
                            wo_ref, bo_ref, o_ref,
                            *, num_groups, num_heads, eps):
    """One batch element: GroupNorm + MHSA + residual, entirely in VMEM."""
    x = x_ref[0]                                   # (C, S) f32, feature-major
    C, S = x.shape
    cg = C // num_groups
    dh = C // num_heads

    # ---------------- GroupNorm(num_groups, C) + affine ----------------
    xg = x.reshape(num_groups, cg, S)
    m = jnp.mean(xg, axis=2, keepdims=True)        # (G, cg, 1)
    m = jnp.mean(m, axis=1, keepdims=True)         # (G, 1, 1)
    d = xg - m
    v = jnp.mean(jnp.square(d), axis=2, keepdims=True)
    v = jnp.mean(v, axis=1, keepdims=True)
    hn = (d * lax.rsqrt(v + eps)).reshape(C, S)
    hn = hn * g_ref[...] + bt_ref[...]             # gamma/beta as (C, 1)

    hb = hn.astype(jnp.bfloat16)

    # ---------------- QKV projection: one (3C,C)@(C,S) MXU pass ----------------
    # 1/sqrt(dh) is already folded into the Q rows of win/bin on the host.
    qkv = jnp.dot(win_ref[...], hb, preferred_element_type=jnp.float32)
    qkv = qkv + bin_ref[...]                       # (3C, S) f32

    q_all = qkv[0:C]                               # (C, S)
    k_all = qkv[C:2 * C]
    v_all = qkv[2 * C:3 * C]

    # ---------------- per-head attention (4 unrolled iterations) ----------------
    heads = []
    for h in range(num_heads):
        qh = q_all[h * dh:(h + 1) * dh].T.astype(jnp.bfloat16)   # (S, dh)
        kh = k_all[h * dh:(h + 1) * dh].astype(jnp.bfloat16)     # (dh, S)
        vh = v_all[h * dh:(h + 1) * dh].astype(jnp.bfloat16)     # (dh, S)

        s = jnp.dot(qh, kh, preferred_element_type=jnp.float32)  # (S, S)
        s = s - jnp.max(s, axis=-1, keepdims=True)
        p = jnp.exp(s)
        p = p * pl.reciprocal(jnp.sum(p, axis=-1, keepdims=True), approx=True)

        # o[d, q] = sum_k v[d, k] * p[q, k]   -> feature-major (dh, S)
        oh = lax.dot_general(vh, p.astype(jnp.bfloat16),
                             (((1,), (1,)), ((), ())),
                             preferred_element_type=jnp.float32)
        heads.append(oh)

    o_fm = jnp.concatenate(heads, axis=0).astype(jnp.bfloat16)   # (C, S)

    # ---------------- output projection + residual ----------------
    y = jnp.dot(wo_ref[...], o_fm, preferred_element_type=jnp.float32)
    y = y + bo_ref[...]                                          # (C, S)
    o_ref[0] = x + y


# ------------------------------ wrapper ---------------------------------------

def attention_block(x, params, *, num_groups=8, num_heads=4, eps=1e-5):
    """PyTorch AttentionBlock.forward.  x: (B, C, H, W) float32."""
    B, C, H, W = x.shape
    S = H * W
    dh = C // num_heads
    scale = 1.0 / math.sqrt(dh)

    x3 = x.reshape(B, C, S).astype(jnp.float32)     # free reshape (trailing dims)

    in_w = jnp.asarray(params["in_w"], jnp.float32)     # (3C, C)
    in_b = jnp.asarray(params["in_b"], jnp.float32)     # (3C,)
    out_w = jnp.asarray(params["out_w"], jnp.float32)   # (C, C)
    out_b = jnp.asarray(params["out_b"], jnp.float32)   # (C,)

    # One-time host-side prep: fold 1/sqrt(dh) into the Q rows, cast to bf16,
    # column-vector biases so they broadcast along the lane (S) dim in-kernel.
    row_scale = jnp.concatenate([jnp.full((C,), scale, jnp.float32),
                                 jnp.ones((2 * C,), jnp.float32)])
    w_in = (in_w * row_scale[:, None]).astype(jnp.bfloat16)        # (3C, C)
    b_in = (in_b * row_scale).reshape(3 * C, 1).astype(jnp.float32)
    w_out = out_w.astype(jnp.bfloat16)                             # (C, C)
    b_out = out_b.reshape(C, 1).astype(jnp.float32)
    gamma = jnp.asarray(params["gamma"], jnp.float32).reshape(C, 1)
    beta = jnp.asarray(params["beta"], jnp.float32).reshape(C, 1)

    out = pl.pallas_call(
        functools.partial(_attention_block_kernel, num_groups=num_groups,
                          num_heads=num_heads, eps=eps),
        out_shape=jax.ShapeDtypeStruct((B, C, S), jnp.float32),
        grid=(B,),
        in_specs=[
            pl.BlockSpec((1, C, S), lambda b: (b, 0, 0)),          # x
            pl.BlockSpec((C, 1), lambda b: (0, 0)),                # gamma
            pl.BlockSpec((C, 1), lambda b: (0, 0)),                # beta
            pl.BlockSpec((3 * C, C), lambda b: (0, 0)),            # W_in (q scaled)
            pl.BlockSpec((3 * C, 1), lambda b: (0, 0)),            # b_in
            pl.BlockSpec((C, C), lambda b: (0, 0)),                # W_out
            pl.BlockSpec((C, 1), lambda b: (0, 0)),                # b_out
        ],
        out_specs=pl.BlockSpec((1, C, S), lambda b: (b, 0, 0)),
        compiler_params=pltpu.CompilerParams(
            dimension_semantics=("parallel",),       # v7x: both TCs get work
            vmem_limit_bytes=64 * 1024 * 1024,
        ),
    )(x3, gamma, beta, w_in, b_in, w_out, b_out)
    return out.reshape(B, C, H, W)


# -------------------------- pure-JAX reference --------------------------------

def attention_block_ref(x, params, *, num_groups=8, num_heads=4, eps=1e-5):
    B, C, H, W = x.shape
    S = H * W
    dh = C // num_heads
    xr = x.reshape(B, C, S)
    xg = xr.reshape(B, num_groups, (C // num_groups) * S)
    mean = xg.mean(axis=-1, keepdims=True)
    var = jnp.square(xg - mean).mean(axis=-1, keepdims=True)
    hn = ((xg - mean) / jnp.sqrt(var + eps)).reshape(B, C, S)
    hn = hn * params["gamma"][None, :, None] + params["beta"][None, :, None]
    h = hn.transpose(0, 2, 1)                                       # (B, S, C)
    qkv = h @ params["in_w"].T + params["in_b"]                     # (B, S, 3C)
    q, k, v = jnp.split(qkv, 3, axis=-1)
    to_heads = lambda t: t.reshape(B, S, num_heads, dh).transpose(0, 2, 1, 3)
    q, k, v = to_heads(q), to_heads(k), to_heads(v)
    s = (q @ k.transpose(0, 1, 3, 2)) / math.sqrt(dh)
    p = jax.nn.softmax(s, axis=-1)
    o = (p @ v).transpose(0, 2, 1, 3).reshape(B, S, C)
    y = o @ params["out_w"].T + params["out_b"]
    return x + y.transpose(0, 2, 1).reshape(B, C, H, W)


# ------------------------------------ main -------------------------------------

if __name__ == "__main__":
    key = jax.random.PRNGKey(0)
    kx, k1, k2, k3, k4, k5, k6 = jax.random.split(key, 7)
    B, C, H, W = 2, 64, 16, 16          # AttentionBlock(channels=64), S = 256
    x = jax.random.normal(kx, (B, C, H, W), jnp.float32)

    std = 1.0 / math.sqrt(C)
    params = {
        "gamma": jnp.ones((C,), jnp.float32)
                 + 0.05 * jax.random.normal(k5, (C,), jnp.float32),
        "beta": 0.05 * jax.random.normal(k6, (C,), jnp.float32),
        "in_w": jax.random.uniform(k1, (3 * C, C), jnp.float32, -std, std),
        "in_b": 0.02 * jax.random.normal(k2, (3 * C,), jnp.float32),
        "out_w": jax.random.uniform(k3, (C, C), jnp.float32, -std, std),
        "out_b": 0.02 * jax.random.normal(k4, (C,), jnp.float32),
    }

    fwd = jax.jit(attention_block)
    out = jax.block_until_ready(fwd(x, params))

    assert out.shape == (B, C, H, W), out.shape
    assert bool(jnp.all(jnp.isfinite(out)))

    # bf16 MXU operands + approx reciprocal => loose tolerance vs f32 reference.
    ref = attention_block_ref(x, params)
    max_err = float(jnp.max(jnp.abs(out - ref)))
    assert max_err < 0.15, f"max abs error vs reference: {max_err}"

    print("KERNEL_OK")
</pallas_src>

<mosaic_0001>
module attributes {stable_mosaic.version = 11 : i64} {
  func.func @_attention_block_kernel(%arg0: i32, %arg1: memref<1x64x256xf32, #tpu.memory_space<vmem>>, %arg2: memref<64x1xf32, #tpu.memory_space<vmem>>, %arg3: memref<64x1xf32, #tpu.memory_space<vmem>>, %arg4: memref<192x64xbf16, #tpu.memory_space<vmem>>, %arg5: memref<192x1xf32, #tpu.memory_space<vmem>>, %arg6: memref<64x64xbf16, #tpu.memory_space<vmem>>, %arg7: memref<64x1xf32, #tpu.memory_space<vmem>>, %arg8: memref<1x64x256xf32, #tpu.memory_space<vmem>>) attributes {dimension_semantics = [#tpu.dimension_semantics<parallel>], iteration_bounds = array<i64: 2>, scalar_prefetch = 0 : i64, scratch_operands = 0 : i64, tpu.core_type = #tpu.core_type<tc>, window_params = [{transform_indices = @transform_0, window_bounds = array<i64: 1, 64, 256>}, {pipeline_mode = #tpu.pipeline_mode<synchronous>, transform_indices = @transform_1, window_bounds = array<i64: 64, 1>}, {pipeline_mode = #tpu.pipeline_mode<synchronous>, transform_indices = @transform_2, window_bounds = array<i64: 64, 1>}, {pipeline_mode = #tpu.pipeline_mode<synchronous>, transform_indices = @transform_3, window_bounds = array<i64: 192, 64>}, {pipeline_mode = #tpu.pipeline_mode<synchronous>, transform_indices = @transform_4, window_bounds = array<i64: 192, 1>}, {pipeline_mode = #tpu.pipeline_mode<synchronous>, transform_indices = @transform_5, window_bounds = array<i64: 64, 64>}, {pipeline_mode = #tpu.pipeline_mode<synchronous>, transform_indices = @transform_6, window_bounds = array<i64: 64, 1>}, {transform_indices = @transform_7, window_bounds = array<i64: 1, 64, 256>}]} {
    %c0 = arith.constant 0 : index
    %c0_0 = arith.constant 0 : index
    %c0_1 = arith.constant 0 : index
    %0 = vector.load %arg1[%c0, %c0_0, %c0_1] : memref<1x64x256xf32, #tpu.memory_space<vmem>>, vector<1x64x256xf32>
    %1 = vector.shape_cast %0 : vector<1x64x256xf32> to vector<64x256xf32>
    %2 = vector.shape_cast %1 : vector<64x256xf32> to vector<8x8x256xf32>
    %cst = arith.constant dense<0.000000e+00> : vector<8x8xf32>
    %3 = vector.multi_reduction <add>, %2, %cst [2] : vector<8x8x256xf32> to vector<8x8xf32>
    %4 = vector.shape_cast %3 : vector<8x8xf32> to vector<8x8x1xf32>
    %cst_2 = arith.constant 2.560000e+02 : f32
    %5 = vector.broadcast %cst_2 : f32 to vector<8x8x1xf32>
    %6 = arith.divf %4, %5 : vector<8x8x1xf32>
    %cst_3 = arith.constant dense<0.000000e+00> : vector<8x1xf32>
    %7 = vector.multi_reduction <add>, %6, %cst_3 [1] : vector<8x8x1xf32> to vector<8x1xf32>
    %8 = vector.shape_cast %7 : vector<8x1xf32> to vector<8x1x1xf32>
    %cst_4 = arith.constant 8.000000e+00 : f32
    %9 = vector.broadcast %cst_4 : f32 to vector<8x1x1xf32>
    %10 = arith.divf %8, %9 : vector<8x1x1xf32>
    %11 = vector.broadcast %10 : vector<8x1x1xf32> to vector<8x8x256xf32>
    %12 = arith.subf %2, %11 : vector<8x8x256xf32>
    %13 = arith.mulf %12, %12 : vector<8x8x256xf32>
    %cst_5 = arith.constant dense<0.000000e+00> : vector<8x8xf32>
    %14 = vector.multi_reduction <add>, %13, %cst_5 [2] : vector<8x8x256xf32> to vector<8x8xf32>
    %15 = vector.shape_cast %14 : vector<8x8xf32> to vector<8x8x1xf32>
    %cst_6 = arith.constant 2.560000e+02 : f32
    %16 = vector.broadcast %cst_6 : f32 to vector<8x8x1xf32>
    %17 = arith.divf %15, %16 : vector<8x8x1xf32>
    %cst_7 = arith.constant dense<0.000000e+00> : vector<8x1xf32>
    %18 = vector.multi_reduction <add>, %17, %cst_7 [1] : vector<8x8x1xf32> to vector<8x1xf32>
    %19 = vector.shape_cast %18 : vector<8x1xf32> to vector<8x1x1xf32>
    %cst_8 = arith.constant 8.000000e+00 : f32
    %20 = vector.broadcast %cst_8 : f32 to vector<8x1x1xf32>
    %21 = arith.divf %19, %20 : vector<8x1x1xf32>
    %cst_9 = arith.constant 9.99999974E-6 : f32
    %22 = vector.broadcast %cst_9 : f32 to vector<8x1x1xf32>
    %23 = arith.addf %21, %22 : vector<8x1x1xf32>
    %24 = math.rsqrt %23 : vector<8x1x1xf32>
    %25 = vector.broadcast %24 : vector<8x1x1xf32> to vector<8x8x256xf32>
    %26 = arith.mulf %12, %25 : vector<8x8x256xf32>
    %27 = vector.shape_cast %26 : vector<8x8x256xf32> to vector<64x256xf32>
    %c0_10 = arith.constant 0 : index
    %c0_11 = arith.constant 0 : index
    %28 = vector.load %arg2[%c0_10, %c0_11] : memref<64x1xf32, #tpu.memory_space<vmem>>, vector<64x1xf32>
    %29 = vector.broadcast %28 : vector<64x1xf32> to vector<64x256xf32>
    %30 = arith.mulf %27, %29 : vector<64x256xf32>
    %c0_12 = arith.constant 0 : index
    %c0_13 = arith.constant 0 : index
    %31 = vector.load %arg3[%c0_12, %c0_13] : memref<64x1xf32, #tpu.memory_space<vmem>>, vector<64x1xf32>
    %32 = vector.broadcast %31 : vector<64x1xf32> to vector<64x256xf32>
    %33 = arith.addf %30, %32 : vector<64x256xf32>
    %34 = arith.truncf %33 : vector<64x256xf32> to vector<64x256xbf16>
    %c0_14 = arith.constant 0 : index
    %c0_15 = arith.constant 0 : index
    %35 = vector.load %arg4[%c0_14, %c0_15] : memref<192x64xbf16, #tpu.memory_space<vmem>>, vector<192x64xbf16>
    %cst_16 = arith.constant dense<0.000000e+00> : vector<192x256xf32>
    %36 = tpu.matmul %35, %34, %cst_16 {dimension_numbers = #tpu.dot_dimension_numbers<[1], [0], [0], [1], [0, 0, 1, 1], [], []>} : vector<192x64xbf16>, vector<64x256xbf16>, vector<192x256xf32> -> vector<192x256xf32>
    %c0_17 = arith.constant 0 : index
    %c0_18 = arith.constant 0 : index
    %37 = vector.load %arg5[%c0_17, %c0_18] : memref<192x1xf32, #tpu.memory_space<vmem>>, vector<192x1xf32>
    %38 = vector.broadcast %37 : vector<192x1xf32> to vector<192x256xf32>
    %39 = arith.addf %36, %38 : vector<192x256xf32>
    %40 = vector.extract_strided_slice %39 {offsets = [0, 0], sizes = [64, 256], strides = [1, 1]} : vector<192x256xf32> to vector<64x256xf32>
    %41 = vector.extract_strided_slice %39 {offsets = [64, 0], sizes = [64, 256], strides = [1, 1]} : vector<192x256xf32> to vector<64x256xf32>
    %42 = vector.extract_strided_slice %39 {offsets = [128, 0], sizes = [64, 256], strides = [1, 1]} : vector<192x256xf32> to vector<64x256xf32>
    %43 = vector.extract_strided_slice %40 {offsets = [0, 0], sizes = [16, 256], strides = [1, 1]} : vector<64x256xf32> to vector<16x256xf32>
    %44 = tpu.transpose %43, [1, 0] : vector<16x256xf32> -> vector<256x16xf32>
    %45 = arith.truncf %44 : vector<256x16xf32> to vector<256x16xbf16>
    %46 = vector.extract_strided_slice %41 {offsets = [0, 0], sizes = [16, 256], strides = [1, 1]} : vector<64x256xf32> to vector<16x256xf32>
    %47 = arith.truncf %46 : vector<16x256xf32> to vector<16x256xbf16>
    %48 = vector.extract_strided_slice %42 {offsets = [0, 0], sizes = [16, 256], strides = [1, 1]} : vector<64x256xf32> to vector<16x256xf32>
    %49 = arith.truncf %48 : vector<16x256xf32> to vector<16x256xbf16>
    %cst_19 = arith.constant dense<0.000000e+00> : vector<256x256xf32>
    %50 = tpu.matmul %45, %47, %cst_19 {dimension_numbers = #tpu.dot_dimension_numbers<[1], [0], [0], [1], [0, 0, 1, 1], [], []>} : vector<256x16xbf16>, vector<16x256xbf16>, vector<256x256xf32> -> vector<256x256xf32>
    %cst_20 = arith.constant dense<0xFF800000> : vector<256xf32>
    %51 = vector.multi_reduction <maximumf>, %50, %cst_20 [1] : vector<256x256xf32> to vector<256xf32>
    %52 = vector.shape_cast %51 : vector<256xf32> to vector<256x1xf32>
    %53 = vector.broadcast %52 : vector<256x1xf32> to vector<256x256xf32>
    %54 = arith.subf %50, %53 : vector<256x256xf32>
    %55 = math.exp %54 : vector<256x256xf32>
    %cst_21 = arith.constant dense<0.000000e+00> : vector<256xf32>
    %56 = vector.multi_reduction <add>, %55, %cst_21 [1] : vector<256x256xf32> to vector<256xf32>
    %57 = vector.shape_cast %56 : vector<256xf32> to vector<256x1xf32>
    %58 = tpu.reciprocal %57 {approx = true} : vector<256x1xf32> -> vector<256x1xf32>
    %59 = vector.broadcast %58 : vector<256x1xf32> to vector<256x256xf32>
    %60 = arith.mulf %55, %59 : vector<256x256xf32>
    %61 = arith.truncf %60 : vector<256x256xf32> to vector<256x256xbf16>
    %cst_22 = arith.constant dense<0.000000e+00> : vector<16x256xf32>
    %62 = tpu.matmul %49, %61, %cst_22 {dimension_numbers = #tpu.dot_dimension_numbers<[1], [1], [0], [0], [0, 0, 1, 0], [], []>} : vector<16x256xbf16>, vector<256x256xbf16>, vector<16x256xf32> -> vector<16x256xf32>
    %63 = vector.extract_strided_slice %40 {offsets = [16, 0], sizes = [16, 256], strides = [1, 1]} : vector<64x256xf32> to vector<16x256xf32>
    %64 = tpu.transpose %63, [1, 0] : vector<16x256xf32> -> vector<256x16xf32>
    %65 = arith.truncf %64 : vector<256x16xf32> to vector<256x16xbf16>
    %66 = vector.extract_strided_slice %41 {offsets = [16, 0], sizes = [16, 256], strides = [1, 1]} : vector<64x256xf32> to vector<16x256xf32>
    %67 = arith.truncf %66 : vector<16x256xf32> to vector<16x256xbf16>
    %68 = vector.extract_strided_slice %42 {offsets = [16, 0], sizes = [16, 256], strides = [1, 1]} : vector<64x256xf32> to vector<16x256xf32>
    %69 = arith.truncf %68 : vector<16x256xf32> to vector<16x256xbf16>
    %cst_23 = arith.constant dense<0.000000e+00> : vector<256x256xf32>
    %70 = tpu.matmul %65, %67, %cst_23 {dimension_numbers = #tpu.dot_dimension_numbers<[1], [0], [0], [1], [0, 0, 1, 1], [], []>} : vector<256x16xbf16>, vector<16x256xbf16>, vector<256x256xf32> -> vector<256x256xf32>
    %cst_24 = arith.constant dense<0xFF800000> : vector<256xf32>
    %71 = vector.multi_reduction <maximumf>, %70, %cst_24 [1] : vector<256x256xf32> to vector<256xf32>
    %72 = vector.shape_cast %71 : vector<256xf32> to vector<256x1xf32>
    %73 = vector.broadcast %72 : vector<256x1xf32> to vector<256x256xf32>
    %74 = arith.subf %70, %73 : vector<256x256xf32>
    %75 = math.exp %74 : vector<256x256xf32>
    %cst_25 = arith.constant dense<0.000000e+00> : vector<256xf32>
    %76 = vector.multi_reduction <add>, %75, %cst_25 [1] : vector<256x256xf32> to vector<256xf32>
    %77 = vector.shape_cast %76 : vector<256xf32> to vector<256x1xf32>
    %78 = tpu.reciprocal %77 {approx = true} : vector<256x1xf32> -> vector<256x1xf32>
    %79 = vector.broadcast %78 : vector<256x1xf32> to vector<256x256xf32>
    %80 = arith.mulf %75, %79 : vector<256x256xf32>
    %81 = arith.truncf %80 : vector<256x256xf32> to vector<256x256xbf16>
    %cst_26 = arith.constant dense<0.000000e+00> : vector<16x256xf32>
    %82 = tpu.matmul %69, %81, %cst_26 {dimension_numbers = #tpu.dot_dimension_numbers<[1], [1], [0], [0], [0, 0, 1, 0], [], []>} : vector<16x256xbf16>, vector<256x256xbf16>, vector<16x256xf32> -> vector<16x256xf32>
    %83 = vector.extract_strided_slice %40 {offsets = [32, 0], sizes = [16, 256], strides = [1, 1]} : vector<64x256xf32> to vector<16x256xf32>
    %84 = tpu.transpose %83, [1, 0] : vector<16x256xf32> -> vector<256x16xf32>
    %85 = arith.truncf %84 : vector<256x16xf32> to vector<256x16xbf16>
    %86 = vector.extract_strided_slice %41 {offsets = [32, 0], sizes = [16, 256], strides = [1, 1]} : vector<64x256xf32> to vector<16x256xf32>
    %87 = arith.truncf %86 : vector<16x256xf32> to vector<16x256xbf16>
    %88 = vector.extract_strided_slice %42 {offsets = [32, 0], sizes = [16, 256], strides = [1, 1]} : vector<64x256xf32> to vector<16x256xf32>
    %89 = arith.truncf %88 : vector<16x256xf32> to vector<16x256xbf16>
    %cst_27 = arith.constant dense<0.000000e+00> : vector<256x256xf32>
    %90 = tpu.matmul %85, %87, %cst_27 {dimension_numbers = #tpu.dot_dimension_numbers<[1], [0], [0], [1], [0, 0, 1, 1], [], []>} : vector<256x16xbf16>, vector<16x256xbf16>, vector<256x256xf32> -> vector<256x256xf32>
    %cst_28 = arith.constant dense<0xFF800000> : vector<256xf32>
    %91 = vector.multi_reduction <maximumf>, %90, %cst_28 [1] : vector<256x256xf32> to vector<256xf32>
    %92 = vector.shape_cast %91 : vector<256xf32> to vector<256x1xf32>
    %93 = vector.broadcast %92 : vector<256x1xf32> to vector<256x256xf32>
    %94 = arith.subf %90, %93 : vector<256x256xf32>
    %95 = math.exp %94 : vector<256x256xf32>
    %cst_29 = arith.constant dense<0.000000e+00> : vector<256xf32>
    %96 = vector.multi_reduction <add>, %95, %cst_29 [1] : vector<256x256xf32> to vector<256xf32>
    %97 = vector.shape_cast %96 : vector<256xf32> to vector<256x1xf32>
    %98 = tpu.reciprocal %97 {approx = true} : vector<256x1xf32> -> vector<256x1xf32>
    %99 = vector.broadcast %98 : vector<256x1xf32> to vector<256x256xf32>
    %100 = arith.mulf %95, %99 : vector<256x256xf32>
    %101 = arith.truncf %100 : vector<256x256xf32> to vector<256x256xbf16>
    %cst_30 = arith.constant dense<0.000000e+00> : vector<16x256xf32>
    %102 = tpu.matmul %89, %101, %cst_30 {dimension_numbers = #tpu.dot_dimension_numbers<[1], [1], [0], [0], [0, 0, 1, 0], [], []>} : vector<16x256xbf16>, vector<256x256xbf16>, vector<16x256xf32> -> vector<16x256xf32>
    %103 = vector.extract_strided_slice %40 {offsets = [48, 0], sizes = [16, 256], strides = [1, 1]} : vector<64x256xf32> to vector<16x256xf32>
    %104 = tpu.transpose %103, [1, 0] : vector<16x256xf32> -> vector<256x16xf32>
    %105 = arith.truncf %104 : vector<256x16xf32> to vector<256x16xbf16>
    %106 = vector.extract_strided_slice %41 {offsets = [48, 0], sizes = [16, 256], strides = [1, 1]} : vector<64x256xf32> to vector<16x256xf32>
    %107 = arith.truncf %106 : vector<16x256xf32> to vector<16x256xbf16>
    %108 = vector.extract_strided_slice %42 {offsets = [48, 0], sizes = [16, 256], strides = [1, 1]} : vector<64x256xf32> to vector<16x256xf32>
    %109 = arith.truncf %108 : vector<16x256xf32> to vector<16x256xbf16>
    %cst_31 = arith.constant dense<0.000000e+00> : vector<256x256xf32>
    %110 = tpu.matmul %105, %107, %cst_31 {dimension_numbers = #tpu.dot_dimension_numbers<[1], [0], [0], [1], [0, 0, 1, 1], [], []>} : vector<256x16xbf16>, vector<16x256xbf16>, vector<256x256xf32> -> vector<256x256xf32>
    %cst_32 = arith.constant dense<0xFF800000> : vector<256xf32>
    %111 = vector.multi_reduction <maximumf>, %110, %cst_32 [1] : vector<256x256xf32> to vector<256xf32>
    %112 = vector.shape_cast %111 : vector<256xf32> to vector<256x1xf32>
    %113 = vector.broadcast %112 : vector<256x1xf32> to vector<256x256xf32>
    %114 = arith.subf %110, %113 : vector<256x256xf32>
    %115 = math.exp %114 : vector<256x256xf32>
    %cst_33 = arith.constant dense<0.000000e+00> : vector<256xf32>
    %116 = vector.multi_reduction <add>, %115, %cst_33 [1] : vector<256x256xf32> to vector<256xf32>
    %117 = vector.shape_cast %116 : vector<256xf32> to vector<256x1xf32>
    %118 = tpu.reciprocal %117 {approx = true} : vector<256x1xf32> -> vector<256x1xf32>
    %119 = vector.broadcast %118 : vector<256x1xf32> to vector<256x256xf32>
    %120 = arith.mulf %115, %119 : vector<256x256xf32>
    %121 = arith.truncf %120 : vector<256x256xf32> to vector<256x256xbf16>
    %cst_34 = arith.constant dense<0.000000e+00> : vector<16x256xf32>
    %122 = tpu.matmul %109, %121, %cst_34 {dimension_numbers = #tpu.dot_dimension_numbers<[1], [1], [0], [0], [0, 0, 1, 0], [], []>} : vector<16x256xbf16>, vector<256x256xbf16>, vector<16x256xf32> -> vector<16x256xf32>
    %123 = tpu.concatenate %62, %82, %102, %122 in 0 : vector<16x256xf32>, vector<16x256xf32>, vector<16x256xf32>, vector<16x256xf32> -> vector<64x256xf32>
    %124 = arith.truncf %123 : vector<64x256xf32> to vector<64x256xbf16>
    %c0_35 = arith.constant 0 : index
    %c0_36 = arith.constant 0 : index
    %125 = vector.load %arg6[%c0_35, %c0_36] : memref<64x64xbf16, #tpu.memory_space<vmem>>, vector<64x64xbf16>
    %cst_37 = arith.constant dense<0.000000e+00> : vector<64x256xf32>
    %126 = tpu.matmul %125, %124, %cst_37 {dimension_numbers = #tpu.dot_dimension_numbers<[1], [0], [0], [1], [0, 0, 1, 1], [], []>} : vector<64x64xbf16>, vector<64x256xbf16>, vector<64x256xf32> -> vector<64x256xf32>
    %c0_38 = arith.constant 0 : index
    %c0_39 = arith.constant 0 : index
    %127 = vector.load %arg7[%c0_38, %c0_39] : memref<64x1xf32, #tpu.memory_space<vmem>>, vector<64x1xf32>
    %128 = vector.broadcast %127 : vector<64x1xf32> to vector<64x256xf32>
    %129 = arith.addf %126, %128 : vector<64x256xf32>
    %130 = arith.addf %1, %129 : vector<64x256xf32>
    %c0_40 = arith.constant 0 : index
    %c0_41 = arith.constant 0 : index
    %c0_42 = arith.constant 0 : index
    %131 = vector.load %arg8[%c0_40, %c0_41, %c0_42] : memref<1x64x256xf32, #tpu.memory_space<vmem>>, vector<1x64x256xf32>
    %132 = vector.shape_cast %131 : vector<1x64x256xf32> to vector<64x256xf32>
    %133 = vector.shape_cast %130 : vector<64x256xf32> to vector<1x64x256xf32>
    tpu.vector_store %arg8[%c0_40, %c0_41, %c0_42], %133 {strides = array<i32>} : memref<1x64x256xf32, #tpu.memory_space<vmem>>, vector<1x64x256xf32>,
    return
  }
  func.func @transform_0(%arg0: i32) -> (i32, i32, i32) {
    %c0_i32 = arith.constant 0 : i32
    %c0_i32_0 = arith.constant 0 : i32
    %c0_i32_1 = arith.constant 0 : i32
    return %arg0, %c0_i32, %c0_i32_0 : i32, i32, i32
  }
  func.func @transform_1(%arg0: i32) -> (i32, i32) {
    %c0_i32 = arith.constant 0 : i32
    %c0_i32_0 = arith.constant 0 : i32
    %c0_i32_1 = arith.constant 0 : i32
    return %c0_i32, %c0_i32_0 : i32, i32
  }
  func.func @transform_2(%arg0: i32) -> (i32, i32) {
    %c0_i32 = arith.constant 0 : i32
    %c0_i32_0 = arith.constant 0 : i32
    %c0_i32_1 = arith.constant 0 : i32
    return %c0_i32, %c0_i32_0 : i32, i32
  }
  func.func @transform_3(%arg0: i32) -> (i32, i32) {
    %c0_i32 = arith.constant 0 : i32
    %c0_i32_0 = arith.constant 0 : i32
    %c0_i32_1 = arith.constant 0 : i32
    return %c0_i32, %c0_i32_0 : i32, i32
  }
  func.func @transform_4(%arg0: i32) -> (i32, i32) {
    %c0_i32 = arith.constant 0 : i32
    %c0_i32_0 = arith.constant 0 : i32
    %c0_i32_1 = arith.constant 0 : i32
    return %c0_i32, %c0_i32_0 : i32, i32
  }
  func.func @transform_5(%arg0: i32) -> (i32, i32) {
    %c0_i32 = arith.constant 0 : i32
    %c0_i32_0 = arith.constant 0 : i32
    %c0_i32_1 = arith.constant 0 : i32
    return %c0_i32, %c0_i32_0 : i32, i32
  }
  func.func @transform_6(%arg0: i32) -> (i32, i32) {
    %c0_i32 = arith.constant 0 : i32
    %c0_i32_0 = arith.constant 0 : i32
    %c0_i32_1 = arith.constant 0 : i32
    return %c0_i32, %c0_i32_0 : i32, i32
  }
  func.func @transform_7(%arg0: i32) -> (i32, i32, i32) {
    %c0_i32 = arith.constant 0 : i32
    %c0_i32_0 = arith.constant 0 : i32
    %c0_i32_1 = arith.constant 0 : i32
    return %arg0, %c0_i32, %c0_i32_0 : i32, i32, i32
  }
}

</mosaic_0001>

<llo_original>
// kernel: mul.9
$region0: #{mul.9}
  #allocation0 [shape = 's32[1]{0}', space=sflag, size = 0x4, scoped, tag = 'scoped memory for mul.9']
  %s0 = inlined_call_operand.vmem [shape: f32[192], index: 0, kind: input, shape index: {}]
  %s1 = inlined_call_operand.vmem [shape: f32[192], index: 1, kind: input, shape index: {}]
  %s2 = inlined_call_operand.vmem [shape: f32[192], index: 2, kind: output, shape index: {}]
  %v3 = vld [vmem:[%s0] sm:$0x3]
  %v4 = vld [vmem:[%s1] sm:$0x3]
  %5 = xla_tuple %v3, %v4
  %6 = xla_tuple %5
  %v7 = vmul.f32 %v3, %v4
  %8 = xla_tuple %v7
  %9 = vst [vmem:[%s2] sm:$0x3] %v7

// kernel: attention_block.1
$region0: #{attention_block.1}
  #allocation0 [shape = 'u32[]', space=smem, size = 0x4, offset = 0x4, fixed_abs, tag = 'smem constant byte address 0x4 - core index']
  #allocation1 [shape = 'u32[72,128]{1,0:T(1,128)}', space=vmem, size = 0x9000, scoped, tag = 'internal scratch']
  %s0 = inlined_call_operand.vmem [shape: f32[2,64,256], index: 0, kind: input, shape index: {}]
  %s1 = inlined_call_operand.vmem [shape: f32[64,1], index: 1, kind: input, shape index: {}]
  %s2 = inlined_call_operand.vmem [shape: f32[64,1], index: 2, kind: input, shape index: {}]
  %s3 = inlined_call_operand.vmem [shape: bf16[192,64], index: 3, kind: input, shape index: {}]
  %s4 = inlined_call_operand.vmem [shape: f32[192,1], index: 4, kind: input, shape index: {}]
  %s5 = inlined_call_operand.vmem [shape: bf16[64,64], index: 5, kind: input, shape index: {}]
  %s6 = inlined_call_operand.vmem [shape: f32[64,1], index: 6, kind: input, shape index: {}]
  %s7 = inlined_call_operand.vmem [shape: f32[2,64,256], index: 7, kind: output, shape index: {}]
  %s8 = sld [smem:[#allocation0]]
  $region61: #{attention_block.1} parent=0
    _
  %s10 = ssub.s32 1, %s8
  %s11 = scalar_select 0, %s10, %s8
  loop: start=0, step=1, limit=4
  $region2: #{attention_block.1} parent=0 // loop_pre_header
    _
  $region3: #{attention_block.1} parent=0 // loop_header
    %s13 = sphi 0, %s17
    %p14 = scmp.ge.s32.totalorder %s13, 4
    %s23 = sphi 0, %s25
    %s26 = sphi 0, %s23
    %s27 = sphi 0, %s26
    %s43 = sphi 0, %s27
    %s47 = sphi 0, %s47
    %s49 = sphi 0, %s47
    %s50 = sphi 0, %s49
    %s64 = sphi 0, %s50
    %s68 = sphi 0, %s68
    %s70 = sphi 0, %s68
    %s71 = sphi 0, %s70
    %s85 = sphi 0, %s71
    %s89 = sphi 0, %s89
    %s91 = sphi 0, %s89
    %s92 = sphi 0, %s91
    %s106 = sphi 0, %s92
    %s110 = sphi 0, %s110
    %s112 = sphi 0, %s110
    %s113 = sphi 0, %s112
    %s127 = sphi 0, %s113
    %s131 = sphi 0, %s131
    %s133 = sphi 0, %s131
    %s134 = sphi 0, %s133
    %s148 = sphi 0, %s134
    %s152 = sphi 0, %s152
    %s154 = sphi 0, %s152
    %s155 = sphi 0, %s154
    %s169 = sphi 0, %s155
    %s175 = sphi 0, %s177
    %s178 = sphi 0, %s175
    %s179 = sphi 0, %s178
    %s195 = sphi 0, %s179
  $region4: #{attention_block.1} parent=0 // loop_header_branch
    %16 = sbr.rel (%p14) target = $region8
  $region5: #{attention_block.1} parent=0 // loop_body
    %s18 = ssub.s32 %s13, 1
    %s19 = ssub.s32 %s13, 2
    %s20 = sadd.s32 %s13, 1
    %s21 = ssub.s32 %s13, %s20
    %p22 = scmp.eq.s32.totalorder %s21, 0
    %s24 = sadd.s32 %s23, 1
    %s25 = scalar_select %p22, %s23, %s24
    %p28 = pneg %p22
    %p29 = scmp.eq.s32.totalorder %s13, 1
    %p30 = por %p28, %p29
    %p31 = scmp.ne.s32.totalorder %s23, %s26
    %p32 = scmp.eq.s32.totalorder %s13, 0
    %p33 = por %p31, %p32
    %p34 = scmp.ne.s32.totalorder %s23, %s26
    %p35 = scmp.eq.s32.totalorder %s18, 1
    %p36 = por %p34, %p35
    %p37 = scmp.ne.s32.totalorder %s26, %s27
    %p38 = scmp.eq.s32.totalorder %s18, 0
    %p39 = por %p37, %p38
    %p40 = scmp.ne.s32.totalorder %s26, %s27
    %p41 = scmp.eq.s32.totalorder %s19, 1
    %p42 = por %p40, %p41
    %p44 = scmp.ne.s32.totalorder %s27, %s43
    %p45 = scmp.eq.s32.totalorder %s19, 0
    %p46 = por %p44, %p45
    %s48 = sadd.s32 %s47, 1
    %p51 = scmp.eq.s32.totalorder %s13, 1
    %p52 = scmp.ne.s32.totalorder %s47, %s49
    %p53 = scmp.eq.s32.totalorder %s13, 0
    %p54 = por %p52, %p53
    %p55 = scmp.ne.s32.totalorder %s47, %s49
    %p56 = scmp.eq.s32.totalorder %s18, 1
    %p57 = por %p55, %p56
    %p58 = scmp.ne.s32.totalorder %s49, %s50
    %p59 = scmp.eq.s32.totalorder %s18, 0
    %p60 = por %p58, %p59
    %p61 = scmp.ne.s32.totalorder %s49, %s50
    %p62 = scmp.eq.s32.totalorder %s19, 1
    %p63 = por %p61, %p62
    %p65 = scmp.ne.s32.totalorder %s50, %s64
    %p66 = scmp.eq.s32.totalorder %s19, 0
    %p67 = por %p65, %p66
    %s69 = sadd.s32 %s68, 1
    %p72 = scmp.eq.s32.totalorder %s13, 1
    %p73 = scmp.ne.s32.totalorder %s68, %s70
    %p74 = scmp.eq.s32.totalorder %s13, 0
    %p75 = por %p73, %p74
    %p76 = scmp.ne.s32.totalorder %s68, %s70
    %p77 = scmp.eq.s32.totalorder %s18, 1
    %p78 = por %p76, %p77
    %p79 = scmp.ne.s32.totalorder %s70, %s71
    %p80 = scmp.eq.s32.totalorder %s18, 0
    %p81 = por %p79, %p80
    %p82 = scmp.ne.s32.totalorder %s70, %s71
    %p83 = scmp.eq.s32.totalorder %s19, 1
    %p84 = por %p82, %p83
    %p86 = scmp.ne.s32.totalorder %s71, %s85
    %p87 = scmp.eq.s32.totalorder %s19, 0
    %p88 = por %p86, %p87
    %s90 = sadd.s32 %s89, 1
    %p93 = scmp.eq.s32.totalorder %s13, 1
    %p94 = scmp.ne.s32.totalorder %s89, %s91
    %p95 = scmp.eq.s32.totalorder %s13, 0
    %p96 = por %p94, %p95
    %p97 = scmp.ne.s32.totalorder %s89, %s91
    %p98 = scmp.eq.s32.totalorder %s18, 1
    %p99 = por %p97, %p98
    %p100 = scmp.ne.s32.totalorder %s91, %s92
    %p101 = scmp.eq.s32.totalorder %s18, 0
    %p102 = por %p100, %p101
    %p103 = scmp.ne.s32.totalorder %s91, %s92
    %p104 = scmp.eq.s32.totalorder %s19, 1
    %p105 = por %p103, %p104
    %p107 = scmp.ne.s32.totalorder %s92, %s106
    %p108 = scmp.eq.s32.totalorder %s19, 0
    %p109 = por %p107, %p108
    %s111 = sadd.s32 %s110, 1
    %p114 = scmp.eq.s32.totalorder %s13, 1
    %p115 = scmp.ne.s32.totalorder %s110, %s112
    %p116 = scmp.eq.s32.totalorder %s13, 0
    %p117 = por %p115, %p116
    %p118 = scmp.ne.s32.totalorder %s110, %s112
    %p119 = scmp.eq.s32.totalorder %s18, 1
    %p120 = por %p118, %p119
    %p121 = scmp.ne.s32.totalorder %s112, %s113
    %p122 = scmp.eq.s32.totalorder %s18, 0
    %p123 = por %p121, %p122
    %p124 = scmp.ne.s32.totalorder %s112, %s113
    %p125 = scmp.eq.s32.totalorder %s19, 1
    %p126 = por %p124, %p125
    %p128 = scmp.ne.s32.totalorder %s113, %s127
    %p129 = scmp.eq.s32.totalorder %s19, 0
    %p130 = por %p128, %p129
    %s132 = sadd.s32 %s131, 1
    %p135 = scmp.eq.s32.totalorder %s13, 1
    %p136 = scmp.ne.s32.totalorder %s131, %s133
    %p137 = scmp.eq.s32.totalorder %s13, 0
    %p138 = por %p136, %p137
    %p139 = scmp.ne.s32.totalorder %s131, %s133
    %p140 = scmp.eq.s32.totalorder %s18, 1
    %p141 = por %p139, %p140
    %p142 = scmp.ne.s32.totalorder %s133, %s134
    %p143 = scmp.eq.s32.totalorder %s18, 0
    %p144 = por %p142, %p143
    %p145 = scmp.ne.s32.totalorder %s133, %s134
    %p146 = scmp.eq.s32.totalorder %s19, 1
    %p147 = por %p145, %p146
    %p149 = scmp.ne.s32.totalorder %s134, %s148
    %p150 = scmp.eq.s32.totalorder %s19, 0
    %p151 = por %p149, %p150
    %s153 = sadd.s32 %s152, 1
    %p156 = scmp.eq.s32.totalorder %s13, 1
    %p157 = scmp.ne.s32.totalorder %s152, %s154
    %p158 = scmp.eq.s32.totalorder %s13, 0
    %p159 = por %p157, %p158
    %p160 = scmp.ne.s32.totalorder %s152, %s154
    %p161 = scmp.eq.s32.totalorder %s18, 1
    %p162 = por %p160, %p161
    %p163 = scmp.ne.s32.totalorder %s154, %s155
    %p164 = scmp.eq.s32.totalorder %s18, 0
    %p165 = por %p163, %p164
    %p166 = scmp.ne.s32.totalorder %s154, %s155
    %p167 = scmp.eq.s32.totalorder %s19, 1
    %p168 = por %p166, %p167
    %p170 = scmp.ne.s32.totalorder %s155, %s169
    %p171 = scmp.eq.s32.totalorder %s19, 0
    %p172 = por %p170, %p171
    %s173 = ssub.s32 %s13, %s20
    %p174 = scmp.eq.s32.totalorder %s173, 0
    %s176 = sadd.s32 %s175, 1
    %s177 = scalar_select %p174, %s175, %s176
    %p180 = pneg %p174
    %p181 = scmp.eq.s32.totalorder %s13, 1
    %p182 = por %p180, %p181
    %p183 = scmp.ne.s32.totalorder %s175, %s178
    %p184 = scmp.eq.s32.totalorder %s13, 0
    %p185 = por %p183, %p184
    %p186 = scmp.ne.s32.totalorder %s175, %s178
    %p187 = scmp.eq.s32.totalorder %s18, 1
    %p188 = por %p186, %p187
    %p189 = scmp.ne.s32.totalorder %s178, %s179
    %p190 = scmp.eq.s32.totalorder %s18, 0
    %p191 = por %p189, %p190
    %p192 = scmp.ne.s32.totalorder %s178, %s179
    %p193 = scmp.eq.s32.totalorder %s19, 1
    %p194 = por %p192, %p193
    %p196 = scmp.ne.s32.totalorder %s179, %s195
    %p197 = scmp.eq.s32.totalorder %s19, 0
    %p198 = por %p196, %p197
    %p199 = scmp.le.s32.totalorder 1, %s13
    %p200 = scmp.lt.s32.totalorder %s13, 3
    %p201 = pnand %p199, %p200
    %p202 = pneg %p201
    // Predicated region
    $region9: #{attention_block.1} parent=5 // pred_check
      _
    $region10: #{attention_block.1} parent=5 // pred_check_branch
      %204 = sbr.rel (%p201) target = $region12
    $region11: #{attention_block.1} parent=5 // pred_region
      %s205 = ssub.s32 %s13, 1
      // Predicated region
      $region13: #{attention_block.1} parent=11 // pred_check
        %p206 = pneg %p60
      $region14: #{attention_block.1} parent=11 // pred_check_branch
        %208 = sbr.rel (%p206) target = $region16
      $region15: #{attention_block.1} parent=11 // pred_region
        _
      $region16: #{attention_block.1} parent=11 // pred_fallthru
        _
      // Predicated region
      $region17: #{attention_block.1} parent=11 // pred_check
        %p209 = pneg %p81
      $region18: #{attention_block.1} parent=11 // pred_check_branch
        %211 = sbr.rel (%p209) target = $region20
      $region19: #{attention_block.1} parent=11 // pred_region
        _
      $region20: #{attention_block.1} parent=11 // pred_fallthru
        _
      // Predicated region
      $region21: #{attention_block.1} parent=11 // pred_check
        %p212 = pneg %p102
      $region22: #{attention_block.1} parent=11 // pred_check_branch
        %214 = sbr.rel (%p212) target = $region24
      $region23: #{attention_block.1} parent=11 // pred_region
        _
      $region24: #{attention_block.1} parent=11 // pred_fallthru
        _
      // Predicated region
      $region25: #{attention_block.1} parent=11 // pred_check
        %p215 = pneg %p123
      $region26: #{attention_block.1} parent=11 // pred_check_branch
        %217 = sbr.rel (%p215) target = $region28
      $region27: #{attention_block.1} parent=11 // pred_region
        _
      $region28: #{attention_block.1} parent=11 // pred_fallthru
        _
      // Predicated region
      $region29: #{attention_block.1} parent=11 // pred_check
        %p218 = pneg %p144
      $region30: #{attention_block.1} parent=11 // pred_check_branch
        %220 = sbr.rel (%p218) target = $region32
      $region31: #{attention_block.1} parent=11 // pred_region
        _
      $region32: #{attention_block.1} parent=11 // pred_fallthru
        _
      // Predicated region
      $region33: #{attention_block.1} parent=11 // pred_check
        %p221 = pneg %p165
      $region34: #{attention_block.1} parent=11 // pred_check_branch
        %223 = sbr.rel (%p221) target = $region36
      $region35: #{attention_block.1} parent=11 // pred_region
        _
      $region36: #{attention_block.1} parent=11 // pred_fallthru
        _
    $region12: #{attention_block.1} parent=5 // pred_fallthru
      _
    %p224 = scmp.lt.s32.totalorder %s13, 2
    // Predicated region
    $region37: #{attention_block.1} parent=5 // pred_check
      %p225 = pneg %p224
    $region38: #{attention_block.1} parent=5 // pred_check_branch
      %227 = sbr.rel (%p225) target = $region40
    $region39: #{attention_block.1} parent=5 // pred_region
      // Predicated region
      $region41: #{attention_block.1} parent=39 // pred_check
        %p228 = pneg %p33
      $region42: #{attention_block.1} parent=39 // pred_check_branch
        %230 = sbr.rel (%p228) target = $region44
      $region43: #{attention_block.1} parent=39 // pred_region
        %p231 = scmp.lt.s32.totalorder %s13, 1
        %s232 = scalar_select %p231, %s13, 1
        %s233 = smul.addr %s232, 16
        %s234 = smul.addr %s233, 8
        %s235 = scalar_lea.vmem %s0, %s234
      $region44: #{attention_block.1} parent=39 // pred_fallthru
        _
    $region40: #{attention_block.1} parent=5 // pred_fallthru
      _
    %p236 = scmp.le.s32.totalorder 1, %s13
    %p237 = scmp.lt.s32.totalorder %s13, 3
    %p238 = pnand %p236, %p237
    %p239 = pneg %p238
    // Predicated region
    $region45: #{attention_block.1} parent=5 // pred_check
      _
    $region46: #{attention_block.1} parent=5 // pred_check_branch
      %241 = sbr.rel (%p238) target = $region48
    $region47: #{attention_block.1} parent=5 // pred_region
      %s242 = ssub.s32 %s13, 1
      %p243 = scmp.lt.s32.totalorder %s18, 1
      %s244 = scalar_select %p243, %s18, 1
      %s245 = smul.addr %s244, 16
      %s246 = smul.addr %s245, 8
      %s247 = scalar_lea.vmem %s0, %s246
      %p248 = pneg %p39
      %p249 = pneg %p36
      %p250 = pneg %p60
      %p251 = pneg %p57
      %p252 = pneg %p81
      %p253 = pneg %p78
      %p254 = pneg %p102
      %p255 = pneg %p99
      %p256 = pneg %p123
      %p257 = pneg %p120
      %p258 = pneg %p144
      %p259 = pneg %p141
      %p260 = pneg %p165
      %p261 = pneg %p162
      %p262 = pneg %p191
      %p263 = pneg %p188
      %p264 = scmp.lt.s32.totalorder %s18, 1
      %s265 = scalar_select %p264, %s18, 1
      %s266 = smul.addr %s265, 16
      %s267 = smul.addr %s266, 8
      %s268 = scalar_lea.vmem %s7, %s267
      %p269 = scmp.lt.s32.totalorder %s18, 1
      %s270 = scalar_select %p269, %s18, 1
      %s271 = smul.addr %s270, 16
      %s272 = smul.addr %s271, 8
      %s273 = scalar_lea.vmem %s0, %s272
      %p274 = scmp.lt.s32.totalorder %s18, 1
      %s275 = scalar_select %p274, %s18, 1
      %s276 = smul.addr %s275, 16
      %s277 = smul.addr %s276, 8
      %s278 = scalar_lea.vmem %s7, %s277
      %v280 = vld [vmem:[%s273] sm:$0xff]
      %v281 = vld [vmem:[%s273 + $0x8] sm:$0xff]
      %v282 = vld [vmem:[%s273 + $0x10] sm:$0xff]
      %v283 = vld [vmem:[%s273 + $0x18] sm:$0xff]
      %v284 = vld [vmem:[%s273 + $0x20] sm:$0xff]
      %v285 = vld [vmem:[%s273 + $0x28] sm:$0xff]
      %v286 = vld [vmem:[%s273 + $0x30] sm:$0xff]
      %v287 = vld [vmem:[%s273 + $0x38] sm:$0xff]
      %v288 = vld [vmem:[%s273 + $0x40] sm:$0xff]
      %v289 = vld [vmem:[%s273 + $0x48] sm:$0xff]
      %v290 = vld [vmem:[%s273 + $0x50] sm:$0xff]
      %v291 = vld [vmem:[%s273 + $0x58] sm:$0xff]
      %v292 = vld [vmem:[%s273 + $0x60] sm:$0xff]
      %v293 = vld [vmem:[%s273 + $0x68] sm:$0xff]
      %v294 = vld [vmem:[%s273 + $0x70] sm:$0xff]
      %v295 = vld [vmem:[%s273 + $0x78] sm:$0xff]
      %v296 = vadd.f32 %v280, %v281
      %297 = vadd.xlane.f32.xlu0 %v296
      %v298 = vpop.xlane.xlu0 %297
      %v299 = vadd.f32 %v282, %v283
      %300 = vadd.xlane.f32.xlu0 %v299
      %v301 = vpop.xlane.xlu0 %300
      %v302 = vadd.f32 %v284, %v285
      %303 = vadd.xlane.f32.xlu0 %v302
      %v304 = vpop.xlane.xlu0 %303
      %v305 = vadd.f32 %v286, %v287
      %306 = vadd.xlane.f32.xlu0 %v305
      %v307 = vpop.xlane.xlu0 %306
      %v308 = vadd.f32 %v288, %v289
      %309 = vadd.xlane.f32.xlu0 %v308
      %v310 = vpop.xlane.xlu0 %309
      %v311 = vadd.f32 %v290, %v291
      %312 = vadd.xlane.f32.xlu0 %v311
      %v313 = vpop.xlane.xlu0 %312
      %v314 = vadd.f32 %v292, %v293
      %315 = vadd.xlane.f32.xlu0 %v314
      %v316 = vpop.xlane.xlu0 %315
      %v317 = vadd.f32 %v294, %v295
      %318 = vadd.xlane.f32.xlu0 %v317
      %v319 = vpop.xlane.xlu0 %318
      %v320 = vrcp.pop 256.0
      %v321 = vmul.f32 256.0, %v320
      %v322 = vsub.f32 1.0, %v321
      %v323 = vmul.f32 %v320, %v322
      %v324 = vadd.f32 %v320, %v323
      %vm325 = vweird.f32 %v320
      %v326 = vsel %vm325, %v320, %v324
      %v327 = vmul.f32 %v298, %v326
      %v328 = vmul.f32 %v301, %v326
      %v329 = vmul.f32 %v304, %v326
      %v330 = vmul.f32 %v307, %v326
      %v331 = vmul.f32 %v310, %v326
      %v332 = vmul.f32 %v313, %v326
      %v333 = vmul.f32 %v316, %v326
      %v334 = vmul.f32 %v319, %v326
      %v335 = vrot.slane %v327, 4
      %v336 = vadd.f32 %v327, %v335
      %v337 = vrot.slane %v336, 2
      %v338 = vadd.f32 %v336, %v337
      %v339 = vrot.slane %v338, 1
      %v340 = vadd.f32 %v338, %v339
      %v341 = vrot.slane %v328, 4
      %v342 = vadd.f32 %v328, %v341
      %v343 = vrot.slane %v342, 2
      %v344 = vadd.f32 %v342, %v343
      %v345 = vrot.slane %v344, 1
      %v346 = vadd.f32 %v344, %v345
      %v347 = vrot.slane %v329, 4
      %v348 = vadd.f32 %v329, %v347
      %v349 = vrot.slane %v348, 2
      %v350 = vadd.f32 %v348, %v349
      %v351 = vrot.slane %v350, 1
      %v352 = vadd.f32 %v350, %v351
      %v353 = vrot.slane %v330, 4
      %v354 = vadd.f32 %v330, %v353
      %v355 = vrot.slane %v354, 2
      %v356 = vadd.f32 %v354, %v355
      %v357 = vrot.slane %v356, 1
      %v358 = vadd.f32 %v356, %v357
      %v359 = vrot.slane %v331, 4
      %v360 = vadd.f32 %v331, %v359
      %v361 = vrot.slane %v360, 2
      %v362 = vadd.f32 %v360, %v361
      %v363 = vrot.slane %v362, 1
      %v364 = vadd.f32 %v362, %v363
      %v365 = vrot.slane %v332, 4
      %v366 = vadd.f32 %v332, %v365
      %v367 = vrot.slane %v366, 2
      %v368 = vadd.f32 %v366, %v367
      %v369 = vrot.slane %v368, 1
      %v370 = vadd.f32 %v368, %v369
      %v371 = vrot.slane %v333, 4
      %v372 = vadd.f32 %v333, %v371
      %v373 = vrot.slane %v372, 2
      %v374 = vadd.f32 %v372, %v373
      %v375 = vrot.slane %v374, 1
      %v376 = vadd.f32 %v374, %v375
      %v377 = vrot.slane %v334, 4
      %v378 = vadd.f32 %v334, %v377
      %v379 = vrot.slane %v378, 2
      %v380 = vadd.f32 %v378, %v379
      %v381 = vrot.slane %v380, 1
      %v382 = vadd.f32 %v380, %v381
      %v383 = vrcp.pop 8.0
      %v384 = vmul.f32 8.0, %v383
      %v385 = vsub.f32 1.0, %v384
      %v386 = vmul.f32 %v383, %v385
      %v387 = vadd.f32 %v383, %v386
      %vm388 = vweird.f32 %v383
      %v389 = vsel %vm388, %v383, %v387
      %v390 = vmul.f32 %v340, %v389
      %v391 = vmul.f32 %v346, %v389
      %v392 = vmul.f32 %v352, %v389
      %v393 = vmul.f32 %v358, %v389
      %v394 = vmul.f32 %v364, %v389
      %v395 = vmul.f32 %v370, %v389
      %v396 = vmul.f32 %v376, %v389
      %v397 = vmul.f32 %v382, %v389
      %v398 = vsub.f32 %v280, %v390
      %v399 = vsub.f32 %v281, %v390
      %v400 = vsub.f32 %v282, %v391
      %v401 = vsub.f32 %v283, %v391
      %v402 = vsub.f32 %v284, %v392
      %v403 = vsub.f32 %v285, %v392
      %v404 = vsub.f32 %v286, %v393
      %v405 = vsub.f32 %v287, %v393
      %v406 = vsub.f32 %v288, %v394
      %v407 = vsub.f32 %v289, %v394
      %v408 = vsub.f32 %v290, %v395
      %v409 = vsub.f32 %v291, %v395
      %v410 = vsub.f32 %v292, %v396
      %v411 = vsub.f32 %v293, %v396
      %v412 = vsub.f32 %v294, %v397
      %v413 = vsub.f32 %v295, %v397
      %v414 = vmul.f32 %v398, %v398
      %v415 = vmul.f32 %v399, %v399
      %v416 = vmul.f32 %v400, %v400
      %v417 = vmul.f32 %v401, %v401
      %v418 = vmul.f32 %v402, %v402
      %v419 = vmul.f32 %v403, %v403
      %v420 = vmul.f32 %v404, %v404
      %v421 = vmul.f32 %v405, %v405
      %v422 = vmul.f32 %v406, %v406
      %v423 = vmul.f32 %v407, %v407
      %v424 = vmul.f32 %v408, %v408
      %v425 = vmul.f32 %v409, %v409
      %v426 = vmul.f32 %v410, %v410
      %v427 = vmul.f32 %v411, %v411
      %v428 = vmul.f32 %v412, %v412
      %v429 = vmul.f32 %v413, %v413
      %v430 = vadd.f32 %v414, %v415
      %431 = vadd.xlane.f32.xlu0 %v430
      %v432 = vpop.xlane.xlu0 %431
      %v433 = vadd.f32 %v416, %v417
      %434 = vadd.xlane.f32.xlu0 %v433
      %v435 = vpop.xlane.xlu0 %434
      %v436 = vadd.f32 %v418, %v419
      %437 = vadd.xlane.f32.xlu0 %v436
      %v438 = vpop.xlane.xlu0 %437
      %v439 = vadd.f32 %v420, %v421
      %440 = vadd.xlane.f32.xlu0 %v439
      %v441 = vpop.xlane.xlu0 %440
      %v442 = vadd.f32 %v422, %v423
      %443 = vadd.xlane.f32.xlu0 %v442
      %v444 = vpop.xlane.xlu0 %443
      %v445 = vadd.f32 %v424, %v425
      %446 = vadd.xlane.f32.xlu0 %v445
      %v447 = vpop.xlane.xlu0 %446
      %v448 = vadd.f32 %v426, %v427
      %449 = vadd.xlane.f32.xlu0 %v448
      %v450 = vpop.xlane.xlu0 %449
      %v451 = vadd.f32 %v428, %v429
      %452 = vadd.xlane.f32.xlu0 %v451
      %v453 = vpop.xlane.xlu0 %452
      %v454 = vmul.f32 %v432, %v326
      %v455 = vmul.f32 %v435, %v326
      %v456 = vmul.f32 %v438, %v326
      %v457 = vmul.f32 %v441, %v326
      %v458 = vmul.f32 %v444, %v326
      %v459 = vmul.f32 %v447, %v326
      %v460 = vmul.f32 %v450, %v326
      %v461 = vmul.f32 %v453, %v326
      %v462 = vrot.slane %v454, 4
      %v463 = vadd.f32 %v454, %v462
      %v464 = vrot.slane %v463, 2
      %v465 = vadd.f32 %v463, %v464
      %v466 = vrot.slane %v465, 1
      %v467 = vadd.f32 %v465, %v466
      %v468 = vrot.slane %v455, 4
      %v469 = vadd.f32 %v455, %v468
      %v470 = vrot.slane %v469, 2
      %v471 = vadd.f32 %v469, %v470
      %v472 = vrot.slane %v471, 1
      %v473 = vadd.f32 %v471, %v472
      %v474 = vrot.slane %v456, 4
      %v475 = vadd.f32 %v456, %v474
      %v476 = vrot.slane %v475, 2
      %v477 = vadd.f32 %v475, %v476
      %v478 = vrot.slane %v477, 1
      %v479 = vadd.f32 %v477, %v478
      %v480 = vrot.slane %v457, 4
      %v481 = vadd.f32 %v457, %v480
      %v482 = vrot.slane %v481, 2
      %v483 = vadd.f32 %v481, %v482
      %v484 = vrot.slane %v483, 1
      %v485 = vadd.f32 %v483, %v484
      %v486 = vrot.slane %v458, 4
      %v487 = vadd.f32 %v458, %v486
      %v488 = vrot.slane %v487, 2
      %v489 = vadd.f32 %v487, %v488
      %v490 = vrot.slane %v489, 1
      %v491 = vadd.f32 %v489, %v490
      %v492 = vrot.slane %v459, 4
      %v493 = vadd.f32 %v459, %v492
      %v494 = vrot.slane %v493, 2
      %v495 = vadd.f32 %v493, %v494
      %v496 = vrot.slane %v495, 1
      %v497 = vadd.f32 %v495, %v496
      %v498 = vrot.slane %v460, 4
      %v499 = vadd.f32 %v460, %v498
      %v500 = vrot.slane %v499, 2
      %v501 = vadd.f32 %v499, %v500
      %v502 = vrot.slane %v501, 1
      %v503 = vadd.f32 %v501, %v502
      %v504 = vrot.slane %v461, 4
      %v505 = vadd.f32 %v461, %v504
      %v506 = vrot.slane %v505, 2
      %v507 = vadd.f32 %v505, %v506
      %v508 = vrot.slane %v507, 1
      %v509 = vadd.f32 %v507, %v508
      %v510 = vmul.f32 %v467, %v389
      %v511 = vmul.f32 %v473, %v389
      %v512 = vmul.f32 %v479, %v389
      %v513 = vmul.f32 %v485, %v389
      %v514 = vmul.f32 %v491, %v389
      %v515 = vmul.f32 %v497, %v389
      %v516 = vmul.f32 %v503, %v389
      %v517 = vmul.f32 %v509, %v389
      %v518 = vadd.f32 %v510, 1e-05
      %v519 = vadd.f32 %v511, 1e-05
      %v520 = vadd.f32 %v512, 1e-05
      %v521 = vadd.f32 %v513, 1e-05
      %v522 = vadd.f32 %v514, 1e-05
      %v523 = vadd.f32 %v515, 1e-05
      %v524 = vadd.f32 %v516, 1e-05
      %v525 = vadd.f32 %v517, 1e-05
      %v526 = vrsqrt.pop %v518
      %v527 = vmul.f32 %v526, %v518
      %v528 = vmul.f32 %v527, %v526
      %v529 = vmul.f32 0.5, %v528
      %v530 = vsub.f32 1.5, %v529
      %v531 = vmul.f32 %v526, %v530
      %vm532 = vweird.f32 %v518
      %vm533 = vweird.f32 %v526
      %vm534 = vmor %vm532, %vm533
      %v535 = vsel %vm534, %v526, %v531
      %v536 = vrsqrt.pop %v519
      %v537 = vmul.f32 %v536, %v519
      %v538 = vmul.f32 %v537, %v536
      %v539 = vmul.f32 0.5, %v538
      %v540 = vsub.f32 1.5, %v539
      %v541 = vmul.f32 %v536, %v540
      %vm542 = vweird.f32 %v519
      %vm543 = vweird.f32 %v536
      %vm544 = vmor %vm542, %vm543
      %v545 = vsel %vm544, %v536, %v541
      %v546 = vrsqrt.pop %v520
      %v547 = vmul.f32 %v546, %v520
      %v548 = vmul.f32 %v547, %v546
      %v549 = vmul.f32 0.5, %v548
      %v550 = vsub.f32 1.5, %v549
      %v551 = vmul.f32 %v546, %v550
      %vm552 = vweird.f32 %v520
      %vm553 = vweird.f32 %v546
      %vm554 = vmor %vm552, %vm553
      %v555 = vsel %vm554, %v546, %v551
      %v556 = vrsqrt.pop %v521
      %v557 = vmul.f32 %v556, %v521
      %v558 = vmul.f32 %v557, %v556
      %v559 = vmul.f32 0.5, %v558
      %v560 = vsub.f32 1.5, %v559
      %v561 = vmul.f32 %v556, %v560
      %vm562 = vweird.f32 %v521
      %vm563 = vweird.f32 %v556
      %vm564 = vmor %vm562, %vm563
      %v565 = vsel %vm564, %v556, %v561
      %v566 = vrsqrt.pop %v522
      %v567 = vmul.f32 %v566, %v522
      %v568 = vmul.f32 %v567, %v566
      %v569 = vmul.f32 0.5, %v568
      %v570 = vsub.f32 1.5, %v569
      %v571 = vmul.f32 %v566, %v570
      %vm572 = vweird.f32 %v522
      %vm573 = vweird.f32 %v566
      %vm574 = vmor %vm572, %vm573
      %v575 = vsel %vm574, %v566, %v571
      %v576 = vrsqrt.pop %v523
      %v577 = vmul.f32 %v576, %v523
      %v578 = vmul.f32 %v577, %v576
      %v579 = vmul.f32 0.5, %v578
      %v580 = vsub.f32 1.5, %v579
      %v581 = vmul.f32 %v576, %v580
      %vm582 = vweird.f32 %v523
      %vm583 = vweird.f32 %v576
      %vm584 = vmor %vm582, %vm583
      %v585 = vsel %vm584, %v576, %v581
      %v586 = vrsqrt.pop %v524
      %v587 = vmul.f32 %v586, %v524
      %v588 = vmul.f32 %v587, %v586
      %v589 = vmul.f32 0.5, %v588
      %v590 = vsub.f32 1.5, %v589
      %v591 = vmul.f32 %v586, %v590
      %vm592 = vweird.f32 %v524
      %vm593 = vweird.f32 %v586
      %vm594 = vmor %vm592, %vm593
      %v595 = vsel %vm594, %v586, %v591
      %v596 = vrsqrt.pop %v525
      %v597 = vmul.f32 %v596, %v525
      %v598 = vmul.f32 %v597, %v596
      %v599 = vmul.f32 0.5, %v598
      %v600 = vsub.f32 1.5, %v599
      %v601 = vmul.f32 %v596, %v600
      %vm602 = vweird.f32 %v525
      %vm603 = vweird.f32 %v596
      %vm604 = vmor %vm602, %vm603
      %v605 = vsel %vm604, %v596, %v601
      %v606 = vmul.f32 %v398, %v535
      %v607 = vmul.f32 %v399, %v535
      %v608 = vmul.f32 %v400, %v545
      %v609 = vmul.f32 %v401, %v545
      %v610 = vmul.f32 %v402, %v555
      %v611 = vmul.f32 %v403, %v555
      %v612 = vmul.f32 %v404, %v565
      %v613 = vmul.f32 %v405, %v565
      %v614 = vmul.f32 %v406, %v575
      %v615 = vmul.f32 %v407, %v575
      %v616 = vmul.f32 %v408, %v585
      %v617 = vmul.f32 %v409, %v585
      %v618 = vmul.f32 %v410, %v595
      %v619 = vmul.f32 %v411, %v595
      %v620 = vmul.f32 %v412, %v605
      %v621 = vmul.f32 %v413, %v605
      %v622 = vld [vmem:[%s1] sm:$0xff]
      %v623 = vld [vmem:[%s1 + $0x8] sm:$0xff]
      %v624 = vld [vmem:[%s1 + $0x10] sm:$0xff]
      %v625 = vld [vmem:[%s1 + $0x18] sm:$0xff]
      %v626 = vld [vmem:[%s1 + $0x20] sm:$0xff]
      %v627 = vld [vmem:[%s1 + $0x28] sm:$0xff]
      %v628 = vld [vmem:[%s1 + $0x30] sm:$0xff]
      %v629 = vld [vmem:[%s1 + $0x38] sm:$0xff]
      %631 = vset.pattern.permute.xlu0 0
      %632 = vperm.xlu0 %631, %v622
      %v633 = vpop.permute.xlu0 %632
      %636 = vset.pattern.permute.xlu0 0
      %637 = vperm.xlu0 %636, %v623
      %v638 = vpop.permute.xlu0 %637
      %641 = vset.pattern.permute.xlu0 0
      %642 = vperm.xlu0 %641, %v624
      %v643 = vpop.permute.xlu0 %642
      %646 = vset.pattern.permute.xlu0 0
      %647 = vperm.xlu0 %646, %v625
      %v648 = vpop.permute.xlu0 %647
      %651 = vset.pattern.permute.xlu0 0
      %652 = vperm.xlu0 %651, %v626
      %v653 = vpop.permute.xlu0 %652
      %656 = vset.pattern.permute.xlu0 0
      %657 = vperm.xlu0 %656, %v627
      %v658 = vpop.permute.xlu0 %657
      %661 = vset.pattern.permute.xlu0 0
      %662 = vperm.xlu0 %661, %v628
      %v663 = vpop.permute.xlu0 %662
      %666 = vset.pattern.permute.xlu0 0
      %667 = vperm.xlu0 %666, %v629
      %v668 = vpop.permute.xlu0 %667
      %v670 = vmul.f32 %v606, %v633
      %v671 = vmul.f32 %v607, %v633
      %v672 = vmul.f32 %v608, %v638
      %v673 = vmul.f32 %v609, %v638
      %v674 = vmul.f32 %v610, %v643
      %v675 = vmul.f32 %v611, %v643
      %v676 = vmul.f32 %v612, %v648
      %v677 = vmul.f32 %v613, %v648
      %v678 = vmul.f32 %v614, %v653
      %v679 = vmul.f32 %v615, %v653
      %v680 = vmul.f32 %v616, %v658
      %v681 = vmul.f32 %v617, %v658
      %v682 = vmul.f32 %v618, %v663
      %v683 = vmul.f32 %v619, %v663
      %v684 = vmul.f32 %v620, %v668
      %v685 = vmul.f32 %v621, %v668
      %v686 = vld [vmem:[%s2] sm:$0xff]
      %v687 = vld [vmem:[%s2 + $0x8] sm:$0xff]
      %v688 = vld [vmem:[%s2 + $0x10] sm:$0xff]
      %v689 = vld [vmem:[%s2 + $0x18] sm:$0xff]
      %v690 = vld [vmem:[%s2 + $0x20] sm:$0xff]
      %v691 = vld [vmem:[%s2 + $0x28] sm:$0xff]
      %v692 = vld [vmem:[%s2 + $0x30] sm:$0xff]
      %v693 = vld [vmem:[%s2 + $0x38] sm:$0xff]
      %695 = vset.pattern.permute.xlu0 0
      %696 = vperm.xlu0 %695, %v686
      %v697 = vpop.permute.xlu0 %696
      %700 = vset.pattern.permute.xlu0 0
      %701 = vperm.xlu0 %700, %v687
      %v702 = vpop.permute.xlu0 %701
      %705 = vset.pattern.permute.xlu0 0
      %706 = vperm.xlu0 %705, %v688
      %v707 = vpop.permute.xlu0 %706
      %710 = vset.pattern.permute.xlu0 0
      %711 = vperm.xlu0 %710, %v689
      %v712 = vpop.permute.xlu0 %711
      %715 = vset.pattern.permute.xlu0 0
      %716 = vperm.xlu0 %715, %v690
      %v717 = vpop.permute.xlu0 %716
      %720 = vset.pattern.permute.xlu0 0
      %721 = vperm.xlu0 %720, %v691
      %v722 = vpop.permute.xlu0 %721
      %725 = vset.pattern.permute.xlu0 0
      %726 = vperm.xlu0 %725, %v692
      %v727 = vpop.permute.xlu0 %726
      %730 = vset.pattern.permute.xlu0 0
      %731 = vperm.xlu0 %730, %v693
      %v732 = vpop.permute.xlu0 %731
      %v734 = vadd.f32 %v670, %v697
      %v735 = vadd.f32 %v671, %v697
      %v736 = vadd.f32 %v672, %v702
      %v737 = vadd.f32 %v673, %v702
      %v738 = vadd.f32 %v674, %v707
      %v739 = vadd.f32 %v675, %v707
      %v740 = vadd.f32 %v676, %v712
      %v741 = vadd.f32 %v677, %v712
      %v742 = vadd.f32 %v678, %v717
      %v743 = vadd.f32 %v679, %v717
      %v744 = vadd.f32 %v680, %v722
      %v745 = vadd.f32 %v681, %v722
      %v746 = vadd.f32 %v682, %v727
      %v747 = vadd.f32 %v683, %v727
      %v748 = vadd.f32 %v684, %v732
      %v749 = vadd.f32 %v685, %v732
      %v750 = vpack.c.bf16 %v736, %v734
      %v751 = vpack.c.bf16 %v737, %v735
      %v752 = vpack.c.bf16 %v740, %v738
      %v753 = vpack.c.bf16 %v741, %v739
      %v754 = vpack.c.bf16 %v744, %v742
      %v755 = vpack.c.bf16 %v745, %v743
      %v756 = vpack.c.bf16 %v748, %v746
      %v757 = vpack.c.bf16 %v749, %v747
      %v758 = vld [vmem:[%s3] sm:$0xf]
      %v759 = vld [vmem:[%s3 + $0x4] sm:$0xf]
      %v760 = vld [vmem:[%s3 + $0x8] sm:$0xf]
      %v761 = vld [vmem:[%s3 + $0xc] sm:$0xf]
      %v762 = vld [vmem:[%s3 + $0x10] sm:$0xf]
      %v763 = vld [vmem:[%s3 + $0x14] sm:$0xf]
      %v764 = vld [vmem:[%s3 + $0x18] sm:$0xf]
      %v765 = vld [vmem:[%s3 + $0x1c] sm:$0xf]
      %v766 = vld [vmem:[%s3 + $0x20] sm:$0xf]
      %v767 = vld [vmem:[%s3 + $0x24] sm:$0xf]
      %v768 = vld [vmem:[%s3 + $0x28] sm:$0xf]
      %v769 = vld [vmem:[%s3 + $0x2c] sm:$0xf]
      %v770 = vld [vmem:[%s3 + $0x30] sm:$0xf]
      %v771 = vld [vmem:[%s3 + $0x34] sm:$0xf]
      %v772 = vld [vmem:[%s3 + $0x38] sm:$0xf]
      %v773 = vld [vmem:[%s3 + $0x3c] sm:$0xf]
      %v774 = vld [vmem:[%s3 + $0x40] sm:$0xf]
      %v775 = vld [vmem:[%s3 + $0x44] sm:$0xf]
      %v776 = vld [vmem:[%s3 + $0x48] sm:$0xf]
      %v777 = vld [vmem:[%s3 + $0x4c] sm:$0xf]
      %v778 = vld [vmem:[%s3 + $0x50] sm:$0xf]
      %v779 = vld [vmem:[%s3 + $0x54] sm:$0xf]
      %v780 = vld [vmem:[%s3 + $0x58] sm:$0xf]
      %v781 = vld [vmem:[%s3 + $0x5c] sm:$0xf]
      %v782 = vld [vmem:[%s4] sm:$0xff]
      %v783 = vld [vmem:[%s4 + $0x8] sm:$0xff]
      %v784 = vld [vmem:[%s4 + $0x10] sm:$0xff]
      %v785 = vld [vmem:[%s4 + $0x18] sm:$0xff]
      %v786 = vld [vmem:[%s4 + $0x20] sm:$0xff]
      %v787 = vld [vmem:[%s4 + $0x28] sm:$0xff]
      %v788 = vld [vmem:[%s4 + $0x30] sm:$0xff]
      %v789 = vld [vmem:[%s4 + $0x38] sm:$0xff]
      %v790 = vld [vmem:[%s4 + $0x40] sm:$0xff]
      %v791 = vld [vmem:[%s4 + $0x48] sm:$0xff]
      %v792 = vld [vmem:[%s4 + $0x50] sm:$0xff]
      %v793 = vld [vmem:[%s4 + $0x58] sm:$0xff]
      %v794 = vld [vmem:[%s4 + $0x60] sm:$0xff]
      %v795 = vld [vmem:[%s4 + $0x68] sm:$0xff]
      %v796 = vld [vmem:[%s4 + $0x70] sm:$0xff]
      %v797 = vld [vmem:[%s4 + $0x78] sm:$0xff]
      %v798 = vld [vmem:[%s4 + $0x80] sm:$0xff]
      %v799 = vld [vmem:[%s4 + $0x88] sm:$0xff]
      %v800 = vld [vmem:[%s4 + $0x90] sm:$0xff]
      %v801 = vld [vmem:[%s4 + $0x98] sm:$0xff]
      %v802 = vld [vmem:[%s4 + $0xa0] sm:$0xff]
      %v803 = vld [vmem:[%s4 + $0xa8] sm:$0xff]
      %v804 = vld [vmem:[%s4 + $0xb0] sm:$0xff]
      %v805 = vld [vmem:[%s4 + $0xb8] sm:$0xff]
      %807 = vset.pattern.permute.xlu0 0
      %808 = vperm.xlu0 %807, %v782
      %v809 = vpop.permute.xlu0 %808
      %812 = vset.pattern.permute.xlu0 0
      %813 = vperm.xlu0 %812, %v783
      %v814 = vpop.permute.xlu0 %813
      %817 = vset.pattern.permute.xlu0 0
      %818 = vperm.xlu0 %817, %v784
      %v819 = vpop.permute.xlu0 %818
      %822 = vset.pattern.permute.xlu0 0
      %823 = vperm.xlu0 %822, %v785
      %v824 = vpop.permute.xlu0 %823
      %827 = vset.pattern.permute.xlu0 0
      %828 = vperm.xlu0 %827, %v786
      %v829 = vpop.permute.xlu0 %828
      %832 = vset.pattern.permute.xlu0 0
      %833 = vperm.xlu0 %832, %v787
      %v834 = vpop.permute.xlu0 %833
      %837 = vset.pattern.permute.xlu0 0
      %838 = vperm.xlu0 %837, %v788
      %v839 = vpop.permute.xlu0 %838
      %842 = vset.pattern.permute.xlu0 0
      %843 = vperm.xlu0 %842, %v789
      %v844 = vpop.permute.xlu0 %843
      %847 = vset.pattern.permute.xlu0 0
      %848 = vperm.xlu0 %847, %v790
      %v849 = vpop.permute.xlu0 %848
      %852 = vset.pattern.permute.xlu0 0
      %853 = vperm.xlu0 %852, %v791
      %v854 = vpop.permute.xlu0 %853
      %857 = vset.pattern.permute.xlu0 0
      %858 = vperm.xlu0 %857, %v792
      %v859 = vpop.permute.xlu0 %858
      %862 = vset.pattern.permute.xlu0 0
      %863 = vperm.xlu0 %862, %v793
      %v864 = vpop.permute.xlu0 %863
      %867 = vset.pattern.permute.xlu0 0
      %868 = vperm.xlu0 %867, %v794
      %v869 = vpop.permute.xlu0 %868
      %872 = vset.pattern.permute.xlu0 0
      %873 = vperm.xlu0 %872, %v795
      %v874 = vpop.permute.xlu0 %873
      %877 = vset.pattern.permute.xlu0 0
      %878 = vperm.xlu0 %877, %v796
      %v879 = vpop.permute.xlu0 %878
      %882 = vset.pattern.permute.xlu0 0
      %883 = vperm.xlu0 %882, %v797
      %v884 = vpop.permute.xlu0 %883
      %887 = vset.pattern.permute.xlu0 0
      %888 = vperm.xlu0 %887, %v798
      %v889 = vpop.permute.xlu0 %888
      %892 = vset.pattern.permute.xlu0 0
      %893 = vperm.xlu0 %892, %v799
      %v894 = vpop.permute.xlu0 %893
      %897 = vset.pattern.permute.xlu0 0
      %898 = vperm.xlu0 %897, %v800
      %v899 = vpop.permute.xlu0 %898
      %902 = vset.pattern.permute.xlu0 0
      %903 = vperm.xlu0 %902, %v801
      %v904 = vpop.permute.xlu0 %903
      %907 = vset.pattern.permute.xlu0 0
      %908 = vperm.xlu0 %907, %v802
      %v909 = vpop.permute.xlu0 %908
      %912 = vset.pattern.permute.xlu0 0
      %913 = vperm.xlu0 %912, %v803
      %v914 = vpop.permute.xlu0 %913
      %917 = vset.pattern.permute.xlu0 0
      %918 = vperm.xlu0 %917, %v804
      %v919 = vpop.permute.xlu0 %918
      %922 = vset.pattern.permute.xlu0 0
      %923 = vperm.xlu0 %922, %v805
      %v924 = vpop.permute.xlu0 %923
      %v950 = vunpack.c.l.b16 %v758
      %v951 = vunpack.c.l.b16 %v759
      %v952 = vunpack.c.l.b16 %v760
      %v953 = vunpack.c.l.b16 %v761
      %v954 = vunpack.c.l.b16 %v762
      %v955 = vunpack.c.l.b16 %v763
      %v956 = vunpack.c.l.b16 %v764
      %v957 = vunpack.c.l.b16 %v765
      %v958 = vunpack.c.l.b16 %v766
      %v959 = vunpack.c.l.b16 %v767
      %v960 = vunpack.c.l.b16 %v768
      %v961 = vunpack.c.l.b16 %v769
      %v962 = vunpack.c.l.b16 %v770
      %v963 = vunpack.c.l.b16 %v771
      %v964 = vunpack.c.l.b16 %v772
      %v965 = vunpack.c.l.b16 %v773
      %v966 = vunpack.c.l.b16 %v774
      %v967 = vunpack.c.l.b16 %v775
      %v968 = vunpack.c.l.b16 %v776
      %v969 = vunpack.c.l.b16 %v777
      %v970 = vunpack.c.l.b16 %v778
      %v971 = vunpack.c.l.b16 %v779
      %v972 = vunpack.c.l.b16 %v780
      %v973 = vunpack.c.l.b16 %v781
      %v974 = vpack.c.b16 %v951, %v950
      %v975 = vpack.c.b16 %v953, %v952
      %v976 = vpack.c.b16 %v955, %v954
      %v977 = vpack.c.b16 %v957, %v956
      %v978 = vpack.c.b16 %v959, %v958
      %v979 = vpack.c.b16 %v961, %v960
      %v980 = vpack.c.b16 %v963, %v962
      %v981 = vpack.c.b16 %v965, %v964
      %v982 = vpack.c.b16 %v967, %v966
      %v983 = vpack.c.b16 %v969, %v968
      %v984 = vpack.c.b16 %v971, %v970
      %v985 = vpack.c.b16 %v973, %v972
      %vm986 = vcmask 523264
      %v988 = vsel %vm986, %v974, 0
      %v991 = vsel %vm986, %v975, 0
      %v994 = vsel %vm986, %v976, 0
      %v997 = vsel %vm986, %v977, 0
      %v1000 = vsel %vm986, %v978, 0
      %v1003 = vsel %vm986, %v979, 0
      %v1006 = vsel %vm986, %v980, 0
      %v1009 = vsel %vm986, %v981, 0
      %v1012 = vsel %vm986, %v982, 0
      %v1015 = vsel %vm986, %v983, 0
      %v1018 = vsel %vm986, %v984, 0
      %v1021 = vsel %vm986, %v985, 0
      %1023 = vmatpush.bf16.msra.mxu0 0
      %1024 = vmatpush.bf16.msra.mxu0 0
      %1025 = vmatpush.bf16.msra.mxu0 0
      %1026 = vmatpush.bf16.msra.mxu0 0
      %1027 = vmatpush.bf16.msra.mxu0 %v756
      %1028 = vmatpush.bf16.msra.mxu0 %v754
      %1029 = vmatpush.bf16.msra.mxu0 %v752
      %1030 = vmatpush.bf16.msra.mxu0 %v750
      %1031 = vmatmul.bf16.gmra.mxu0 %v988
      %v1032 = vpop.f32.mrf.mxu0
      %v1033 = vadd.f32 %v809, %v1032
      %v1034 = vpop.f32.mrf.mxu0
      %v1035 = vadd.f32 %v814, %v1034
      %1036 = vmatmul.bf16.gmra.mxu0 %v991
      %v1037 = vpop.f32.mrf.mxu0
      %v1038 = vadd.f32 %v819, %v1037
      %v1039 = vpop.f32.mrf.mxu0
      %v1040 = vadd.f32 %v824, %v1039
      %1041 = vmatmul.bf16.gmra.mxu0 %v994
      %v1042 = vpop.f32.mrf.mxu0
      %v1043 = vadd.f32 %v829, %v1042
      %v1044 = vpop.f32.mrf.mxu0
      %v1045 = vadd.f32 %v834, %v1044
      %1046 = vmatmul.bf16.gmra.mxu0 %v997
      %v1047 = vpop.f32.mrf.mxu0
      %v1048 = vadd.f32 %v839, %v1047
      %v1049 = vpop.f32.mrf.mxu0
      %v1050 = vadd.f32 %v844, %v1049
      %1051 = vmatmul.bf16.gmra.mxu0 %v1000
      %v1052 = vpop.f32.mrf.mxu0
      %v1053 = vadd.f32 %v849, %v1052
      %v1054 = vpop.f32.mrf.mxu0
      %v1055 = vadd.f32 %v854, %v1054
      %1056 = vmatmul.bf16.gmra.mxu0 %v1003
      %v1057 = vpop.f32.mrf.mxu0
      %v1058 = vadd.f32 %v859, %v1057
      %v1059 = vpop.f32.mrf.mxu0
      %v1060 = vadd.f32 %v864, %v1059
      %1061 = vmatmul.bf16.gmra.mxu0 %v1006
      %v1062 = vpop.f32.mrf.mxu0
      %v1063 = vadd.f32 %v869, %v1062
      %v1064 = vpop.f32.mrf.mxu0
      %v1065 = vadd.f32 %v874, %v1064
      %1066 = vmatmul.bf16.gmra.mxu0 %v1009
      %v1067 = vpop.f32.mrf.mxu0
      %v1068 = vadd.f32 %v879, %v1067
      %v1069 = vpop.f32.mrf.mxu0
      %v1070 = vadd.f32 %v884, %v1069
      %1071 = vmatmul.bf16.gmra.mxu0 %v1012
      %v1072 = vpop.f32.mrf.mxu0
      %v1073 = vadd.f32 %v889, %v1072
      %v1074 = vpop.f32.mrf.mxu0
      %v1075 = vadd.f32 %v894, %v1074
      %1076 = vmatmul.bf16.gmra.mxu0 %v1015
      %v1077 = vpop.f32.mrf.mxu0
      %v1078 = vadd.f32 %v899, %v1077
      %v1079 = vpop.f32.mrf.mxu0
      %v1080 = vadd.f32 %v904, %v1079
      %1081 = vmatmul.bf16.gmra.mxu0 %v1018
      %v1082 = vpop.f32.mrf.mxu0
      %v1083 = vadd.f32 %v909, %v1082
      %v1084 = vpop.f32.mrf.mxu0
      %v1085 = vadd.f32 %v914, %v1084
      %1086 = vmatmul.bf16.gmra.mxu0 %v1021
      %v1087 = vpop.f32.mrf.mxu0
      %v1088 = vadd.f32 %v919, %v1087
      %v1089 = vpop.f32.mrf.mxu0
      %v1090 = vadd.f32 %v924, %v1089
      %1091 = vdwg.mxu0
      %1092 = vmatpush.bf16.msra.mxu0 0
      %1093 = vmatpush.bf16.msra.mxu0 0
      %1094 = vmatpush.bf16.msra.mxu0 0
      %1095 = vmatpush.bf16.msra.mxu0 0
      %1096 = vmatpush.bf16.msra.mxu0 %v757
      %1097 = vmatpush.bf16.msra.mxu0 %v755
      %1098 = vmatpush.bf16.msra.mxu0 %v753
      %1099 = vmatpush.bf16.msra.mxu0 %v751
      %1100 = vmatmul.bf16.gmra.mxu0 %v988
      %v1101 = vpop.f32.mrf.mxu0
      %v1102 = vadd.f32 %v809, %v1101
      %v1103 = vpop.f32.mrf.mxu0
      %v1104 = vadd.f32 %v814, %v1103
      %1105 = vmatmul.bf16.gmra.mxu0 %v991
      %v1106 = vpop.f32.mrf.mxu0
      %v1107 = vadd.f32 %v819, %v1106
      %v1108 = vpop.f32.mrf.mxu0
      %v1109 = vadd.f32 %v824, %v1108
      %1110 = vmatmul.bf16.gmra.mxu0 %v994
      %v1111 = vpop.f32.mrf.mxu0
      %v1112 = vadd.f32 %v829, %v1111
      %v1113 = vpop.f32.mrf.mxu0
      %v1114 = vadd.f32 %v834, %v1113
      %1115 = vmatmul.bf16.gmra.mxu0 %v997
      %v1116 = vpop.f32.mrf.mxu0
      %v1117 = vadd.f32 %v839, %v1116
      %v1118 = vpop.f32.mrf.mxu0
      %v1119 = vadd.f32 %v844, %v1118
      %1120 = vmatmul.bf16.gmra.mxu0 %v1000
      %v1121 = vpop.f32.mrf.mxu0
      %v1122 = vadd.f32 %v849, %v1121
      %v1123 = vpop.f32.mrf.mxu0
      %v1124 = vadd.f32 %v854, %v1123
      %1125 = vmatmul.bf16.gmra.mxu0 %v1003
      %v1126 = vpop.f32.mrf.mxu0
      %v1127 = vadd.f32 %v859, %v1126
      %v1128 = vpop.f32.mrf.mxu0
      %v1129 = vadd.f32 %v864, %v1128
      %1130 = vmatmul.bf16.gmra.mxu0 %v1006
      %v1131 = vpop.f32.mrf.mxu0
      %v1132 = vadd.f32 %v869, %v1131
      %v1133 = vpop.f32.mrf.mxu0
      %v1134 = vadd.f32 %v874, %v1133
      %1135 = vmatmul.bf16.gmra.mxu0 %v1009
      %v1136 = vpop.f32.mrf.mxu0
      %v1137 = vadd.f32 %v879, %v1136
      %v1138 = vpop.f32.mrf.mxu0
      %v1139 = vadd.f32 %v884, %v1138
      %1140 = vmatmul.bf16.gmra.mxu0 %v1012
      %v1141 = vpop.f32.mrf.mxu0
      %v1142 = vadd.f32 %v889, %v1141
      %v1143 = vpop.f32.mrf.mxu0
      %v1144 = vadd.f32 %v894, %v1143
      %1145 = vmatmul.bf16.gmra.mxu0 %v1015
      %v1146 = vpop.f32.mrf.mxu0
      %v1147 = vadd.f32 %v899, %v1146
      %v1148 = vpop.f32.mrf.mxu0
      %v1149 = vadd.f32 %v904, %v1148
      %1150 = vmatmul.bf16.gmra.mxu0 %v1018
      %v1151 = vpop.f32.mrf.mxu0
      %v1152 = vadd.f32 %v909, %v1151
      %v1153 = vpop.f32.mrf.mxu0
      %v1154 = vadd.f32 %v914, %v1153
      %1155 = vmatmul.bf16.gmra.mxu0 %v1021
      %v1156 = vpop.f32.mrf.mxu0
      %v1157 = vadd.f32 %v919, %v1156
      %v1158 = vpop.f32.mrf.mxu0
      %v1159 = vadd.f32 %v924, %v1158
      %1160 = vdwg.mxu0
      %1161 = vxpose.xlu0.b32.start [1/16] %v1033, 128
      %1162 = vxpose.xlu0.b32.cont [2/16] %v1035, 128
      %1163 = vxpose.xlu0.b32.cont [3/16] 0.0, 128
      %1164 = vxpose.xlu0.b32.cont [4/16] 0.0, 128
      %1165 = vxpose.xlu0.b32.cont [5/16] 0.0, 128
      %1166 = vxpose.xlu0.b32.cont [6/16] 0.0, 128
      %1167 = vxpose.xlu0.b32.cont [7/16] 0.0, 128
      %1168 = vxpose.xlu0.b32.cont [8/16] 0.0, 128
      %1169 = vxpose.xlu0.b32.cont [9/16] 0.0, 128
      %1170 = vxpose.xlu0.b32.cont [10/16] 0.0, 128
      %1171 = vxpose.xlu0.b32.cont [11/16] 0.0, 128
      %1172 = vxpose.xlu0.b32.cont [12/16] 0.0, 128
      %1173 = vxpose.xlu0.b32.cont [13/16] 0.0, 128
      %1174 = vxpose.xlu0.b32.cont [14/16] 0.0, 128
      %1175 = vxpose.xlu0.b32.cont [15/16] 0.0, 128
      %1176 = vxpose.xlu0.b32.end [16/16] 0.0, 128
      %v1177 = vpop.trf.xlu0
      %v1178 = vpop.trf.xlu0
      %v1179 = vpop.trf.xlu0
      %v1180 = vpop.trf.xlu0
      %v1181 = vpop.trf.xlu0
      %v1182 = vpop.trf.xlu0
      %v1183 = vpop.trf.xlu0
      %v1184 = vpop.trf.xlu0
      %v1185 = vpop.trf.xlu0
      %v1186 = vpop.trf.xlu0
      %v1187 = vpop.trf.xlu0
      %v1188 = vpop.trf.xlu0
      %v1189 = vpop.trf.xlu0
      %v1190 = vpop.trf.xlu0
      %v1191 = vpop.trf.xlu0
      %v1192 = vpop.trf.xlu0
      %1193 = vxpose.xlu0.b32.start [1/16] %v1102, 128
      %1194 = vxpose.xlu0.b32.cont [2/16] %v1104, 128
      %1195 = vxpose.xlu0.b32.cont [3/16] 0.0, 128
      %1196 = vxpose.xlu0.b32.cont [4/16] 0.0, 128
      %1197 = vxpose.xlu0.b32.cont [5/16] 0.0, 128
      %1198 = vxpose.xlu0.b32.cont [6/16] 0.0, 128
      %1199 = vxpose.xlu0.b32.cont [7/16] 0.0, 128
      %1200 = vxpose.xlu0.b32.cont [8/16] 0.0, 128
      %1201 = vxpose.xlu0.b32.cont [9/16] 0.0, 128
      %1202 = vxpose.xlu0.b32.cont [10/16] 0.0, 128
      %1203 = vxpose.xlu0.b32.cont [11/16] 0.0, 128
      %1204 = vxpose.xlu0.b32.cont [12/16] 0.0, 128
      %1205 = vxpose.xlu0.b32.cont [13/16] 0.0, 128
      %1206 = vxpose.xlu0.b32.cont [14/16] 0.0, 128
      %1207 = vxpose.xlu0.b32.cont [15/16] 0.0, 128
      %1208 = vxpose.xlu0.b32.end [16/16] 0.0, 128
      %v1209 = vpop.trf.xlu0
      %v1210 = vpop.trf.xlu0
      %v1211 = vpop.trf.xlu0
      %v1212 = vpop.trf.xlu0
      %v1213 = vpop.trf.xlu0
      %v1214 = vpop.trf.xlu0
      %v1215 = vpop.trf.xlu0
      %v1216 = vpop.trf.xlu0
      %v1217 = vpop.trf.xlu0
      %v1218 = vpop.trf.xlu0
      %v1219 = vpop.trf.xlu0
      %v1220 = vpop.trf.xlu0
      %v1221 = vpop.trf.xlu0
      %v1222 = vpop.trf.xlu0
      %v1223 = vpop.trf.xlu0
      %v1224 = vpop.trf.xlu0
      %v1225 = vpack.c.bf16 %v1178, %v1177
      %v1226 = vpack.c.bf16 %v1180, %v1179
      %v1227 = vpack.c.bf16 %v1182, %v1181
      %v1228 = vpack.c.bf16 %v1184, %v1183
      %v1229 = vpack.c.bf16 %v1186, %v1185
      %v1230 = vpack.c.bf16 %v1188, %v1187
      %v1231 = vpack.c.bf16 %v1190, %v1189
      %v1232 = vpack.c.bf16 %v1192, %v1191
      %v1233 = vpack.c.bf16 %v1210, %v1209
      %v1234 = vpack.c.bf16 %v1212, %v1211
      %v1235 = vpack.c.bf16 %v1214, %v1213
      %v1236 = vpack.c.bf16 %v1216, %v1215
      %v1237 = vpack.c.bf16 %v1218, %v1217
      %v1238 = vpack.c.bf16 %v1220, %v1219
      %v1239 = vpack.c.bf16 %v1222, %v1221
      %v1240 = vpack.c.bf16 %v1224, %v1223
      %v1241 = vpack.c.bf16 %v1055, %v1053
      %v1242 = vpack.c.bf16 %v1124, %v1122
      %v1243 = vpack.c.bf16 %v1075, %v1073
      %v1244 = vpack.c.bf16 %v1144, %v1142
      %vm1245 = vcmask 130048
      %v1247 = vsel %vm1245, %v1225, 0
      %v1250 = vsel %vm1245, %v1226, 0
      %v1253 = vsel %vm1245, %v1227, 0
      %v1256 = vsel %vm1245, %v1228, 0
      %v1259 = vsel %vm1245, %v1229, 0
      %v1262 = vsel %vm1245, %v1230, 0
      %v1265 = vsel %vm1245, %v1231, 0
      %v1268 = vsel %vm1245, %v1232, 0
      %v1271 = vsel %vm1245, %v1233, 0
      %v1274 = vsel %vm1245, %v1234, 0
      %v1277 = vsel %vm1245, %v1235, 0
      %v1280 = vsel %vm1245, %v1236, 0
      %v1283 = vsel %vm1245, %v1237, 0
      %v1286 = vsel %vm1245, %v1238, 0
      %v1289 = vsel %vm1245, %v1239, 0
      %v1292 = vsel %vm1245, %v1240, 0
      %1294 = vmatpush.bf16.msra.mxu0 0
      %1295 = vmatpush.bf16.msra.mxu0 0
      %1296 = vmatpush.bf16.msra.mxu0 0
      %1297 = vmatpush.bf16.msra.mxu0 0
      %1298 = vmatpush.bf16.msra.mxu0 0
      %1299 = vmatpush.bf16.msra.mxu0 0
      %1300 = vmatpush.bf16.msra.mxu0 0
      %1301 = vmatpush.bf16.msra.mxu0 %v1241
      %1302 = vmatmul.bf16.gmra.mxu0 %v1247
      %v1303 = vpop.f32.mrf.mxu0
      %v1304 = vadd.f32 0.0, %v1303
      %v1305 = vpop.f32.mrf.mxu0
      %v1306 = vadd.f32 0.0, %v1305
      %1307 = vmatmul.bf16.gmra.mxu0 %v1250
      %v1308 = vpop.f32.mrf.mxu0
      %v1309 = vadd.f32 0.0, %v1308
      %v1310 = vpop.f32.mrf.mxu0
      %v1311 = vadd.f32 0.0, %v1310
      %1312 = vmatmul.bf16.gmra.mxu0 %v1253
      %v1313 = vpop.f32.mrf.mxu0
      %v1314 = vadd.f32 0.0, %v1313
      %v1315 = vpop.f32.mrf.mxu0
      %v1316 = vadd.f32 0.0, %v1315
      %1317 = vmatmul.bf16.gmra.mxu0 %v1256
      %v1318 = vpop.f32.mrf.mxu0
      %v1319 = vadd.f32 0.0, %v1318
      %v1320 = vpop.f32.mrf.mxu0
      %v1321 = vadd.f32 0.0, %v1320
      %1322 = vmatmul.bf16.gmra.mxu0 %v1259
      %v1323 = vpop.f32.mrf.mxu0
      %v1324 = vadd.f32 0.0, %v1323
      %v1325 = vpop.f32.mrf.mxu0
      %v1326 = vadd.f32 0.0, %v1325
      %1327 = vmatmul.bf16.gmra.mxu0 %v1262
      %v1328 = vpop.f32.mrf.mxu0
      %v1329 = vadd.f32 0.0, %v1328
      %v1330 = vpop.f32.mrf.mxu0
      %v1331 = vadd.f32 0.0, %v1330
      %1332 = vmatmul.bf16.gmra.mxu0 %v1265
      %v1333 = vpop.f32.mrf.mxu0
      %v1334 = vadd.f32 0.0, %v1333
      %v1335 = vpop.f32.mrf.mxu0
      %v1336 = vadd.f32 0.0, %v1335
      %1337 = vmatmul.bf16.gmra.mxu0 %v1268
      %v1338 = vpop.f32.mrf.mxu0
      %v1339 = vadd.f32 0.0, %v1338
      %v1340 = vpop.f32.mrf.mxu0
      %v1341 = vadd.f32 0.0, %v1340
      %1342 = vmatmul.bf16.gmra.mxu0 %v1271
      %v1343 = vpop.f32.mrf.mxu0
      %v1344 = vadd.f32 0.0, %v1343
      %v1345 = vpop.f32.mrf.mxu0
      %v1346 = vadd.f32 0.0, %v1345
      %1347 = vmatmul.bf16.gmra.mxu0 %v1274
      %v1348 = vpop.f32.mrf.mxu0
      %v1349 = vadd.f32 0.0, %v1348
      %v1350 = vpop.f32.mrf.mxu0
      %v1351 = vadd.f32 0.0, %v1350
      %1352 = vmatmul.bf16.gmra.mxu0 %v1277
      %v1353 = vpop.f32.mrf.mxu0
      %v1354 = vadd.f32 0.0, %v1353
      %v1355 = vpop.f32.mrf.mxu0
      %v1356 = vadd.f32 0.0, %v1355
      %1357 = vmatmul.bf16.gmra.mxu0 %v1280
      %v1358 = vpop.f32.mrf.mxu0
      %v1359 = vadd.f32 0.0, %v1358
      %v1360 = vpop.f32.mrf.mxu0
      %v1361 = vadd.f32 0.0, %v1360
      %1362 = vmatmul.bf16.gmra.mxu0 %v1283
      %v1363 = vpop.f32.mrf.mxu0
      %v1364 = vadd.f32 0.0, %v1363
      %v1365 = vpop.f32.mrf.mxu0
      %v1366 = vadd.f32 0.0, %v1365
      %1367 = vmatmul.bf16.gmra.mxu0 %v1286
      %v1368 = vpop.f32.mrf.mxu0
      %v1369 = vadd.f32 0.0, %v1368
      %v1370 = vpop.f32.mrf.mxu0
      %v1371 = vadd.f32 0.0, %v1370
      %1372 = vmatmul.bf16.gmra.mxu0 %v1289
      %v1373 = vpop.f32.mrf.mxu0
      %v1374 = vadd.f32 0.0, %v1373
      %v1375 = vpop.f32.mrf.mxu0
      %v1376 = vadd.f32 0.0, %v1375
      %1377 = vmatmul.bf16.gmra.mxu0 %v1292
      %v1378 = vpop.f32.mrf.mxu0
      %v1379 = vadd.f32 0.0, %v1378
      %v1380 = vpop.f32.mrf.mxu0
      %v1381 = vadd.f32 0.0, %v1380
      %1382 = vdwg.mxu0
      %1383 = vmatpush.bf16.msra.mxu0 0
      %1384 = vmatpush.bf16.msra.mxu0 0
      %1385 = vmatpush.bf16.msra.mxu0 0
      %1386 = vmatpush.bf16.msra.mxu0 0
      %1387 = vmatpush.bf16.msra.mxu0 0
      %1388 = vmatpush.bf16.msra.mxu0 0
      %1389 = vmatpush.bf16.msra.mxu0 0
      %1390 = vmatpush.bf16.msra.mxu0 %v1242
      %1391 = vmatmul.bf16.gmra.mxu0 %v1247
      %v1392 = vpop.f32.mrf.mxu0
      %v1393 = vadd.f32 0.0, %v1392
      %v1394 = vpop.f32.mrf.mxu0
      %v1395 = vadd.f32 0.0, %v1394
      %1396 = vmatmul.bf16.gmra.mxu0 %v1250
      %v1397 = vpop.f32.mrf.mxu0
      %v1398 = vadd.f32 0.0, %v1397
      %v1399 = vpop.f32.mrf.mxu0
      %v1400 = vadd.f32 0.0, %v1399
      %1401 = vmatmul.bf16.gmra.mxu0 %v1253
      %v1402 = vpop.f32.mrf.mxu0
      %v1403 = vadd.f32 0.0, %v1402
      %v1404 = vpop.f32.mrf.mxu0
      %v1405 = vadd.f32 0.0, %v1404
      %1406 = vmatmul.bf16.gmra.mxu0 %v1256
      %v1407 = vpop.f32.mrf.mxu0
      %v1408 = vadd.f32 0.0, %v1407
      %v1409 = vpop.f32.mrf.mxu0
      %v1410 = vadd.f32 0.0, %v1409
      %1411 = vmatmul.bf16.gmra.mxu0 %v1259
      %v1412 = vpop.f32.mrf.mxu0
      %v1413 = vadd.f32 0.0, %v1412
      %v1414 = vpop.f32.mrf.mxu0
      %v1415 = vadd.f32 0.0, %v1414
      %1416 = vmatmul.bf16.gmra.mxu0 %v1262
      %v1417 = vpop.f32.mrf.mxu0
      %v1418 = vadd.f32 0.0, %v1417
      %v1419 = vpop.f32.mrf.mxu0
      %v1420 = vadd.f32 0.0, %v1419
      %1421 = vmatmul.bf16.gmra.mxu0 %v1265
      %v1422 = vpop.f32.mrf.mxu0
      %v1423 = vadd.f32 0.0, %v1422
      %v1424 = vpop.f32.mrf.mxu0
      %v1425 = vadd.f32 0.0, %v1424
      %1426 = vmatmul.bf16.gmra.mxu0 %v1268
      %v1427 = vpop.f32.mrf.mxu0
      %v1428 = vadd.f32 0.0, %v1427
      %v1429 = vpop.f32.mrf.mxu0
      %v1430 = vadd.f32 0.0, %v1429
      %1431 = vmatmul.bf16.gmra.mxu0 %v1271
      %v1432 = vpop.f32.mrf.mxu0
      %v1433 = vadd.f32 0.0, %v1432
      %v1434 = vpop.f32.mrf.mxu0
      %v1435 = vadd.f32 0.0, %v1434
      %1436 = vmatmul.bf16.gmra.mxu0 %v1274
      %v1437 = vpop.f32.mrf.mxu0
      %v1438 = vadd.f32 0.0, %v1437
      %v1439 = vpop.f32.mrf.mxu0
      %v1440 = vadd.f32 0.0, %v1439
      %1441 = vmatmul.bf16.gmra.mxu0 %v1277
      %v1442 = vpop.f32.mrf.mxu0
      %v1443 = vadd.f32 0.0, %v1442
      %v1444 = vpop.f32.mrf.mxu0
      %v1445 = vadd.f32 0.0, %v1444
      %1446 = vmatmul.bf16.gmra.mxu0 %v1280
      %v1447 = vpop.f32.mrf.mxu0
      %v1448 = vadd.f32 0.0, %v1447
      %v1449 = vpop.f32.mrf.mxu0
      %v1450 = vadd.f32 0.0, %v1449
      %1451 = vmatmul.bf16.gmra.mxu0 %v1283
      %v1452 = vpop.f32.mrf.mxu0
      %v1453 = vadd.f32 0.0, %v1452
      %v1454 = vpop.f32.mrf.mxu0
      %v1455 = vadd.f32 0.0, %v1454
      %1456 = vmatmul.bf16.gmra.mxu0 %v1286
      %v1457 = vpop.f32.mrf.mxu0
      %v1458 = vadd.f32 0.0, %v1457
      %v1459 = vpop.f32.mrf.mxu0
      %v1460 = vadd.f32 0.0, %v1459
      %1461 = vmatmul.bf16.gmra.mxu0 %v1289
      %v1462 = vpop.f32.mrf.mxu0
      %v1463 = vadd.f32 0.0, %v1462
      %v1464 = vpop.f32.mrf.mxu0
      %v1465 = vadd.f32 0.0, %v1464
      %1466 = vmatmul.bf16.gmra.mxu0 %v1292
      %v1467 = vpop.f32.mrf.mxu0
      %v1468 = vadd.f32 0.0, %v1467
      %v1469 = vpop.f32.mrf.mxu0
      %v1470 = vadd.f32 0.0, %v1469
      %1471 = vdwg.mxu0
      %v1472 = vmax.f32 %v1304, %v1393
      %1473 = vmax.xlane.f32.xlu0 %v1472
      %v1474 = vpop.xlane.xlu0 %1473
      %v1475 = vmax.f32 %v1306, %v1395
      %1476 = vmax.xlane.f32.xlu0 %v1475
      %v1477 = vpop.xlane.xlu0 %1476
      %v1478 = vmax.f32 %v1309, %v1398
      %1479 = vmax.xlane.f32.xlu0 %v1478
      %v1480 = vpop.xlane.xlu0 %1479
      %v1481 = vmax.f32 %v1311, %v1400
      %1482 = vmax.xlane.f32.xlu0 %v1481
      %v1483 = vpop.xlane.xlu0 %1482
      %v1484 = vmax.f32 %v1314, %v1403
      %1485 = vmax.xlane.f32.xlu0 %v1484
      %v1486 = vpop.xlane.xlu0 %1485
      %v1487 = vmax.f32 %v1316, %v1405
      %1488 = vmax.xlane.f32.xlu0 %v1487
      %v1489 = vpop.xlane.xlu0 %1488
      %v1490 = vmax.f32 %v1319, %v1408
      %1491 = vmax.xlane.f32.xlu0 %v1490
      %v1492 = vpop.xlane.xlu0 %1491
      %v1493 = vmax.f32 %v1321, %v1410
      %1494 = vmax.xlane.f32.xlu0 %v1493
      %v1495 = vpop.xlane.xlu0 %1494
      %v1496 = vmax.f32 %v1324, %v1413
      %1497 = vmax.xlane.f32.xlu0 %v1496
      %v1498 = vpop.xlane.xlu0 %1497
      %v1499 = vmax.f32 %v1326, %v1415
      %1500 = vmax.xlane.f32.xlu0 %v1499
      %v1501 = vpop.xlane.xlu0 %1500
      %v1502 = vmax.f32 %v1329, %v1418
      %1503 = vmax.xlane.f32.xlu0 %v1502
      %v1504 = vpop.xlane.xlu0 %1503
      %v1505 = vmax.f32 %v1331, %v1420
      %1506 = vmax.xlane.f32.xlu0 %v1505
      %v1507 = vpop.xlane.xlu0 %1506
      %v1508 = vmax.f32 %v1334, %v1423
      %1509 = vmax.xlane.f32.xlu0 %v1508
      %v1510 = vpop.xlane.xlu0 %1509
      %v1511 = vmax.f32 %v1336, %v1425
      %1512 = vmax.xlane.f32.xlu0 %v1511
      %v1513 = vpop.xlane.xlu0 %1512
      %v1514 = vmax.f32 %v1339, %v1428
      %1515 = vmax.xlane.f32.xlu0 %v1514
      %v1516 = vpop.xlane.xlu0 %1515
      %v1517 = vmax.f32 %v1341, %v1430
      %1518 = vmax.xlane.f32.xlu0 %v1517
      %v1519 = vpop.xlane.xlu0 %1518
      %v1520 = vmax.f32 %v1344, %v1433
      %1521 = vmax.xlane.f32.xlu0 %v1520
      %v1522 = vpop.xlane.xlu0 %1521
      %v1523 = vmax.f32 %v1346, %v1435
      %1524 = vmax.xlane.f32.xlu0 %v1523
      %v1525 = vpop.xlane.xlu0 %1524
      %v1526 = vmax.f32 %v1349, %v1438
      %1527 = vmax.xlane.f32.xlu0 %v1526
      %v1528 = vpop.xlane.xlu0 %1527
      %v1529 = vmax.f32 %v1351, %v1440
      %1530 = vmax.xlane.f32.xlu0 %v1529
      %v1531 = vpop.xlane.xlu0 %1530
      %v1532 = vmax.f32 %v1354, %v1443
      %1533 = vmax.xlane.f32.xlu0 %v1532
      %v1534 = vpop.xlane.xlu0 %1533
      %v1535 = vmax.f32 %v1356, %v1445
      %1536 = vmax.xlane.f32.xlu0 %v1535
      %v1537 = vpop.xlane.xlu0 %1536
      %v1538 = vmax.f32 %v1359, %v1448
      %1539 = vmax.xlane.f32.xlu0 %v1538
      %v1540 = vpop.xlane.xlu0 %1539
      %v1541 = vmax.f32 %v1361, %v1450
      %1542 = vmax.xlane.f32.xlu0 %v1541
      %v1543 = vpop.xlane.xlu0 %1542
      %v1544 = vmax.f32 %v1364, %v1453
      %1545 = vmax.xlane.f32.xlu0 %v1544
      %v1546 = vpop.xlane.xlu0 %1545
      %v1547 = vmax.f32 %v1366, %v1455
      %1548 = vmax.xlane.f32.xlu0 %v1547
      %v1549 = vpop.xlane.xlu0 %1548
      %v1550 = vmax.f32 %v1369, %v1458
      %1551 = vmax.xlane.f32.xlu0 %v1550
      %v1552 = vpop.xlane.xlu0 %1551
      %v1553 = vmax.f32 %v1371, %v1460
      %1554 = vmax.xlane.f32.xlu0 %v1553
      %v1555 = vpop.xlane.xlu0 %1554
      %v1556 = vmax.f32 %v1374, %v1463
      %1557 = vmax.xlane.f32.xlu0 %v1556
      %v1558 = vpop.xlane.xlu0 %1557
      %v1559 = vmax.f32 %v1376, %v1465
      %1560 = vmax.xlane.f32.xlu0 %v1559
      %v1561 = vpop.xlane.xlu0 %1560
      %v1562 = vmax.f32 %v1379, %v1468
      %1563 = vmax.xlane.f32.xlu0 %v1562
      %v1564 = vpop.xlane.xlu0 %1563
      %v1565 = vmax.f32 %v1381, %v1470
      %1566 = vmax.xlane.f32.xlu0 %v1565
      %v1567 = vpop.xlane.xlu0 %1566
      %v1568 = vsub.f32 %v1304, %v1474
      %v1569 = vsub.f32 %v1393, %v1474
      %v1570 = vsub.f32 %v1306, %v1477
      %v1571 = vsub.f32 %v1395, %v1477
      %v1572 = vsub.f32 %v1309, %v1480
      %v1573 = vsub.f32 %v1398, %v1480
      %v1574 = vsub.f32 %v1311, %v1483
      %v1575 = vsub.f32 %v1400, %v1483
      %v1576 = vsub.f32 %v1314, %v1486
      %v1577 = vsub.f32 %v1403, %v1486
      %v1578 = vsub.f32 %v1316, %v1489
      %v1579 = vsub.f32 %v1405, %v1489
      %v1580 = vsub.f32 %v1319, %v1492
      %v1581 = vsub.f32 %v1408, %v1492
      %v1582 = vsub.f32 %v1321, %v1495
      %v1583 = vsub.f32 %v1410, %v1495
      %v1584 = vsub.f32 %v1324, %v1498
      %v1585 = vsub.f32 %v1413, %v1498
      %v1586 = vsub.f32 %v1326, %v1501
      %v1587 = vsub.f32 %v1415, %v1501
      %v1588 = vsub.f32 %v1329, %v1504
      %v1589 = vsub.f32 %v1418, %v1504
      %v1590 = vsub.f32 %v1331, %v1507
      %v1591 = vsub.f32 %v1420, %v1507
      %v1592 = vsub.f32 %v1334, %v1510
      %v1593 = vsub.f32 %v1423, %v1510
      %v1594 = vsub.f32 %v1336, %v1513
      %v1595 = vsub.f32 %v1425, %v1513
      %v1596 = vsub.f32 %v1339, %v1516
      %v1597 = vsub.f32 %v1428, %v1516
      %v1598 = vsub.f32 %v1341, %v1519
      %v1599 = vsub.f32 %v1430, %v1519
      %v1600 = vsub.f32 %v1344, %v1522
      %v1601 = vsub.f32 %v1433, %v1522
      %v1602 = vsub.f32 %v1346, %v1525
      %v1603 = vsub.f32 %v1435, %v1525
      %v1604 = vsub.f32 %v1349, %v1528
      %v1605 = vsub.f32 %v1438, %v1528
      %v1606 = vsub.f32 %v1351, %v1531
      %v1607 = vsub.f32 %v1440, %v1531
      %v1608 = vsub.f32 %v1354, %v1534
      %v1609 = vsub.f32 %v1443, %v1534
      %v1610 = vsub.f32 %v1356, %v1537
      %v1611 = vsub.f32 %v1445, %v1537
      %v1612 = vsub.f32 %v1359, %v1540
      %v1613 = vsub.f32 %v1448, %v1540
      %v1614 = vsub.f32 %v1361, %v1543
      %v1615 = vsub.f32 %v1450, %v1543
      %v1616 = vsub.f32 %v1364, %v1546
      %v1617 = vsub.f32 %v1453, %v1546
      %v1618 = vsub.f32 %v1366, %v1549
      %v1619 = vsub.f32 %v1455, %v1549
      %v1620 = vsub.f32 %v1369, %v1552
      %v1621 = vsub.f32 %v1458, %v1552
      %v1622 = vsub.f32 %v1371, %v1555
      %v1623 = vsub.f32 %v1460, %v1555
      %v1624 = vsub.f32 %v1374, %v1558
      %v1625 = vsub.f32 %v1463, %v1558
      %v1626 = vsub.f32 %v1376, %v1561
      %v1627 = vsub.f32 %v1465, %v1561
      %v1628 = vsub.f32 %v1379, %v1564
      %v1629 = vsub.f32 %v1468, %v1564
      %v1630 = vsub.f32 %v1381, %v1567
      %v1631 = vsub.f32 %v1470, %v1567
      %v1632 = vmul.f32 %v1568, 1.442695
      %v1633 = vpow.pop %v1632
      %v1634 = vmul.f32 %v1569, 1.442695
      %v1635 = vpow.pop %v1634
      %v1636 = vmul.f32 %v1570, 1.442695
      %v1637 = vpow.pop %v1636
      %v1638 = vmul.f32 %v1571, 1.442695
      %v1639 = vpow.pop %v1638
      %v1640 = vmul.f32 %v1572, 1.442695
      %v1641 = vpow.pop %v1640
      %v1642 = vmul.f32 %v1573, 1.442695
      %v1643 = vpow.pop %v1642
      %v1644 = vmul.f32 %v1574, 1.442695
      %v1645 = vpow.pop %v1644
      %v1646 = vmul.f32 %v1575, 1.442695
      %v1647 = vpow.pop %v1646
      %v1648 = vmul.f32 %v1576, 1.442695
      %v1649 = vpow.pop %v1648
      %v1650 = vmul.f32 %v1577, 1.442695
      %v1651 = vpow.pop %v1650
      %v1652 = vmul.f32 %v1578, 1.442695
      %v1653 = vpow.pop %v1652
      %v1654 = vmul.f32 %v1579, 1.442695
      %v1655 = vpow.pop %v1654
      %v1656 = vmul.f32 %v1580, 1.442695
      %v1657 = vpow.pop %v1656
      %v1658 = vmul.f32 %v1581, 1.442695
      %v1659 = vpow.pop %v1658
      %v1660 = vmul.f32 %v1582, 1.442695
      %v1661 = vpow.pop %v1660
      %v1662 = vmul.f32 %v1583, 1.442695
      %v1663 = vpow.pop %v1662
      %v1664 = vmul.f32 %v1584, 1.442695
      %v1665 = vpow.pop %v1664
      %v1666 = vmul.f32 %v1585, 1.442695
      %v1667 = vpow.pop %v1666
      %v1668 = vmul.f32 %v1586, 1.442695
      %v1669 = vpow.pop %v1668
      %v1670 = vmul.f32 %v1587, 1.442695
      %v1671 = vpow.pop %v1670
      %v1672 = vmul.f32 %v1588, 1.442695
      %v1673 = vpow.pop %v1672
      %v1674 = vmul.f32 %v1589, 1.442695
      %v1675 = vpow.pop %v1674
      %v1676 = vmul.f32 %v1590, 1.442695
      %v1677 = vpow.pop %v1676
      %v1678 = vmul.f32 %v1591, 1.442695
      %v1679 = vpow.pop %v1678
      %v1680 = vmul.f32 %v1592, 1.442695
      %v1681 = vpow.pop %v1680
      %v1682 = vmul.f32 %v1593, 1.442695
      %v1683 = vpow.pop %v1682
      %v1684 = vmul.f32 %v1594, 1.442695
      %v1685 = vpow.pop %v1684
      %v1686 = vmul.f32 %v1595, 1.442695
      %v1687 = vpow.pop %v1686
      %v1688 = vmul.f32 %v1596, 1.442695
      %v1689 = vpow.pop %v1688
      %v1690 = vmul.f32 %v1597, 1.442695
      %v1691 = vpow.pop %v1690
      %v1692 = vmul.f32 %v1598, 1.442695
      %v1693 = vpow.pop %v1692
      %v1694 = vmul.f32 %v1599, 1.442695
      %v1695 = vpow.pop %v1694
      %v1696 = vmul.f32 %v1600, 1.442695
      %v1697 = vpow.pop %v1696
      %v1698 = vmul.f32 %v1601, 1.442695
      %v1699 = vpow.pop %v1698
      %v1700 = vmul.f32 %v1602, 1.442695
      %v1701 = vpow.pop %v1700
      %v1702 = vmul.f32 %v1603, 1.442695
      %v1703 = vpow.pop %v1702
      %v1704 = vmul.f32 %v1604, 1.442695
      %v1705 = vpow.pop %v1704
      %v1706 = vmul.f32 %v1605, 1.442695
      %v1707 = vpow.pop %v1706
      %v1708 = vmul.f32 %v1606, 1.442695
      %v1709 = vpow.pop %v1708
      %v1710 = vmul.f32 %v1607, 1.442695
      %v1711 = vpow.pop %v1710
      %v1712 = vmul.f32 %v1608, 1.442695
      %v1713 = vpow.pop %v1712
      %v1714 = vmul.f32 %v1609, 1.442695
      %v1715 = vpow.pop %v1714
      %v1716 = vmul.f32 %v1610, 1.442695
      %v1717 = vpow.pop %v1716
      %v1718 = vmul.f32 %v1611, 1.442695
      %v1719 = vpow.pop %v1718
      %v1720 = vmul.f32 %v1612, 1.442695
      %v1721 = vpow.pop %v1720
      %v1722 = vmul.f32 %v1613, 1.442695
      %v1723 = vpow.pop %v1722
      %v1724 = vmul.f32 %v1614, 1.442695
      %v1725 = vpow.pop %v1724
      %v1726 = vmul.f32 %v1615, 1.442695
      %v1727 = vpow.pop %v1726
      %v1728 = vmul.f32 %v1616, 1.442695
      %v1729 = vpow.pop %v1728
      %v1730 = vmul.f32 %v1617, 1.442695
      %v1731 = vpow.pop %v1730
      %v1732 = vmul.f32 %v1618, 1.442695
      %v1733 = vpow.pop %v1732
      %v1734 = vmul.f32 %v1619, 1.442695
      %v1735 = vpow.pop %v1734
      %v1736 = vmul.f32 %v1620, 1.442695
      %v1737 = vpow.pop %v1736
      %v1738 = vmul.f32 %v1621, 1.442695
      %v1739 = vpow.pop %v1738
      %v1740 = vmul.f32 %v1622, 1.442695
      %v1741 = vpow.pop %v1740
      %v1742 = vmul.f32 %v1623, 1.442695
      %v1743 = vpow.pop %v1742
      %v1744 = vmul.f32 %v1624, 1.442695
      %v1745 = vpow.pop %v1744
      %v1746 = vmul.f32 %v1625, 1.442695
      %v1747 = vpow.pop %v1746
      %v1748 = vmul.f32 %v1626, 1.442695
      %v1749 = vpow.pop %v1748
      %v1750 = vmul.f32 %v1627, 1.442695
      %v1751 = vpow.pop %v1750
      %v1752 = vmul.f32 %v1628, 1.442695
      %v1753 = vpow.pop %v1752
      %v1754 = vmul.f32 %v1629, 1.442695
      %v1755 = vpow.pop %v1754
      %v1756 = vmul.f32 %v1630, 1.442695
      %v1757 = vpow.pop %v1756
      %v1758 = vmul.f32 %v1631, 1.442695
      %v1759 = vpow.pop %v1758
      %v1760 = vadd.f32 %v1633, %v1635
      %1761 = vadd.xlane.f32.xlu0 %v1760
      %v1762 = vpop.xlane.xlu0 %1761
      %v1763 = vadd.f32 %v1637, %v1639
      %1764 = vadd.xlane.f32.xlu0 %v1763
      %v1765 = vpop.xlane.xlu0 %1764
      %v1766 = vadd.f32 %v1641, %v1643
      %1767 = vadd.xlane.f32.xlu0 %v1766
      %v1768 = vpop.xlane.xlu0 %1767
      %v1769 = vadd.f32 %v1645, %v1647
      %1770 = vadd.xlane.f32.xlu0 %v1769
      %v1771 = vpop.xlane.xlu0 %1770
      %v1772 = vadd.f32 %v1649, %v1651
      %1773 = vadd.xlane.f32.xlu0 %v1772
      %v1774 = vpop.xlane.xlu0 %1773
      %v1775 = vadd.f32 %v1653, %v1655
      %1776 = vadd.xlane.f32.xlu0 %v1775
      %v1777 = vpop.xlane.xlu0 %1776
      %v1778 = vadd.f32 %v1657, %v1659
      %1779 = vadd.xlane.f32.xlu0 %v1778
      %v1780 = vpop.xlane.xlu0 %1779
      %v1781 = vadd.f32 %v1661, %v1663
      %1782 = vadd.xlane.f32.xlu0 %v1781
      %v1783 = vpop.xlane.xlu0 %1782
      %v1784 = vadd.f32 %v1665, %v1667
      %1785 = vadd.xlane.f32.xlu0 %v1784
      %v1786 = vpop.xlane.xlu0 %1785
      %v1787 = vadd.f32 %v1669, %v1671
      %1788 = vadd.xlane.f32.xlu0 %v1787
      %v1789 = vpop.xlane.xlu0 %1788
      %v1790 = vadd.f32 %v1673, %v1675
      %1791 = vadd.xlane.f32.xlu0 %v1790
      %v1792 = vpop.xlane.xlu0 %1791
      %v1793 = vadd.f32 %v1677, %v1679
      %1794 = vadd.xlane.f32.xlu0 %v1793
      %v1795 = vpop.xlane.xlu0 %1794
      %v1796 = vadd.f32 %v1681, %v1683
      %1797 = vadd.xlane.f32.xlu0 %v1796
      %v1798 = vpop.xlane.xlu0 %1797
      %v1799 = vadd.f32 %v1685, %v1687
      %1800 = vadd.xlane.f32.xlu0 %v1799
      %v1801 = vpop.xlane.xlu0 %1800
      %v1802 = vadd.f32 %v1689, %v1691
      %1803 = vadd.xlane.f32.xlu0 %v1802
      %v1804 = vpop.xlane.xlu0 %1803
      %v1805 = vadd.f32 %v1693, %v1695
      %1806 = vadd.xlane.f32.xlu0 %v1805
      %v1807 = vpop.xlane.xlu0 %1806
      %v1808 = vadd.f32 %v1697, %v1699
      %1809 = vadd.xlane.f32.xlu0 %v1808
      %v1810 = vpop.xlane.xlu0 %1809
      %v1811 = vadd.f32 %v1701, %v1703
      %1812 = vadd.xlane.f32.xlu0 %v1811
      %v1813 = vpop.xlane.xlu0 %1812
      %v1814 = vadd.f32 %v1705, %v1707
      %1815 = vadd.xlane.f32.xlu0 %v1814
      %v1816 = vpop.xlane.xlu0 %1815
      %v1817 = vadd.f32 %v1709, %v1711
      %1818 = vadd.xlane.f32.xlu0 %v1817
      %v1819 = vpop.xlane.xlu0 %1818
      %v1820 = vadd.f32 %v1713, %v1715
      %1821 = vadd.xlane.f32.xlu0 %v1820
      %v1822 = vpop.xlane.xlu0 %1821
      %v1823 = vadd.f32 %v1717, %v1719
      %1824 = vadd.xlane.f32.xlu0 %v1823
      %v1825 = vpop.xlane.xlu0 %1824
      %v1826 = vadd.f32 %v1721, %v1723
      %1827 = vadd.xlane.f32.xlu0 %v1826
      %v1828 = vpop.xlane.xlu0 %1827
      %v1829 = vadd.f32 %v1725, %v1727
      %1830 = vadd.xlane.f32.xlu0 %v1829
      %v1831 = vpop.xlane.xlu0 %1830
      %v1832 = vadd.f32 %v1729, %v1731
      %1833 = vadd.xlane.f32.xlu0 %v1832
      %v1834 = vpop.xlane.xlu0 %1833
      %v1835 = vadd.f32 %v1733, %v1735
      %1836 = vadd.xlane.f32.xlu0 %v1835
      %v1837 = vpop.xlane.xlu0 %1836
      %v1838 = vadd.f32 %v1737, %v1739
      %1839 = vadd.xlane.f32.xlu0 %v1838
      %v1840 = vpop.xlane.xlu0 %1839
      %v1841 = vadd.f32 %v1741, %v1743
      %1842 = vadd.xlane.f32.xlu0 %v1841
      %v1843 = vpop.xlane.xlu0 %1842
      %v1844 = vadd.f32 %v1745, %v1747
      %1845 = vadd.xlane.f32.xlu0 %v1844
      %v1846 = vpop.xlane.xlu0 %1845
      %v1847 = vadd.f32 %v1749, %v1751
      %1848 = vadd.xlane.f32.xlu0 %v1847
      %v1849 = vpop.xlane.xlu0 %1848
      %v1850 = vadd.f32 %v1753, %v1755
      %1851 = vadd.xlane.f32.xlu0 %v1850
      %v1852 = vpop.xlane.xlu0 %1851
      %v1853 = vadd.f32 %v1757, %v1759
      %1854 = vadd.xlane.f32.xlu0 %v1853
      %v1855 = vpop.xlane.xlu0 %1854
      %v1856 = vrcp.pop %v1762
      %v1857 = vrcp.pop %v1765
      %v1858 = vrcp.pop %v1768
      %v1859 = vrcp.pop %v1771
      %v1860 = vrcp.pop %v1774
      %v1861 = vrcp.pop %v1777
      %v1862 = vrcp.pop %v1780
      %v1863 = vrcp.pop %v1783
      %v1864 = vrcp.pop %v1786
      %v1865 = vrcp.pop %v1789
      %v1866 = vrcp.pop %v1792
      %v1867 = vrcp.pop %v1795
      %v1868 = vrcp.pop %v1798
      %v1869 = vrcp.pop %v1801
      %v1870 = vrcp.pop %v1804
      %v1871 = vrcp.pop %v1807
      %v1872 = vrcp.pop %v1810
      %v1873 = vrcp.pop %v1813
      %v1874 = vrcp.pop %v1816
      %v1875 = vrcp.pop %v1819
      %v1876 = vrcp.pop %v1822
      %v1877 = vrcp.pop %v1825
      %v1878 = vrcp.pop %v1828
      %v1879 = vrcp.pop %v1831
      %v1880 = vrcp.pop %v1834
      %v1881 = vrcp.pop %v1837
      %v1882 = vrcp.pop %v1840
      %v1883 = vrcp.pop %v1843
      %v1884 = vrcp.pop %v1846
      %v1885 = vrcp.pop %v1849
      %v1886 = vrcp.pop %v1852
      %v1887 = vrcp.pop %v1855
      %v1888 = vmul.f32 %v1633, %v1856
      %v1889 = vmul.f32 %v1635, %v1856
      %v1890 = vmul.f32 %v1637, %v1857
      %v1891 = vmul.f32 %v1639, %v1857
      %v1892 = vmul.f32 %v1641, %v1858
      %v1893 = vmul.f32 %v1643, %v1858
      %v1894 = vmul.f32 %v1645, %v1859
      %v1895 = vmul.f32 %v1647, %v1859
      %v1896 = vmul.f32 %v1649, %v1860
      %v1897 = vmul.f32 %v1651, %v1860
      %v1898 = vmul.f32 %v1653, %v1861
      %v1899 = vmul.f32 %v1655, %v1861
      %v1900 = vmul.f32 %v1657, %v1862
      %v1901 = vmul.f32 %v1659, %v1862
      %v1902 = vmul.f32 %v1661, %v1863
      %v1903 = vmul.f32 %v1663, %v1863
      %v1904 = vmul.f32 %v1665, %v1864
      %v1905 = vmul.f32 %v1667, %v1864
      %v1906 = vmul.f32 %v1669, %v1865
      %v1907 = vmul.f32 %v1671, %v1865
      %v1908 = vmul.f32 %v1673, %v1866
      %v1909 = vmul.f32 %v1675, %v1866
      %v1910 = vmul.f32 %v1677, %v1867
      %v1911 = vmul.f32 %v1679, %v1867
      %v1912 = vmul.f32 %v1681, %v1868
      %v1913 = vmul.f32 %v1683, %v1868
      %v1914 = vmul.f32 %v1685, %v1869
      %v1915 = vmul.f32 %v1687, %v1869
      %v1916 = vmul.f32 %v1689, %v1870
      %v1917 = vmul.f32 %v1691, %v1870
      %v1918 = vmul.f32 %v1693, %v1871
      %v1919 = vmul.f32 %v1695, %v1871
      %v1920 = vmul.f32 %v1697, %v1872
      %v1921 = vmul.f32 %v1699, %v1872
      %v1922 = vmul.f32 %v1701, %v1873
      %v1923 = vmul.f32 %v1703, %v1873
      %v1924 = vmul.f32 %v1705, %v1874
      %v1925 = vmul.f32 %v1707, %v1874
      %v1926 = vmul.f32 %v1709, %v1875
      %v1927 = vmul.f32 %v1711, %v1875
      %v1928 = vmul.f32 %v1713, %v1876
      %v1929 = vmul.f32 %v1715, %v1876
      %v1930 = vmul.f32 %v1717, %v1877
      %v1931 = vmul.f32 %v1719, %v1877
      %v1932 = vmul.f32 %v1721, %v1878
      %v1933 = vmul.f32 %v1723, %v1878
      %v1934 = vmul.f32 %v1725, %v1879
      %v1935 = vmul.f32 %v1727, %v1879
      %v1936 = vmul.f32 %v1729, %v1880
      %v1937 = vmul.f32 %v1731, %v1880
      %v1938 = vmul.f32 %v1733, %v1881
      %v1939 = vmul.f32 %v1735, %v1881
      %v1940 = vmul.f32 %v1737, %v1882
      %v1941 = vmul.f32 %v1739, %v1882
      %v1942 = vmul.f32 %v1741, %v1883
      %v1943 = vmul.f32 %v1743, %v1883
      %v1944 = vmul.f32 %v1745, %v1884
      %v1945 = vmul.f32 %v1747, %v1884
      %v1946 = vmul.f32 %v1749, %v1885
      %v1947 = vmul.f32 %v1751, %v1885
      %v1948 = vmul.f32 %v1753, %v1886
      %v1949 = vmul.f32 %v1755, %v1886
      %v1950 = vmul.f32 %v1757, %v1887
      %v1951 = vmul.f32 %v1759, %v1887
      %v1952 = vpack.c.bf16 %v1890, %v1888
      %v1953 = vpack.c.bf16 %v1891, %v1889
      %v1954 = vpack.c.bf16 %v1894, %v1892
      %v1955 = vpack.c.bf16 %v1895, %v1893
      %v1956 = vpack.c.bf16 %v1898, %v1896
      %v1957 = vpack.c.bf16 %v1899, %v1897
      %v1958 = vpack.c.bf16 %v1902, %v1900
      %v1959 = vpack.c.bf16 %v1903, %v1901
      %v1960 = vpack.c.bf16 %v1906, %v1904
      %v1961 = vpack.c.bf16 %v1907, %v1905
      %v1962 = vpack.c.bf16 %v1910, %v1908
      %v1963 = vpack.c.bf16 %v1911, %v1909
      %v1964 = vpack.c.bf16 %v1914, %v1912
      %v1965 = vpack.c.bf16 %v1915, %v1913
      %v1966 = vpack.c.bf16 %v1918, %v1916
      %v1967 = vpack.c.bf16 %v1919, %v1917
      %v1968 = vpack.c.bf16 %v1922, %v1920
      %v1969 = vpack.c.bf16 %v1923, %v1921
      %v1970 = vpack.c.bf16 %v1926, %v1924
      %v1971 = vpack.c.bf16 %v1927, %v1925
      %v1972 = vpack.c.bf16 %v1930, %v1928
      %v1973 = vpack.c.bf16 %v1931, %v1929
      %v1974 = vpack.c.bf16 %v1934, %v1932
      %v1975 = vpack.c.bf16 %v1935, %v1933
      %v1976 = vpack.c.bf16 %v1938, %v1936
      %v1977 = vpack.c.bf16 %v1939, %v1937
      %v1978 = vpack.c.bf16 %v1942, %v1940
      %v1979 = vpack.c.bf16 %v1943, %v1941
      %v1980 = vpack.c.bf16 %v1946, %v1944
      %v1981 = vpack.c.bf16 %v1947, %v1945
      %v1982 = vpack.c.bf16 %v1950, %v1948
      %v1983 = vpack.c.bf16 %v1951, %v1949
      %1984 = vmatpush.bf16.xpose.msra.mxu0 %v1966
      %1985 = vmatpush.bf16.xpose.msra.mxu0 %v1964
      %1986 = vmatpush.bf16.xpose.msra.mxu0 %v1962
      %1987 = vmatpush.bf16.xpose.msra.mxu0 %v1960
      %1988 = vmatpush.bf16.xpose.msra.mxu0 %v1958
      %1989 = vmatpush.bf16.xpose.msra.mxu0 %v1956
      %1990 = vmatpush.bf16.xpose.msra.mxu0 %v1954
      %1991 = vmatpush.bf16.xpose.msra.mxu0 %v1952
      %1992 = vmatmul.bf16.gmra.mxu0 %v1243
      %v1993 = vpop.f32.mrf.mxu0
      %v1994 = vadd.f32 0.0, %v1993
      %v1995 = vpop.f32.mrf.mxu0
      %v1996 = vadd.f32 0.0, %v1995
      %1997 = vdwg.mxu0
      %1998 = vmatpush.bf16.xpose.msra.mxu0 %v1967
      %1999 = vmatpush.bf16.xpose.msra.mxu0 %v1965
      %2000 = vmatpush.bf16.xpose.msra.mxu0 %v1963
      %2001 = vmatpush.bf16.xpose.msra.mxu0 %v1961
      %2002 = vmatpush.bf16.xpose.msra.mxu0 %v1959
      %2003 = vmatpush.bf16.xpose.msra.mxu0 %v1957
      %2004 = vmatpush.bf16.xpose.msra.mxu0 %v1955
      %2005 = vmatpush.bf16.xpose.msra.mxu0 %v1953
      %2006 = vmatmul.bf16.gmra.mxu0 %v1244
      %v2007 = vpop.f32.mrf.mxu0
      %v2008 = vadd.f32 %v1994, %v2007
      %v2009 = vpop.f32.mrf.mxu0
      %v2010 = vadd.f32 %v1996, %v2009
      %2011 = vdwg.mxu0
      %2012 = vmatpush.bf16.xpose.msra.mxu0 %v1982
      %2013 = vmatpush.bf16.xpose.msra.mxu0 %v1980
      %2014 = vmatpush.bf16.xpose.msra.mxu0 %v1978
      %2015 = vmatpush.bf16.xpose.msra.mxu0 %v1976
      %2016 = vmatpush.bf16.xpose.msra.mxu0 %v1974
      %2017 = vmatpush.bf16.xpose.msra.mxu0 %v1972
      %2018 = vmatpush.bf16.xpose.msra.mxu0 %v1970
      %2019 = vmatpush.bf16.xpose.msra.mxu0 %v1968
      %2020 = vmatmul.bf16.gmra.mxu0 %v1243
      %v2021 = vpop.f32.mrf.mxu0
      %v2022 = vadd.f32 0.0, %v2021
      %v2023 = vpop.f32.mrf.mxu0
      %v2024 = vadd.f32 0.0, %v2023
      %2025 = vdwg.mxu0
      %2026 = vmatpush.bf16.xpose.msra.mxu0 %v1983
      %2027 = vmatpush.bf16.xpose.msra.mxu0 %v1981
      %2028 = vmatpush.bf16.xpose.msra.mxu0 %v1979
      %2029 = vmatpush.bf16.xpose.msra.mxu0 %v1977
      %2030 = vmatpush.bf16.xpose.msra.mxu0 %v1975
      %2031 = vmatpush.bf16.xpose.msra.mxu0 %v1973
      %2032 = vmatpush.bf16.xpose.msra.mxu0 %v1971
      %2033 = vmatpush.bf16.xpose.msra.mxu0 %v1969
      %2034 = vmatmul.bf16.gmra.mxu0 %v1244
      %v2035 = vpop.f32.mrf.mxu0
      %v2036 = vadd.f32 %v2022, %v2035
      %v2037 = vpop.f32.mrf.mxu0
      %v2038 = vadd.f32 %v2024, %v2037
      %2039 = vdwg.mxu0
      %2040 = vxpose.xlu0.b32.start [1/16] %v1038, 128
      %2041 = vxpose.xlu0.b32.cont [2/16] %v1040, 128
      %2042 = vxpose.xlu0.b32.cont [3/16] 0.0, 128
      %2043 = vxpose.xlu0.b32.cont [4/16] 0.0, 128
      %2044 = vxpose.xlu0.b32.cont [5/16] 0.0, 128
      %2045 = vxpose.xlu0.b32.cont [6/16] 0.0, 128
      %2046 = vxpose.xlu0.b32.cont [7/16] 0.0, 128
      %2047 = vxpose.xlu0.b32.cont [8/16] 0.0, 128
      %2048 = vxpose.xlu0.b32.cont [9/16] 0.0, 128
      %2049 = vxpose.xlu0.b32.cont [10/16] 0.0, 128
      %2050 = vxpose.xlu0.b32.cont [11/16] 0.0, 128
      %2051 = vxpose.xlu0.b32.cont [12/16] 0.0, 128
      %2052 = vxpose.xlu0.b32.cont [13/16] 0.0, 128
      %2053 = vxpose.xlu0.b32.cont [14/16] 0.0, 128
      %2054 = vxpose.xlu0.b32.cont [15/16] 0.0, 128
      %2055 = vxpose.xlu0.b32.end [16/16] 0.0, 128
      %v2056 = vpop.trf.xlu0
      %v2057 = vpop.trf.xlu0
      %v2058 = vpop.trf.xlu0
      %v2059 = vpop.trf.xlu0
      %v2060 = vpop.trf.xlu0
      %v2061 = vpop.trf.xlu0
      %v2062 = vpop.trf.xlu0
      %v2063 = vpop.trf.xlu0
      %v2064 = vpop.trf.xlu0
      %v2065 = vpop.trf.xlu0
      %v2066 = vpop.trf.xlu0
      %v2067 = vpop.trf.xlu0
      %v2068 = vpop.trf.xlu0
      %v2069 = vpop.trf.xlu0
      %v2070 = vpop.trf.xlu0
      %v2071 = vpop.trf.xlu0
      %2072 = vxpose.xlu0.b32.start [1/16] %v1107, 128
      %2073 = vxpose.xlu0.b32.cont [2/16] %v1109, 128
      %2074 = vxpose.xlu0.b32.cont [3/16] 0.0, 128
      %2075 = vxpose.xlu0.b32.cont [4/16] 0.0, 128
      %2076 = vxpose.xlu0.b32.cont [5/16] 0.0, 128
      %2077 = vxpose.xlu0.b32.cont [6/16] 0.0, 128
      %2078 = vxpose.xlu0.b32.cont [7/16] 0.0, 128
      %2079 = vxpose.xlu0.b32.cont [8/16] 0.0, 128
      %2080 = vxpose.xlu0.b32.cont [9/16] 0.0, 128
      %2081 = vxpose.xlu0.b32.cont [10/16] 0.0, 128
      %2082 = vxpose.xlu0.b32.cont [11/16] 0.0, 128
      %2083 = vxpose.xlu0.b32.cont [12/16] 0.0, 128
      %2084 = vxpose.xlu0.b32.cont [13/16] 0.0, 128
      %2085 = vxpose.xlu0.b32.cont [14/16] 0.0, 128
      %2086 = vxpose.xlu0.b32.cont [15/16] 0.0, 128
      %2087 = vxpose.xlu0.b32.end [16/16] 0.0, 128
      %v2088 = vpop.trf.xlu0
      %v2089 = vpop.trf.xlu0
      %v2090 = vpop.trf.xlu0
      %v2091 = vpop.trf.xlu0
      %v2092 = vpop.trf.xlu0
      %v2093 = vpop.trf.xlu0
      %v2094 = vpop.trf.xlu0
      %v2095 = vpop.trf.xlu0
      %v2096 = vpop.trf.xlu0
      %v2097 = vpop.trf.xlu0
      %v2098 = vpop.trf.xlu0
      %v2099 = vpop.trf.xlu0
      %v2100 = vpop.trf.xlu0
      %v2101 = vpop.trf.xlu0
      %v2102 = vpop.trf.xlu0
      %v2103 = vpop.trf.xlu0
      %v2104 = vpack.c.bf16 %v2057, %v2056
      %v2105 = vpack.c.bf16 %v2059, %v2058
      %v2106 = vpack.c.bf16 %v2061, %v2060
      %v2107 = vpack.c.bf16 %v2063, %v2062
      %v2108 = vpack.c.bf16 %v2065, %v2064
      %v2109 = vpack.c.bf16 %v2067, %v2066
      %v2110 = vpack.c.bf16 %v2069, %v2068
      %v2111 = vpack.c.bf16 %v2071, %v2070
      %v2112 = vpack.c.bf16 %v2089, %v2088
      %v2113 = vpack.c.bf16 %v2091, %v2090
      %v2114 = vpack.c.bf16 %v2093, %v2092
      %v2115 = vpack.c.bf16 %v2095, %v2094
      %v2116 = vpack.c.bf16 %v2097, %v2096
      %v2117 = vpack.c.bf16 %v2099, %v2098
      %v2118 = vpack.c.bf16 %v2101, %v2100
      %v2119 = vpack.c.bf16 %v2103, %v2102
      %v2120 = vpack.c.bf16 %v1060, %v1058
      %v2121 = vpack.c.bf16 %v1129, %v1127
      %v2122 = vpack.c.bf16 %v1080, %v1078
      %v2123 = vpack.c.bf16 %v1149, %v1147
      %v2125 = vsel %vm1245, %v2104, 0
      %v2128 = vsel %vm1245, %v2105, 0
      %v2131 = vsel %vm1245, %v2106, 0
      %v2134 = vsel %vm1245, %v2107, 0
      %v2137 = vsel %vm1245, %v2108, 0
      %v2140 = vsel %vm1245, %v2109, 0
      %v2143 = vsel %vm1245, %v2110, 0
      %v2146 = vsel %vm1245, %v2111, 0
      %v2149 = vsel %vm1245, %v2112, 0
      %v2152 = vsel %vm1245, %v2113, 0
      %v2155 = vsel %vm1245, %v2114, 0
      %v2158 = vsel %vm1245, %v2115, 0
      %v2161 = vsel %vm1245, %v2116, 0
      %v2164 = vsel %vm1245, %v2117, 0
      %v2167 = vsel %vm1245, %v2118, 0
      %v2170 = vsel %vm1245, %v2119, 0
      %2172 = vmatpush.bf16.msra.mxu0 0
      %2173 = vmatpush.bf16.msra.mxu0 0
      %2174 = vmatpush.bf16.msra.mxu0 0
      %2175 = vmatpush.bf16.msra.mxu0 0
      %2176 = vmatpush.bf16.msra.mxu0 0
      %2177 = vmatpush.bf16.msra.mxu0 0
      %2178 = vmatpush.bf16.msra.mxu0 0
      %2179 = vmatpush.bf16.msra.mxu0 %v2120
      %2180 = vmatmul.bf16.gmra.mxu0 %v2125
      %v2181 = vpop.f32.mrf.mxu0
      %v2182 = vadd.f32 0.0, %v2181
      %v2183 = vpop.f32.mrf.mxu0
      %v2184 = vadd.f32 0.0, %v2183
      %2185 = vmatmul.bf16.gmra.mxu0 %v2128
      %v2186 = vpop.f32.mrf.mxu0
      %v2187 = vadd.f32 0.0, %v2186
      %v2188 = vpop.f32.mrf.mxu0
      %v2189 = vadd.f32 0.0, %v2188
      %2190 = vmatmul.bf16.gmra.mxu0 %v2131
      %v2191 = vpop.f32.mrf.mxu0
      %v2192 = vadd.f32 0.0, %v2191
      %v2193 = vpop.f32.mrf.mxu0
      %v2194 = vadd.f32 0.0, %v2193
      %2195 = vmatmul.bf16.gmra.mxu0 %v2134
      %v2196 = vpop.f32.mrf.mxu0
      %v2197 = vadd.f32 0.0, %v2196
      %v2198 = vpop.f32.mrf.mxu0
      %v2199 = vadd.f32 0.0, %v2198
      %2200 = vmatmul.bf16.gmra.mxu0 %v2137
      %v2201 = vpop.f32.mrf.mxu0
      %v2202 = vadd.f32 0.0, %v2201
      %v2203 = vpop.f32.mrf.mxu0
      %v2204 = vadd.f32 0.0, %v2203
      %2205 = vmatmul.bf16.gmra.mxu0 %v2140
      %v2206 = vpop.f32.mrf.mxu0
      %v2207 = vadd.f32 0.0, %v2206
      %v2208 = vpop.f32.mrf.mxu0
      %v2209 = vadd.f32 0.0, %v2208
      %2210 = vmatmul.bf16.gmra.mxu0 %v2143
      %v2211 = vpop.f32.mrf.mxu0
      %v2212 = vadd.f32 0.0, %v2211
      %v2213 = vpop.f32.mrf.mxu0
      %v2214 = vadd.f32 0.0, %v2213
      %2215 = vmatmul.bf16.gmra.mxu0 %v2146
      %v2216 = vpop.f32.mrf.mxu0
      %v2217 = vadd.f32 0.0, %v2216
      %v2218 = vpop.f32.mrf.mxu0
      %v2219 = vadd.f32 0.0, %v2218
      %2220 = vmatmul.bf16.gmra.mxu0 %v2149
      %v2221 = vpop.f32.mrf.mxu0
      %v2222 = vadd.f32 0.0, %v2221
      %v2223 = vpop.f32.mrf.mxu0
      %v2224 = vadd.f32 0.0, %v2223
      %2225 = vmatmul.bf16.gmra.mxu0 %v2152
      %v2226 = vpop.f32.mrf.mxu0
      %v2227 = vadd.f32 0.0, %v2226
      %v2228 = vpop.f32.mrf.mxu0
      %v2229 = vadd.f32 0.0, %v2228
      %2230 = vmatmul.bf16.gmra.mxu0 %v2155
      %v2231 = vpop.f32.mrf.mxu0
      %v2232 = vadd.f32 0.0, %v2231
      %v2233 = vpop.f32.mrf.mxu0
      %v2234 = vadd.f32 0.0, %v2233
      %2235 = vmatmul.bf16.gmra.mxu0 %v2158
      %v2236 = vpop.f32.mrf.mxu0
      %v2237 = vadd.f32 0.0, %v2236
      %v2238 = vpop.f32.mrf.mxu0
      %v2239 = vadd.f32 0.0, %v2238
      %2240 = vmatmul.bf16.gmra.mxu0 %v2161
      %v2241 = vpop.f32.mrf.mxu0
      %v2242 = vadd.f32 0.0, %v2241
      %v2243 = vpop.f32.mrf.mxu0
      %v2244 = vadd.f32 0.0, %v2243
      %2245 = vmatmul.bf16.gmra.mxu0 %v2164
      %v2246 = vpop.f32.mrf.mxu0
      %v2247 = vadd.f32 0.0, %v2246
      %v2248 = vpop.f32.mrf.mxu0
      %v2249 = vadd.f32 0.0, %v2248
      %2250 = vmatmul.bf16.gmra.mxu0 %v2167
      %v2251 = vpop.f32.mrf.mxu0
      %v2252 = vadd.f32 0.0, %v2251
      %v2253 = vpop.f32.mrf.mxu0
      %v2254 = vadd.f32 0.0, %v2253
      %2255 = vmatmul.bf16.gmra.mxu0 %v2170
      %v2256 = vpop.f32.mrf.mxu0
      %v2257 = vadd.f32 0.0, %v2256
      %v2258 = vpop.f32.mrf.mxu0
      %v2259 = vadd.f32 0.0, %v2258
      %2260 = vdwg.mxu0
      %2261 = vmatpush.bf16.msra.mxu0 0
      %2262 = vmatpush.bf16.msra.mxu0 0
      %2263 = vmatpush.bf16.msra.mxu0 0
      %2264 = vmatpush.bf16.msra.mxu0 0
      %2265 = vmatpush.bf16.msra.mxu0 0
      %2266 = vmatpush.bf16.msra.mxu0 0
      %2267 = vmatpush.bf16.msra.mxu0 0
      %2268 = vmatpush.bf16.msra.mxu0 %v2121
      %2269 = vmatmul.bf16.gmra.mxu0 %v2125
      %v2270 = vpop.f32.mrf.mxu0
      %v2271 = vadd.f32 0.0, %v2270
      %v2272 = vpop.f32.mrf.mxu0
      %v2273 = vadd.f32 0.0, %v2272
      %2274 = vmatmul.bf16.gmra.mxu0 %v2128
      %v2275 = vpop.f32.mrf.mxu0
      %v2276 = vadd.f32 0.0, %v2275
      %v2277 = vpop.f32.mrf.mxu0
      %v2278 = vadd.f32 0.0, %v2277
      %2279 = vmatmul.bf16.gmra.mxu0 %v2131
      %v2280 = vpop.f32.mrf.mxu0
      %v2281 = vadd.f32 0.0, %v2280
      %v2282 = vpop.f32.mrf.mxu0
      %v2283 = vadd.f32 0.0, %v2282
      %2284 = vmatmul.bf16.gmra.mxu0 %v2134
      %v2285 = vpop.f32.mrf.mxu0
      %v2286 = vadd.f32 0.0, %v2285
      %v2287 = vpop.f32.mrf.mxu0
      %v2288 = vadd.f32 0.0, %v2287
      %2289 = vmatmul.bf16.gmra.mxu0 %v2137
      %v2290 = vpop.f32.mrf.mxu0
      %v2291 = vadd.f32 0.0, %v2290
      %v2292 = vpop.f32.mrf.mxu0
      %v2293 = vadd.f32 0.0, %v2292
      %2294 = vmatmul.bf16.gmra.mxu0 %v2140
      %v2295 = vpop.f32.mrf.mxu0
      %v2296 = vadd.f32 0.0, %v2295
      %v2297 = vpop.f32.mrf.mxu0
      %v2298 = vadd.f32 0.0, %v2297
      %2299 = vmatmul.bf16.gmra.mxu0 %v2143
      %v2300 = vpop.f32.mrf.mxu0
      %v2301 = vadd.f32 0.0, %v2300
      %v2302 = vpop.f32.mrf.mxu0
      %v2303 = vadd.f32 0.0, %v2302
      %2304 = vmatmul.bf16.gmra.mxu0 %v2146
      %v2305 = vpop.f32.mrf.mxu0
      %v2306 = vadd.f32 0.0, %v2305
      %v2307 = vpop.f32.mrf.mxu0
      %v2308 = vadd.f32 0.0, %v2307
      %2309 = vmatmul.bf16.gmra.mxu0 %v2149
      %v2310 = vpop.f32.mrf.mxu0
      %v2311 = vadd.f32 0.0, %v2310
      %v2312 = vpop.f32.mrf.mxu0
      %v2313 = vadd.f32 0.0, %v2312
      %2314 = vmatmul.bf16.gmra.mxu0 %v2152
      %v2315 = vpop.f32.mrf.mxu0
      %v2316 = vadd.f32 0.0, %v2315
      %v2317 = vpop.f32.mrf.mxu0
      %v2318 = vadd.f32 0.0, %v2317
      %2319 = vmatmul.bf16.gmra.mxu0 %v2155
      %v2320 = vpop.f32.mrf.mxu0
      %v2321 = vadd.f32 0.0, %v2320
      %v2322 = vpop.f32.mrf.mxu0
      %v2323 = vadd.f32 0.0, %v2322
      %2324 = vmatmul.bf16.gmra.mxu0 %v2158
      %v2325 = vpop.f32.mrf.mxu0
      %v2326 = vadd.f32 0.0, %v2325
      %v2327 = vpop.f32.mrf.mxu0
      %v2328 = vadd.f32 0.0, %v2327
      %2329 = vmatmul.bf16.gmra.mxu0 %v2161
      %v2330 = vpop.f32.mrf.mxu0
      %v2331 = vadd.f32 0.0, %v2330
      %v2332 = vpop.f32.mrf.mxu0
      %v2333 = vadd.f32 0.0, %v2332
      %2334 = vmatmul.bf16.gmra.mxu0 %v2164
      %v2335 = vpop.f32.mrf.mxu0
      %v2336 = vadd.f32 0.0, %v2335
      %v2337 = vpop.f32.mrf.mxu0
      %v2338 = vadd.f32 0.0, %v2337
      %2339 = vmatmul.bf16.gmra.mxu0 %v2167
      %v2340 = vpop.f32.mrf.mxu0
      %v2341 = vadd.f32 0.0, %v2340
      %v2342 = vpop.f32.mrf.mxu0
      %v2343 = vadd.f32 0.0, %v2342
      %2344 = vmatmul.bf16.gmra.mxu0 %v2170
      %v2345 = vpop.f32.mrf.mxu0
      %v2346 = vadd.f32 0.0, %v2345
      %v2347 = vpop.f32.mrf.mxu0
      %v2348 = vadd.f32 0.0, %v2347
      %2349 = vdwg.mxu0
      %v2350 = vmax.f32 %v2182, %v2271
      %2351 = vmax.xlane.f32.xlu0 %v2350
      %v2352 = vpop.xlane.xlu0 %2351
      %v2353 = vmax.f32 %v2184, %v2273
      %2354 = vmax.xlane.f32.xlu0 %v2353
      %v2355 = vpop.xlane.xlu0 %2354
      %v2356 = vmax.f32 %v2187, %v2276
      %2357 = vmax.xlane.f32.xlu0 %v2356
      %v2358 = vpop.xlane.xlu0 %2357
      %v2359 = vmax.f32 %v2189, %v2278
      %2360 = vmax.xlane.f32.xlu0 %v2359
      %v2361 = vpop.xlane.xlu0 %2360
      %v2362 = vmax.f32 %v2192, %v2281
      %2363 = vmax.xlane.f32.xlu0 %v2362
      %v2364 = vpop.xlane.xlu0 %2363
      %v2365 = vmax.f32 %v2194, %v2283
      %2366 = vmax.xlane.f32.xlu0 %v2365
      %v2367 = vpop.xlane.xlu0 %2366
      %v2368 = vmax.f32 %v2197, %v2286
      %2369 = vmax.xlane.f32.xlu0 %v2368
      %v2370 = vpop.xlane.xlu0 %2369
      %v2371 = vmax.f32 %v2199, %v2288
      %2372 = vmax.xlane.f32.xlu0 %v2371
      %v2373 = vpop.xlane.xlu0 %2372
      %v2374 = vmax.f32 %v2202, %v2291
      %2375 = vmax.xlane.f32.xlu0 %v2374
      %v2376 = vpop.xlane.xlu0 %2375
      %v2377 = vmax.f32 %v2204, %v2293
      %2378 = vmax.xlane.f32.xlu0 %v2377
      %v2379 = vpop.xlane.xlu0 %2378
      %v2380 = vmax.f32 %v2207, %v2296
      %2381 = vmax.xlane.f32.xlu0 %v2380
      %v2382 = vpop.xlane.xlu0 %2381
      %v2383 = vmax.f32 %v2209, %v2298
      %2384 = vmax.xlane.f32.xlu0 %v2383
      %v2385 = vpop.xlane.xlu0 %2384
      %v2386 = vmax.f32 %v2212, %v2301
      %2387 = vmax.xlane.f32.xlu0 %v2386
      %v2388 = vpop.xlane.xlu0 %2387
      %v2389 = vmax.f32 %v2214, %v2303
      %2390 = vmax.xlane.f32.xlu0 %v2389
      %v2391 = vpop.xlane.xlu0 %2390
      %v2392 = vmax.f32 %v2217, %v2306
      %2393 = vmax.xlane.f32.xlu0 %v2392
      %v2394 = vpop.xlane.xlu0 %2393
      %v2395 = vmax.f32 %v2219, %v2308
      %2396 = vmax.xlane.f32.xlu0 %v2395
      %v2397 = vpop.xlane.xlu0 %2396
      %v2398 = vmax.f32 %v2222, %v2311
      %2399 = vmax.xlane.f32.xlu0 %v2398
      %v2400 = vpop.xlane.xlu0 %2399
      %v2401 = vmax.f32 %v2224, %v2313
      %2402 = vmax.xlane.f32.xlu0 %v2401
      %v2403 = vpop.xlane.xlu0 %2402
      %v2404 = vmax.f32 %v2227, %v2316
      %2405 = vmax.xlane.f32.xlu0 %v2404
      %v2406 = vpop.xlane.xlu0 %2405
      %v2407 = vmax.f32 %v2229, %v2318
      %2408 = vmax.xlane.f32.xlu0 %v2407
      %v2409 = vpop.xlane.xlu0 %2408
      %v2410 = vmax.f32 %v2232, %v2321
      %2411 = vmax.xlane.f32.xlu0 %v2410
      %v2412 = vpop.xlane.xlu0 %2411
      %v2413 = vmax.f32 %v2234, %v2323
      %2414 = vmax.xlane.f32.xlu0 %v2413
      %v2415 = vpop.xlane.xlu0 %2414
      %v2416 = vmax.f32 %v2237, %v2326
      %2417 = vmax.xlane.f32.xlu0 %v2416
      %v2418 = vpop.xlane.xlu0 %2417
      %v2419 = vmax.f32 %v2239, %v2328
      %2420 = vmax.xlane.f32.xlu0 %v2419
      %v2421 = vpop.xlane.xlu0 %2420
      %v2422 = vmax.f32 %v2242, %v2331
      %2423 = vmax.xlane.f32.xlu0 %v2422
      %v2424 = vpop.xlane.xlu0 %2423
      %v2425 = vmax.f32 %v2244, %v2333
      %2426 = vmax.xlane.f32.xlu0 %v2425
      %v2427 = vpop.xlane.xlu0 %2426
      %v2428 = vmax.f32 %v2247, %v2336
      %2429 = vmax.xlane.f32.xlu0 %v2428
      %v2430 = vpop.xlane.xlu0 %2429
      %v2431 = vmax.f32 %v2249, %v2338
      %2432 = vmax.xlane.f32.xlu0 %v2431
      %v2433 = vpop.xlane.xlu0 %2432
      %v2434 = vmax.f32 %v2252, %v2341
      %2435 = vmax.xlane.f32.xlu0 %v2434
      %v2436 = vpop.xlane.xlu0 %2435
      %v2437 = vmax.f32 %v2254, %v2343
      %2438 = vmax.xlane.f32.xlu0 %v2437
      %v2439 = vpop.xlane.xlu0 %2438
      %v2440 = vmax.f32 %v2257, %v2346
      %2441 = vmax.xlane.f32.xlu0 %v2440
      %v2442 = vpop.xlane.xlu0 %2441
      %v2443 = vmax.f32 %v2259, %v2348
      %2444 = vmax.xlane.f32.xlu0 %v2443
      %v2445 = vpop.xlane.xlu0 %2444
      %v2446 = vsub.f32 %v2182, %v2352
      %v2447 = vsub.f32 %v2271, %v2352
      %v2448 = vsub.f32 %v2184, %v2355
      %v2449 = vsub.f32 %v2273, %v2355
      %v2450 = vsub.f32 %v2187, %v2358
      %v2451 = vsub.f32 %v2276, %v2358
      %v2452 = vsub.f32 %v2189, %v2361
      %v2453 = vsub.f32 %v2278, %v2361
      %v2454 = vsub.f32 %v2192, %v2364
      %v2455 = vsub.f32 %v2281, %v2364
      %v2456 = vsub.f32 %v2194, %v2367
      %v2457 = vsub.f32 %v2283, %v2367
      %v2458 = vsub.f32 %v2197, %v2370
      %v2459 = vsub.f32 %v2286, %v2370
      %v2460 = vsub.f32 %v2199, %v2373
      %v2461 = vsub.f32 %v2288, %v2373
      %v2462 = vsub.f32 %v2202, %v2376
      %v2463 = vsub.f32 %v2291, %v2376
      %v2464 = vsub.f32 %v2204, %v2379
      %v2465 = vsub.f32 %v2293, %v2379
      %v2466 = vsub.f32 %v2207, %v2382
      %v2467 = vsub.f32 %v2296, %v2382
      %v2468 = vsub.f32 %v2209, %v2385
      %v2469 = vsub.f32 %v2298, %v2385
      %v2470 = vsub.f32 %v2212, %v2388
      %v2471 = vsub.f32 %v2301, %v2388
      %v2472 = vsub.f32 %v2214, %v2391
      %v2473 = vsub.f32 %v2303, %v2391
      %v2474 = vsub.f32 %v2217, %v2394
      %v2475 = vsub.f32 %v2306, %v2394
      %v2476 = vsub.f32 %v2219, %v2397
      %v2477 = vsub.f32 %v2308, %v2397
      %v2478 = vsub.f32 %v2222, %v2400
      %v2479 = vsub.f32 %v2311, %v2400
      %v2480 = vsub.f32 %v2224, %v2403
      %v2481 = vsub.f32 %v2313, %v2403
      %v2482 = vsub.f32 %v2227, %v2406
      %v2483 = vsub.f32 %v2316, %v2406
      %v2484 = vsub.f32 %v2229, %v2409
      %v2485 = vsub.f32 %v2318, %v2409
      %v2486 = vsub.f32 %v2232, %v2412
      %v2487 = vsub.f32 %v2321, %v2412
      %v2488 = vsub.f32 %v2234, %v2415
      %v2489 = vsub.f32 %v2323, %v2415
      %v2490 = vsub.f32 %v2237, %v2418
      %v2491 = vsub.f32 %v2326, %v2418
      %v2492 = vsub.f32 %v2239, %v2421
      %v2493 = vsub.f32 %v2328, %v2421
      %v2494 = vsub.f32 %v2242, %v2424
      %v2495 = vsub.f32 %v2331, %v2424
      %v2496 = vsub.f32 %v2244, %v2427
      %v2497 = vsub.f32 %v2333, %v2427
      %v2498 = vsub.f32 %v2247, %v2430
      %v2499 = vsub.f32 %v2336, %v2430
      %v2500 = vsub.f32 %v2249, %v2433
      %v2501 = vsub.f32 %v2338, %v2433
      %v2502 = vsub.f32 %v2252, %v2436
      %v2503 = vsub.f32 %v2341, %v2436
      %v2504 = vsub.f32 %v2254, %v2439
      %v2505 = vsub.f32 %v2343, %v2439
      %v2506 = vsub.f32 %v2257, %v2442
      %v2507 = vsub.f32 %v2346, %v2442
      %v2508 = vsub.f32 %v2259, %v2445
      %v2509 = vsub.f32 %v2348, %v2445
      %v2510 = vmul.f32 %v2446, 1.442695
      %v2511 = vpow.pop %v2510
      %v2512 = vmul.f32 %v2447, 1.442695
      %v2513 = vpow.pop %v2512
      %v2514 = vmul.f32 %v2448, 1.442695
      %v2515 = vpow.pop %v2514
      %v2516 = vmul.f32 %v2449, 1.442695
      %v2517 = vpow.pop %v2516
      %v2518 = vmul.f32 %v2450, 1.442695
      %v2519 = vpow.pop %v2518
      %v2520 = vmul.f32 %v2451, 1.442695
      %v2521 = vpow.pop %v2520
      %v2522 = vmul.f32 %v2452, 1.442695
      %v2523 = vpow.pop %v2522
      %v2524 = vmul.f32 %v2453, 1.442695
      %v2525 = vpow.pop %v2524
      %v2526 = vmul.f32 %v2454, 1.442695
      %v2527 = vpow.pop %v2526
      %v2528 = vmul.f32 %v2455, 1.442695
      %v2529 = vpow.pop %v2528
      %v2530 = vmul.f32 %v2456, 1.442695
      %v2531 = vpow.pop %v2530
      %v2532 = vmul.f32 %v2457, 1.442695
      %v2533 = vpow.pop %v2532
      %v2534 = vmul.f32 %v2458, 1.442695
      %v2535 = vpow.pop %v2534
      %v2536 = vmul.f32 %v2459, 1.442695
      %v2537 = vpow.pop %v2536
      %v2538 = vmul.f32 %v2460, 1.442695
      %v2539 = vpow.pop %v2538
      %v2540 = vmul.f32 %v2461, 1.442695
      %v2541 = vpow.pop %v2540
      %v2542 = vmul.f32 %v2462, 1.442695
      %v2543 = vpow.pop %v2542
      %v2544 = vmul.f32 %v2463, 1.442695
      %v2545 = vpow.pop %v2544
      %v2546 = vmul.f32 %v2464, 1.442695
      %v2547 = vpow.pop %v2546
      %v2548 = vmul.f32 %v2465, 1.442695
      %v2549 = vpow.pop %v2548
      %v2550 = vmul.f32 %v2466, 1.442695
      %v2551 = vpow.pop %v2550
      %v2552 = vmul.f32 %v2467, 1.442695
      %v2553 = vpow.pop %v2552
      %v2554 = vmul.f32 %v2468, 1.442695
      %v2555 = vpow.pop %v2554
      %v2556 = vmul.f32 %v2469, 1.442695
      %v2557 = vpow.pop %v2556
      %v2558 = vmul.f32 %v2470, 1.442695
      %v2559 = vpow.pop %v2558
      %v2560 = vmul.f32 %v2471, 1.442695
      %v2561 = vpow.pop %v2560
      %v2562 = vmul.f32 %v2472, 1.442695
      %v2563 = vpow.pop %v2562
      %v2564 = vmul.f32 %v2473, 1.442695
      %v2565 = vpow.pop %v2564
      %v2566 = vmul.f32 %v2474, 1.442695
      %v2567 = vpow.pop %v2566
      %v2568 = vmul.f32 %v2475, 1.442695
      %v2569 = vpow.pop %v2568
      %v2570 = vmul.f32 %v2476, 1.442695
      %v2571 = vpow.pop %v2570
      %v2572 = vmul.f32 %v2477, 1.442695
      %v2573 = vpow.pop %v2572
      %v2574 = vmul.f32 %v2478, 1.442695
      %v2575 = vpow.pop %v2574
      %v2576 = vmul.f32 %v2479, 1.442695
      %v2577 = vpow.pop %v2576
      %v2578 = vmul.f32 %v2480, 1.442695
      %v2579 = vpow.pop %v2578
      %v2580 = vmul.f32 %v2481, 1.442695
      %v2581 = vpow.pop %v2580
      %v2582 = vmul.f32 %v2482, 1.442695
      %v2583 = vpow.pop %v2582
      %v2584 = vmul.f32 %v2483, 1.442695
      %v2585 = vpow.pop %v2584
      %v2586 = vmul.f32 %v2484, 1.442695
      %v2587 = vpow.pop %v2586
      %v2588 = vmul.f32 %v2485, 1.442695
      %v2589 = vpow.pop %v2588
      %v2590 = vmul.f32 %v2486, 1.442695
      %v2591 = vpow.pop %v2590
      %v2592 = vmul.f32 %v2487, 1.442695
      %v2593 = vpow.pop %v2592
      %v2594 = vmul.f32 %v2488, 1.442695
      %v2595 = vpow.pop %v2594
      %v2596 = vmul.f32 %v2489, 1.442695
      %v2597 = vpow.pop %v2596
      %v2598 = vmul.f32 %v2490, 1.442695
      %v2599 = vpow.pop %v2598
      %v2600 = vmul.f32 %v2491, 1.442695
      %v2601 = vpow.pop %v2600
      %v2602 = vmul.f32 %v2492, 1.442695
      %v2603 = vpow.pop %v2602
      %v2604 = vmul.f32 %v2493, 1.442695
      %v2605 = vpow.pop %v2604
      %v2606 = vmul.f32 %v2494, 1.442695
      %v2607 = vpow.pop %v2606
      %v2608 = vmul.f32 %v2495, 1.442695
      %v2609 = vpow.pop %v2608
      %v2610 = vmul.f32 %v2496, 1.442695
      %v2611 = vpow.pop %v2610
      %v2612 = vmul.f32 %v2497, 1.442695
      %v2613 = vpow.pop %v2612
      %v2614 = vmul.f32 %v2498, 1.442695
      %v2615 = vpow.pop %v2614
      %v2616 = vmul.f32 %v2499, 1.442695
      %v2617 = vpow.pop %v2616
      %v2618 = vmul.f32 %v2500, 1.442695
      %v2619 = vpow.pop %v2618
      %v2620 = vmul.f32 %v2501, 1.442695
      %v2621 = vpow.pop %v2620
      %v2622 = vmul.f32 %v2502, 1.442695
      %v2623 = vpow.pop %v2622
      %v2624 = vmul.f32 %v2503, 1.442695
      %v2625 = vpow.pop %v2624
      %v2626 = vmul.f32 %v2504, 1.442695
      %v2627 = vpow.pop %v2626
      %v2628 = vmul.f32 %v2505, 1.442695
      %v2629 = vpow.pop %v2628
      %v2630 = vmul.f32 %v2506, 1.442695
      %v2631 = vpow.pop %v2630
      %v2632 = vmul.f32 %v2507, 1.442695
      %v2633 = vpow.pop %v2632
      %v2634 = vmul.f32 %v2508, 1.442695
      %v2635 = vpow.pop %v2634
      %v2636 = vmul.f32 %v2509, 1.442695
      %v2637 = vpow.pop %v2636
      %v2638 = vadd.f32 %v2511, %v2513
      %2639 = vadd.xlane.f32.xlu0 %v2638
      %v2640 = vpop.xlane.xlu0 %2639
      %v2641 = vadd.f32 %v2515, %v2517
      %2642 = vadd.xlane.f32.xlu0 %v2641
      %v2643 = vpop.xlane.xlu0 %2642
      %v2644 = vadd.f32 %v2519, %v2521
      %2645 = vadd.xlane.f32.xlu0 %v2644
      %v2646 = vpop.xlane.xlu0 %2645
      %v2647 = vadd.f32 %v2523, %v2525
      %2648 = vadd.xlane.f32.xlu0 %v2647
      %v2649 = vpop.xlane.xlu0 %2648
      %v2650 = vadd.f32 %v2527, %v2529
      %2651 = vadd.xlane.f32.xlu0 %v2650
      %v2652 = vpop.xlane.xlu0 %2651
      %v2653 = vadd.f32 %v2531, %v2533
      %2654 = vadd.xlane.f32.xlu0 %v2653
      %v2655 = vpop.xlane.xlu0 %2654
      %v2656 = vadd.f32 %v2535, %v2537
      %2657 = vadd.xlane.f32.xlu0 %v2656
      %v2658 = vpop.xlane.xlu0 %2657
      %v2659 = vadd.f32 %v2539, %v2541
      %2660 = vadd.xlane.f32.xlu0 %v2659
      %v2661 = vpop.xlane.xlu0 %2660
      %v2662 = vadd.f32 %v2543, %v2545
      %2663 = vadd.xlane.f32.xlu0 %v2662
      %v2664 = vpop.xlane.xlu0 %2663
      %v2665 = vadd.f32 %v2547, %v2549
      %2666 = vadd.xlane.f32.xlu0 %v2665
      %v2667 = vpop.xlane.xlu0 %2666
      %v2668 = vadd.f32 %v2551, %v2553
      %2669 = vadd.xlane.f32.xlu0 %v2668
      %v2670 = vpop.xlane.xlu0 %2669
      %v2671 = vadd.f32 %v2555, %v2557
      %2672 = vadd.xlane.f32.xlu0 %v2671
      %v2673 = vpop.xlane.xlu0 %2672
      %v2674 = vadd.f32 %v2559, %v2561
      %2675 = vadd.xlane.f32.xlu0 %v2674
      %v2676 = vpop.xlane.xlu0 %2675
      %v2677 = vadd.f32 %v2563, %v2565
      %2678 = vadd.xlane.f32.xlu0 %v2677
      %v2679 = vpop.xlane.xlu0 %2678
      %v2680 = vadd.f32 %v2567, %v2569
      %2681 = vadd.xlane.f32.xlu0 %v2680
      %v2682 = vpop.xlane.xlu0 %2681
      %v2683 = vadd.f32 %v2571, %v2573
      %2684 = vadd.xlane.f32.xlu0 %v2683
      %v2685 = vpop.xlane.xlu0 %2684
      %v2686 = vadd.f32 %v2575, %v2577
      %2687 = vadd.xlane.f32.xlu0 %v2686
      %v2688 = vpop.xlane.xlu0 %2687
      %v2689 = vadd.f32 %v2579, %v2581
      %2690 = vadd.xlane.f32.xlu0 %v2689
      %v2691 = vpop.xlane.xlu0 %2690
      %v2692 = vadd.f32 %v2583, %v2585
      %2693 = vadd.xlane.f32.xlu0 %v2692
      %v2694 = vpop.xlane.xlu0 %2693
      %v2695 = vadd.f32 %v2587, %v2589
      %2696 = vadd.xlane.f32.xlu0 %v2695
      %v2697 = vpop.xlane.xlu0 %2696
      %v2698 = vadd.f32 %v2591, %v2593
      %2699 = vadd.xlane.f32.xlu0 %v2698
      %v2700 = vpop.xlane.xlu0 %2699
      %v2701 = vadd.f32 %v2595, %v2597
      %2702 = vadd.xlane.f32.xlu0 %v2701
      %v2703 = vpop.xlane.xlu0 %2702
      %v2704 = vadd.f32 %v2599, %v2601
      %2705 = vadd.xlane.f32.xlu0 %v2704
      %v2706 = vpop.xlane.xlu0 %2705
      %v2707 = vadd.f32 %v2603, %v2605
      %2708 = vadd.xlane.f32.xlu0 %v2707
      %v2709 = vpop.xlane.xlu0 %2708
      %v2710 = vadd.f32 %v2607, %v2609
      %2711 = vadd.xlane.f32.xlu0 %v2710
      %v2712 = vpop.xlane.xlu0 %2711
      %v2713 = vadd.f32 %v2611, %v2613
      %2714 = vadd.xlane.f32.xlu0 %v2713
      %v2715 = vpop.xlane.xlu0 %2714
      %v2716 = vadd.f32 %v2615, %v2617
      %2717 = vadd.xlane.f32.xlu0 %v2716
      %v2718 = vpop.xlane.xlu0 %2717
      %v2719 = vadd.f32 %v2619, %v2621
      %2720 = vadd.xlane.f32.xlu0 %v2719
      %v2721 = vpop.xlane.xlu0 %2720
      %v2722 = vadd.f32 %v2623, %v2625
      %2723 = vadd.xlane.f32.xlu0 %v2722
      %v2724 = vpop.xlane.xlu0 %2723
      %v2725 = vadd.f32 %v2627, %v2629
      %2726 = vadd.xlane.f32.xlu0 %v2725
      %v2727 = vpop.xlane.xlu0 %2726
      %v2728 = vadd.f32 %v2631, %v2633
      %2729 = vadd.xlane.f32.xlu0 %v2728
      %v2730 = vpop.xlane.xlu0 %2729
      %v2731 = vadd.f32 %v2635, %v2637
      %2732 = vadd.xlane.f32.xlu0 %v2731
      %v2733 = vpop.xlane.xlu0 %2732
      %v2734 = vrcp.pop %v2640
      %v2735 = vrcp.pop %v2643
      %v2736 = vrcp.pop %v2646
      %v2737 = vrcp.pop %v2649
      %v2738 = vrcp.pop %v2652
      %v2739 = vrcp.pop %v2655
      %v2740 = vrcp.pop %v2658
      %v2741 = vrcp.pop %v2661
      %v2742 = vrcp.pop %v2664
      %v2743 = vrcp.pop %v2667
      %v2744 = vrcp.pop %v2670
      %v2745 = vrcp.pop %v2673
      %v2746 = vrcp.pop %v2676
      %v2747 = vrcp.pop %v2679
      %v2748 = vrcp.pop %v2682
      %v2749 = vrcp.pop %v2685
      %v2750 = vrcp.pop %v2688
      %v2751 = vrcp.pop %v2691
      %v2752 = vrcp.pop %v2694
      %v2753 = vrcp.pop %v2697
      %v2754 = vrcp.pop %v2700
      %v2755 = vrcp.pop %v2703
      %v2756 = vrcp.pop %v2706
      %v2757 = vrcp.pop %v2709
      %v2758 = vrcp.pop %v2712
      %v2759 = vrcp.pop %v2715
      %v2760 = vrcp.pop %v2718
      %v2761 = vrcp.pop %v2721
      %v2762 = vrcp.pop %v2724
      %v2763 = vrcp.pop %v2727
      %v2764 = vrcp.pop %v2730
      %v2765 = vrcp.pop %v2733
      %v2766 = vmul.f32 %v2511, %v2734
      %v2767 = vmul.f32 %v2513, %v2734
      %v2768 = vmul.f32 %v2515, %v2735
      %v2769 = vmul.f32 %v2517, %v2735
      %v2770 = vmul.f32 %v2519, %v2736
      %v2771 = vmul.f32 %v2521, %v2736
      %v2772 = vmul.f32 %v2523, %v2737
      %v2773 = vmul.f32 %v2525, %v2737
      %v2774 = vmul.f32 %v2527, %v2738
      %v2775 = vmul.f32 %v2529, %v2738
      %v2776 = vmul.f32 %v2531, %v2739
      %v2777 = vmul.f32 %v2533, %v2739
      %v2778 = vmul.f32 %v2535, %v2740
      %v2779 = vmul.f32 %v2537, %v2740
      %v2780 = vmul.f32 %v2539, %v2741
      %v2781 = vmul.f32 %v2541, %v2741
      %v2782 = vmul.f32 %v2543, %v2742
      %v2783 = vmul.f32 %v2545, %v2742
      %v2784 = vmul.f32 %v2547, %v2743
      %v2785 = vmul.f32 %v2549, %v2743
      %v2786 = vmul.f32 %v2551, %v2744
      %v2787 = vmul.f32 %v2553, %v2744
      %v2788 = vmul.f32 %v2555, %v2745
      %v2789 = vmul.f32 %v2557, %v2745
      %v2790 = vmul.f32 %v2559, %v2746
      %v2791 = vmul.f32 %v2561, %v2746
      %v2792 = vmul.f32 %v2563, %v2747
      %v2793 = vmul.f32 %v2565, %v2747
      %v2794 = vmul.f32 %v2567, %v2748
      %v2795 = vmul.f32 %v2569, %v2748
      %v2796 = vmul.f32 %v2571, %v2749
      %v2797 = vmul.f32 %v2573, %v2749
      %v2798 = vmul.f32 %v2575, %v2750
      %v2799 = vmul.f32 %v2577, %v2750
      %v2800 = vmul.f32 %v2579, %v2751
      %v2801 = vmul.f32 %v2581, %v2751
      %v2802 = vmul.f32 %v2583, %v2752
      %v2803 = vmul.f32 %v2585, %v2752
      %v2804 = vmul.f32 %v2587, %v2753
      %v2805 = vmul.f32 %v2589, %v2753
      %v2806 = vmul.f32 %v2591, %v2754
      %v2807 = vmul.f32 %v2593, %v2754
      %v2808 = vmul.f32 %v2595, %v2755
      %v2809 = vmul.f32 %v2597, %v2755
      %v2810 = vmul.f32 %v2599, %v2756
      %v2811 = vmul.f32 %v2601, %v2756
      %v2812 = vmul.f32 %v2603, %v2757
      %v2813 = vmul.f32 %v2605, %v2757
      %v2814 = vmul.f32 %v2607, %v2758
      %v2815 = vmul.f32 %v2609, %v2758
      %v2816 = vmul.f32 %v2611, %v2759
      %v2817 = vmul.f32 %v2613, %v2759
      %v2818 = vmul.f32 %v2615, %v2760
      %v2819 = vmul.f32 %v2617, %v2760
      %v2820 = vmul.f32 %v2619, %v2761
      %v2821 = vmul.f32 %v2621, %v2761
      %v2822 = vmul.f32 %v2623, %v2762
      %v2823 = vmul.f32 %v2625, %v2762
      %v2824 = vmul.f32 %v2627, %v2763
      %v2825 = vmul.f32 %v2629, %v2763
      %v2826 = vmul.f32 %v2631, %v2764
      %v2827 = vmul.f32 %v2633, %v2764
      %v2828 = vmul.f32 %v2635, %v2765
      %v2829 = vmul.f32 %v2637, %v2765
      %v2830 = vpack.c.bf16 %v2768, %v2766
      %v2831 = vpack.c.bf16 %v2769, %v2767
      %v2832 = vpack.c.bf16 %v2772, %v2770
      %v2833 = vpack.c.bf16 %v2773, %v2771
      %v2834 = vpack.c.bf16 %v2776, %v2774
      %v2835 = vpack.c.bf16 %v2777, %v2775
      %v2836 = vpack.c.bf16 %v2780, %v2778
      %v2837 = vpack.c.bf16 %v2781, %v2779
      %v2838 = vpack.c.bf16 %v2784, %v2782
      %v2839 = vpack.c.bf16 %v2785, %v2783
      %v2840 = vpack.c.bf16 %v2788, %v2786
      %v2841 = vpack.c.bf16 %v2789, %v2787
      %v2842 = vpack.c.bf16 %v2792, %v2790
      %v2843 = vpack.c.bf16 %v2793, %v2791
      %v2844 = vpack.c.bf16 %v2796, %v2794
      %v2845 = vpack.c.bf16 %v2797, %v2795
      %v2846 = vpack.c.bf16 %v2800, %v2798
      %v2847 = vpack.c.bf16 %v2801, %v2799
      %v2848 = vpack.c.bf16 %v2804, %v2802
      %v2849 = vpack.c.bf16 %v2805, %v2803
      %v2850 = vpack.c.bf16 %v2808, %v2806
      %v2851 = vpack.c.bf16 %v2809, %v2807
      %v2852 = vpack.c.bf16 %v2812, %v2810
      %v2853 = vpack.c.bf16 %v2813, %v2811
      %v2854 = vpack.c.bf16 %v2816, %v2814
      %v2855 = vpack.c.bf16 %v2817, %v2815
      %v2856 = vpack.c.bf16 %v2820, %v2818
      %v2857 = vpack.c.bf16 %v2821, %v2819
      %v2858 = vpack.c.bf16 %v2824, %v2822
      %v2859 = vpack.c.bf16 %v2825, %v2823
      %v2860 = vpack.c.bf16 %v2828, %v2826
      %v2861 = vpack.c.bf16 %v2829, %v2827
      %2862 = vmatpush.bf16.xpose.msra.mxu0 %v2844
      %2863 = vmatpush.bf16.xpose.msra.mxu0 %v2842
      %2864 = vmatpush.bf16.xpose.msra.mxu0 %v2840
      %2865 = vmatpush.bf16.xpose.msra.mxu0 %v2838
      %2866 = vmatpush.bf16.xpose.msra.mxu0 %v2836
      %2867 = vmatpush.bf16.xpose.msra.mxu0 %v2834
      %2868 = vmatpush.bf16.xpose.msra.mxu0 %v2832
      %2869 = vmatpush.bf16.xpose.msra.mxu0 %v2830
      %2870 = vmatmul.bf16.gmra.mxu0 %v2122
      %v2871 = vpop.f32.mrf.mxu0
      %v2872 = vadd.f32 0.0, %v2871
      %v2873 = vpop.f32.mrf.mxu0
      %v2874 = vadd.f32 0.0, %v2873
      %2875 = vdwg.mxu0
      %2876 = vmatpush.bf16.xpose.msra.mxu0 %v2845
      %2877 = vmatpush.bf16.xpose.msra.mxu0 %v2843
      %2878 = vmatpush.bf16.xpose.msra.mxu0 %v2841
      %2879 = vmatpush.bf16.xpose.msra.mxu0 %v2839
      %2880 = vmatpush.bf16.xpose.msra.mxu0 %v2837
      %2881 = vmatpush.bf16.xpose.msra.mxu0 %v2835
      %2882 = vmatpush.bf16.xpose.msra.mxu0 %v2833
      %2883 = vmatpush.bf16.xpose.msra.mxu0 %v2831
      %2884 = vmatmul.bf16.gmra.mxu0 %v2123
      %v2885 = vpop.f32.mrf.mxu0
      %v2886 = vadd.f32 %v2872, %v2885
      %v2887 = vpop.f32.mrf.mxu0
      %v2888 = vadd.f32 %v2874, %v2887
      %2889 = vdwg.mxu0
      %2890 = vmatpush.bf16.xpose.msra.mxu0 %v2860
      %2891 = vmatpush.bf16.xpose.msra.mxu0 %v2858
      %2892 = vmatpush.bf16.xpose.msra.mxu0 %v2856
      %2893 = vmatpush.bf16.xpose.msra.mxu0 %v2854
      %2894 = vmatpush.bf16.xpose.msra.mxu0 %v2852
      %2895 = vmatpush.bf16.xpose.msra.mxu0 %v2850
      %2896 = vmatpush.bf16.xpose.msra.mxu0 %v2848
      %2897 = vmatpush.bf16.xpose.msra.mxu0 %v2846
      %2898 = vmatmul.bf16.gmra.mxu0 %v2122
      %v2899 = vpop.f32.mrf.mxu0
      %v2900 = vadd.f32 0.0, %v2899
      %v2901 = vpop.f32.mrf.mxu0
      %v2902 = vadd.f32 0.0, %v2901
      %2903 = vdwg.mxu0
      %2904 = vmatpush.bf16.xpose.msra.mxu0 %v2861
      %2905 = vmatpush.bf16.xpose.msra.mxu0 %v2859
      %2906 = vmatpush.bf16.xpose.msra.mxu0 %v2857
      %2907 = vmatpush.bf16.xpose.msra.mxu0 %v2855
      %2908 = vmatpush.bf16.xpose.msra.mxu0 %v2853
      %2909 = vmatpush.bf16.xpose.msra.mxu0 %v2851
      %2910 = vmatpush.bf16.xpose.msra.mxu0 %v2849
      %2911 = vmatpush.bf16.xpose.msra.mxu0 %v2847
      %2912 = vmatmul.bf16.gmra.mxu0 %v2123
      %v2913 = vpop.f32.mrf.mxu0
      %v2914 = vadd.f32 %v2900, %v2913
      %v2915 = vpop.f32.mrf.mxu0
      %v2916 = vadd.f32 %v2902, %v2915
      %2917 = vdwg.mxu0
      %2918 = vxpose.xlu0.b32.start [1/16] %v1043, 128
      %2919 = vxpose.xlu0.b32.cont [2/16] %v1045, 128
      %2920 = vxpose.xlu0.b32.cont [3/16] 0.0, 128
      %2921 = vxpose.xlu0.b32.cont [4/16] 0.0, 128
      %2922 = vxpose.xlu0.b32.cont [5/16] 0.0, 128
      %2923 = vxpose.xlu0.b32.cont [6/16] 0.0, 128
      %2924 = vxpose.xlu0.b32.cont [7/16] 0.0, 128
      %2925 = vxpose.xlu0.b32.cont [8/16] 0.0, 128
      %2926 = vxpose.xlu0.b32.cont [9/16] 0.0, 128
      %2927 = vxpose.xlu0.b32.cont [10/16] 0.0, 128
      %2928 = vxpose.xlu0.b32.cont [11/16] 0.0, 128
      %2929 = vxpose.xlu0.b32.cont [12/16] 0.0, 128
      %2930 = vxpose.xlu0.b32.cont [13/16] 0.0, 128
      %2931 = vxpose.xlu0.b32.cont [14/16] 0.0, 128
      %2932 = vxpose.xlu0.b32.cont [15/16] 0.0, 128
      %2933 = vxpose.xlu0.b32.end [16/16] 0.0, 128
      %v2934 = vpop.trf.xlu0
      %v2935 = vpop.trf.xlu0
      %v2936 = vpop.trf.xlu0
      %v2937 = vpop.trf.xlu0
      %v2938 = vpop.trf.xlu0
      %v2939 = vpop.trf.xlu0
      %v2940 = vpop.trf.xlu0
      %v2941 = vpop.trf.xlu0
      %v2942 = vpop.trf.xlu0
      %v2943 = vpop.trf.xlu0
      %v2944 = vpop.trf.xlu0
      %v2945 = vpop.trf.xlu0
      %v2946 = vpop.trf.xlu0
      %v2947 = vpop.trf.xlu0
      %v2948 = vpop.trf.xlu0
      %v2949 = vpop.trf.xlu0
      %2950 = vxpose.xlu0.b32.start [1/16] %v1112, 128
      %2951 = vxpose.xlu0.b32.cont [2/16] %v1114, 128
      %2952 = vxpose.xlu0.b32.cont [3/16] 0.0, 128
      %2953 = vxpose.xlu0.b32.cont [4/16] 0.0, 128
      %2954 = vxpose.xlu0.b32.cont [5/16] 0.0, 128
      %2955 = vxpose.xlu0.b32.cont [6/16] 0.0, 128
      %2956 = vxpose.xlu0.b32.cont [7/16] 0.0, 128
      %2957 = vxpose.xlu0.b32.cont [8/16] 0.0, 128
      %2958 = vxpose.xlu0.b32.cont [9/16] 0.0, 128
      %2959 = vxpose.xlu0.b32.cont [10/16] 0.0, 128
      %2960 = vxpose.xlu0.b32.cont [11/16] 0.0, 128
      %2961 = vxpose.xlu0.b32.cont [12/16] 0.0, 128
      %2962 = vxpose.xlu0.b32.cont [13/16] 0.0, 128
      %2963 = vxpose.xlu0.b32.cont [14/16] 0.0, 128
      %2964 = vxpose.xlu0.b32.cont [15/16] 0.0, 128
      %2965 = vxpose.xlu0.b32.end [16/16] 0.0, 128
      %v2966 = vpop.trf.xlu0
      %v2967 = vpop.trf.xlu0
      %v2968 = vpop.trf.xlu0
      %v2969 = vpop.trf.xlu0
      %v2970 = vpop.trf.xlu0
      %v2971 = vpop.trf.xlu0
      %v2972 = vpop.trf.xlu0
      %v2973 = vpop.trf.xlu0
      %v2974 = vpop.trf.xlu0
      %v2975 = vpop.trf.xlu0
      %v2976 = vpop.trf.xlu0
      %v2977 = vpop.trf.xlu0
      %v2978 = vpop.trf.xlu0
      %v2979 = vpop.trf.xlu0
      %v2980 = vpop.trf.xlu0
      %v2981 = vpop.trf.xlu0
      %v2982 = vpack.c.bf16 %v2935, %v2934
      %v2983 = vpack.c.bf16 %v2937, %v2936
      %v2984 = vpack.c.bf16 %v2939, %v2938
      %v2985 = vpack.c.bf16 %v2941, %v2940
      %v2986 = vpack.c.bf16 %v2943, %v2942
      %v2987 = vpack.c.bf16 %v2945, %v2944
      %v2988 = vpack.c.bf16 %v2947, %v2946
      %v2989 = vpack.c.bf16 %v2949, %v2948
      %v2990 = vpack.c.bf16 %v2967, %v2966
      %v2991 = vpack.c.bf16 %v2969, %v2968
      %v2992 = vpack.c.bf16 %v2971, %v2970
      %v2993 = vpack.c.bf16 %v2973, %v2972
      %v2994 = vpack.c.bf16 %v2975, %v2974
      %v2995 = vpack.c.bf16 %v2977, %v2976
      %v2996 = vpack.c.bf16 %v2979, %v2978
      %v2997 = vpack.c.bf16 %v2981, %v2980
      %v2998 = vpack.c.bf16 %v1065, %v1063
      %v2999 = vpack.c.bf16 %v1134, %v1132
      %v3000 = vpack.c.bf16 %v1085, %v1083
      %v3001 = vpack.c.bf16 %v1154, %v1152
      %v3003 = vsel %vm1245, %v2982, 0
      %v3006 = vsel %vm1245, %v2983, 0
      %v3009 = vsel %vm1245, %v2984, 0
      %v3012 = vsel %vm1245, %v2985, 0
      %v3015 = vsel %vm1245, %v2986, 0
      %v3018 = vsel %vm1245, %v2987, 0
      %v3021 = vsel %vm1245, %v2988, 0
      %v3024 = vsel %vm1245, %v2989, 0
      %v3027 = vsel %vm1245, %v2990, 0
      %v3030 = vsel %vm1245, %v2991, 0
      %v3033 = vsel %vm1245, %v2992, 0
      %v3036 = vsel %vm1245, %v2993, 0
      %v3039 = vsel %vm1245, %v2994, 0
      %v3042 = vsel %vm1245, %v2995, 0
      %v3045 = vsel %vm1245, %v2996, 0
      %v3048 = vsel %vm1245, %v2997, 0
      %3050 = vmatpush.bf16.msra.mxu0 0
      %3051 = vmatpush.bf16.msra.mxu0 0
      %3052 = vmatpush.bf16.msra.mxu0 0
      %3053 = vmatpush.bf16.msra.mxu0 0
      %3054 = vmatpush.bf16.msra.mxu0 0
      %3055 = vmatpush.bf16.msra.mxu0 0
      %3056 = vmatpush.bf16.msra.mxu0 0
      %3057 = vmatpush.bf16.msra.mxu0 %v2998
      %3058 = vmatmul.bf16.gmra.mxu0 %v3003
      %v3059 = vpop.f32.mrf.mxu0
      %v3060 = vadd.f32 0.0, %v3059
      %v3061 = vpop.f32.mrf.mxu0
      %v3062 = vadd.f32 0.0, %v3061
      %3063 = vmatmul.bf16.gmra.mxu0 %v3006
      %v3064 = vpop.f32.mrf.mxu0
      %v3065 = vadd.f32 0.0, %v3064
      %v3066 = vpop.f32.mrf.mxu0
      %v3067 = vadd.f32 0.0, %v3066
      %3068 = vmatmul.bf16.gmra.mxu0 %v3009
      %v3069 = vpop.f32.mrf.mxu0
      %v3070 = vadd.f32 0.0, %v3069
      %v3071 = vpop.f32.mrf.mxu0
      %v3072 = vadd.f32 0.0, %v3071
      %3073 = vmatmul.bf16.gmra.mxu0 %v3012
      %v3074 = vpop.f32.mrf.mxu0
      %v3075 = vadd.f32 0.0, %v3074
      %v3076 = vpop.f32.mrf.mxu0
      %v3077 = vadd.f32 0.0, %v3076
      %3078 = vmatmul.bf16.gmra.mxu0 %v3015
      %v3079 = vpop.f32.mrf.mxu0
      %v3080 = vadd.f32 0.0, %v3079
      %v3081 = vpop.f32.mrf.mxu0
      %v3082 = vadd.f32 0.0, %v3081
      %3083 = vmatmul.bf16.gmra.mxu0 %v3018
      %v3084 = vpop.f32.mrf.mxu0
      %v3085 = vadd.f32 0.0, %v3084
      %v3086 = vpop.f32.mrf.mxu0
      %v3087 = vadd.f32 0.0, %v3086
      %3088 = vmatmul.bf16.gmra.mxu0 %v3021
      %v3089 = vpop.f32.mrf.mxu0
      %v3090 = vadd.f32 0.0, %v3089
      %v3091 = vpop.f32.mrf.mxu0
      %v3092 = vadd.f32 0.0, %v3091
      %3093 = vmatmul.bf16.gmra.mxu0 %v3024
      %v3094 = vpop.f32.mrf.mxu0
      %v3095 = vadd.f32 0.0, %v3094
      %v3096 = vpop.f32.mrf.mxu0
      %v3097 = vadd.f32 0.0, %v3096
      %3098 = vmatmul.bf16.gmra.mxu0 %v3027
      %v3099 = vpop.f32.mrf.mxu0
      %v3100 = vadd.f32 0.0, %v3099
      %v3101 = vpop.f32.mrf.mxu0
      %v3102 = vadd.f32 0.0, %v3101
      %3103 = vmatmul.bf16.gmra.mxu0 %v3030
      %v3104 = vpop.f32.mrf.mxu0
      %v3105 = vadd.f32 0.0, %v3104
      %v3106 = vpop.f32.mrf.mxu0
      %v3107 = vadd.f32 0.0, %v3106
      %3108 = vmatmul.bf16.gmra.mxu0 %v3033
      %v3109 = vpop.f32.mrf.mxu0
      %v3110 = vadd.f32 0.0, %v3109
      %v3111 = vpop.f32.mrf.mxu0
      %v3112 = vadd.f32 0.0, %v3111
      %3113 = vmatmul.bf16.gmra.mxu0 %v3036
      %v3114 = vpop.f32.mrf.mxu0
      %v3115 = vadd.f32 0.0, %v3114
      %v3116 = vpop.f32.mrf.mxu0
      %v3117 = vadd.f32 0.0, %v3116
      %3118 = vmatmul.bf16.gmra.mxu0 %v3039
      %v3119 = vpop.f32.mrf.mxu0
      %v3120 = vadd.f32 0.0, %v3119
      %v3121 = vpop.f32.mrf.mxu0
      %v3122 = vadd.f32 0.0, %v3121
      %3123 = vmatmul.bf16.gmra.mxu0 %v3042
      %v3124 = vpop.f32.mrf.mxu0
      %v3125 = vadd.f32 0.0, %v3124
      %v3126 = vpop.f32.mrf.mxu0
      %v3127 = vadd.f32 0.0, %v3126
      %3128 = vmatmul.bf16.gmra.mxu0 %v3045
      %v3129 = vpop.f32.mrf.mxu0
      %v3130 = vadd.f32 0.0, %v3129
      %v3131 = vpop.f32.mrf.mxu0
      %v3132 = vadd.f32 0.0, %v3131
      %3133 = vmatmul.bf16.gmra.mxu0 %v3048
      %v3134 = vpop.f32.mrf.mxu0
      %v3135 = vadd.f32 0.0, %v3134
      %v3136 = vpop.f32.mrf.mxu0
      %v3137 = vadd.f32 0.0, %v3136
      %3138 = vdwg.mxu0
      %3139 = vmatpush.bf16.msra.mxu0 0
      %3140 = vmatpush.bf16.msra.mxu0 0
      %3141 = vmatpush.bf16.msra.mxu0 0
      %3142 = vmatpush.bf16.msra.mxu0 0
      %3143 = vmatpush.bf16.msra.mxu0 0
      %3144 = vmatpush.bf16.msra.mxu0 0
      %3145 = vmatpush.bf16.msra.mxu0 0
      %3146 = vmatpush.bf16.msra.mxu0 %v2999
      %3147 = vmatmul.bf16.gmra.mxu0 %v3003
      %v3148 = vpop.f32.mrf.mxu0
      %v3149 = vadd.f32 0.0, %v3148
      %v3150 = vpop.f32.mrf.mxu0
      %v3151 = vadd.f32 0.0, %v3150
      %3152 = vmatmul.bf16.gmra.mxu0 %v3006
      %v3153 = vpop.f32.mrf.mxu0
      %v3154 = vadd.f32 0.0, %v3153
      %v3155 = vpop.f32.mrf.mxu0
      %v3156 = vadd.f32 0.0, %v3155
      %3157 = vmatmul.bf16.gmra.mxu0 %v3009
      %v3158 = vpop.f32.mrf.mxu0
      %v3159 = vadd.f32 0.0, %v3158
      %v3160 = vpop.f32.mrf.mxu0
      %v3161 = vadd.f32 0.0, %v3160
      %3162 = vmatmul.bf16.gmra.mxu0 %v3012
      %v3163 = vpop.f32.mrf.mxu0
      %v3164 = vadd.f32 0.0, %v3163
      %v3165 = vpop.f32.mrf.mxu0
      %v3166 = vadd.f32 0.0, %v3165
      %3167 = vmatmul.bf16.gmra.mxu0 %v3015
      %v3168 = vpop.f32.mrf.mxu0
      %v3169 = vadd.f32 0.0, %v3168
      %v3170 = vpop.f32.mrf.mxu0
      %v3171 = vadd.f32 0.0, %v3170
      %3172 = vmatmul.bf16.gmra.mxu0 %v3018
      %v3173 = vpop.f32.mrf.mxu0
      %v3174 = vadd.f32 0.0, %v3173
      %v3175 = vpop.f32.mrf.mxu0
      %v3176 = vadd.f32 0.0, %v3175
      %3177 = vmatmul.bf16.gmra.mxu0 %v3021
      %v3178 = vpop.f32.mrf.mxu0
      %v3179 = vadd.f32 0.0, %v3178
      %v3180 = vpop.f32.mrf.mxu0
      %v3181 = vadd.f32 0.0, %v3180
      %3182 = vmatmul.bf16.gmra.mxu0 %v3024
      %v3183 = vpop.f32.mrf.mxu0
      %v3184 = vadd.f32 0.0, %v3183
      %v3185 = vpop.f32.mrf.mxu0
      %v3186 = vadd.f32 0.0, %v3185
      %3187 = vmatmul.bf16.gmra.mxu0 %v3027
      %v3188 = vpop.f32.mrf.mxu0
      %v3189 = vadd.f32 0.0, %v3188
      %v3190 = vpop.f32.mrf.mxu0
      %v3191 = vadd.f32 0.0, %v3190
      %3192 = vmatmul.bf16.gmra.mxu0 %v3030
      %v3193 = vpop.f32.mrf.mxu0
      %v3194 = vadd.f32 0.0, %v3193
      %v3195 = vpop.f32.mrf.mxu0
      %v3196 = vadd.f32 0.0, %v3195
      %3197 = vmatmul.bf16.gmra.mxu0 %v3033
      %v3198 = vpop.f32.mrf.mxu0
      %v3199 = vadd.f32 0.0, %v3198
      %v3200 = vpop.f32.mrf.mxu0
      %v3201 = vadd.f32 0.0, %v3200
      %3202 = vmatmul.bf16.gmra.mxu0 %v3036
      %v3203 = vpop.f32.mrf.mxu0
      %v3204 = vadd.f32 0.0, %v3203
      %v3205 = vpop.f32.mrf.mxu0
      %v3206 = vadd.f32 0.0, %v3205
      %3207 = vmatmul.bf16.gmra.mxu0 %v3039
      %v3208 = vpop.f32.mrf.mxu0
      %v3209 = vadd.f32 0.0, %v3208
      %v3210 = vpop.f32.mrf.mxu0
      %v3211 = vadd.f32 0.0, %v3210
      %3212 = vmatmul.bf16.gmra.mxu0 %v3042
      %v3213 = vpop.f32.mrf.mxu0
      %v3214 = vadd.f32 0.0, %v3213
      %v3215 = vpop.f32.mrf.mxu0
      %v3216 = vadd.f32 0.0, %v3215
      %3217 = vmatmul.bf16.gmra.mxu0 %v3045
      %v3218 = vpop.f32.mrf.mxu0
      %v3219 = vadd.f32 0.0, %v3218
      %v3220 = vpop.f32.mrf.mxu0
      %v3221 = vadd.f32 0.0, %v3220
      %3222 = vmatmul.bf16.gmra.mxu0 %v3048
      %v3223 = vpop.f32.mrf.mxu0
      %v3224 = vadd.f32 0.0, %v3223
      %v3225 = vpop.f32.mrf.mxu0
      %v3226 = vadd.f32 0.0, %v3225
      %3227 = vdwg.mxu0
      %v3228 = vmax.f32 %v3060, %v3149
      %3229 = vmax.xlane.f32.xlu0 %v3228
      %v3230 = vpop.xlane.xlu0 %3229
      %v3231 = vmax.f32 %v3062, %v3151
      %3232 = vmax.xlane.f32.xlu0 %v3231
      %v3233 = vpop.xlane.xlu0 %3232
      %v3234 = vmax.f32 %v3065, %v3154
      %3235 = vmax.xlane.f32.xlu0 %v3234
      %v3236 = vpop.xlane.xlu0 %3235
      %v3237 = vmax.f32 %v3067, %v3156
      %3238 = vmax.xlane.f32.xlu0 %v3237
      %v3239 = vpop.xlane.xlu0 %3238
      %v3240 = vmax.f32 %v3070, %v3159
      %3241 = vmax.xlane.f32.xlu0 %v3240
      %v3242 = vpop.xlane.xlu0 %3241
      %v3243 = vmax.f32 %v3072, %v3161
      %3244 = vmax.xlane.f32.xlu0 %v3243
      %v3245 = vpop.xlane.xlu0 %3244
      %v3246 = vmax.f32 %v3075, %v3164
      %3247 = vmax.xlane.f32.xlu0 %v3246
      %v3248 = vpop.xlane.xlu0 %3247
      %v3249 = vmax.f32 %v3077, %v3166
      %3250 = vmax.xlane.f32.xlu0 %v3249
      %v3251 = vpop.xlane.xlu0 %3250
      %v3252 = vmax.f32 %v3080, %v3169
      %3253 = vmax.xlane.f32.xlu0 %v3252
      %v3254 = vpop.xlane.xlu0 %3253
      %v3255 = vmax.f32 %v3082, %v3171
      %3256 = vmax.xlane.f32.xlu0 %v3255
      %v3257 = vpop.xlane.xlu0 %3256
      %v3258 = vmax.f32 %v3085, %v3174
      %3259 = vmax.xlane.f32.xlu0 %v3258
      %v3260 = vpop.xlane.xlu0 %3259
      %v3261 = vmax.f32 %v3087, %v3176
      %3262 = vmax.xlane.f32.xlu0 %v3261
      %v3263 = vpop.xlane.xlu0 %3262
      %v3264 = vmax.f32 %v3090, %v3179
      %3265 = vmax.xlane.f32.xlu0 %v3264
      %v3266 = vpop.xlane.xlu0 %3265
      %v3267 = vmax.f32 %v3092, %v3181
      %3268 = vmax.xlane.f32.xlu0 %v3267
      %v3269 = vpop.xlane.xlu0 %3268
      %v3270 = vmax.f32 %v3095, %v3184
      %3271 = vmax.xlane.f32.xlu0 %v3270
      %v3272 = vpop.xlane.xlu0 %3271
      %v3273 = vmax.f32 %v3097, %v3186
      %3274 = vmax.xlane.f32.xlu0 %v3273
      %v3275 = vpop.xlane.xlu0 %3274
      %v3276 = vmax.f32 %v3100, %v3189
      %3277 = vmax.xlane.f32.xlu0 %v3276
      %v3278 = vpop.xlane.xlu0 %3277
      %v3279 = vmax.f32 %v3102, %v3191
      %3280 = vmax.xlane.f32.xlu0 %v3279
      %v3281 = vpop.xlane.xlu0 %3280
      %v3282 = vmax.f32 %v3105, %v3194
      %3283 = vmax.xlane.f32.xlu0 %v3282
      %v3284 = vpop.xlane.xlu0 %3283
      %v3285 = vmax.f32 %v3107, %v3196
      %3286 = vmax.xlane.f32.xlu0 %v3285
      %v3287 = vpop.xlane.xlu0 %3286
      %v3288 = vmax.f32 %v3110, %v3199
      %3289 = vmax.xlane.f32.xlu0 %v3288
      %v3290 = vpop.xlane.xlu0 %3289
      %v3291 = vmax.f32 %v3112, %v3201
      %3292 = vmax.xlane.f32.xlu0 %v3291
      %v3293 = vpop.xlane.xlu0 %3292
      %v3294 = vmax.f32 %v3115, %v3204
      %3295 = vmax.xlane.f32.xlu0 %v3294
      %v3296 = vpop.xlane.xlu0 %3295
      %v3297 = vmax.f32 %v3117, %v3206
      %3298 = vmax.xlane.f32.xlu0 %v3297
      %v3299 = vpop.xlane.xlu0 %3298
      %v3300 = vmax.f32 %v3120, %v3209
      %3301 = vmax.xlane.f32.xlu0 %v3300
      %v3302 = vpop.xlane.xlu0 %3301
      %v3303 = vmax.f32 %v3122, %v3211
      %3304 = vmax.xlane.f32.xlu0 %v3303
      %v3305 = vpop.xlane.xlu0 %3304
      %v3306 = vmax.f32 %v3125, %v3214
      %3307 = vmax.xlane.f32.xlu0 %v3306
      %v3308 = vpop.xlane.xlu0 %3307
      %v3309 = vmax.f32 %v3127, %v3216
      %3310 = vmax.xlane.f32.xlu0 %v3309
      %v3311 = vpop.xlane.xlu0 %3310
      %v3312 = vmax.f32 %v3130, %v3219
      %3313 = vmax.xlane.f32.xlu0 %v3312
      %v3314 = vpop.xlane.xlu0 %3313
      %v3315 = vmax.f32 %v3132, %v3221
      %3316 = vmax.xlane.f32.xlu0 %v3315
      %v3317 = vpop.xlane.xlu0 %3316
      %v3318 = vmax.f32 %v3135, %v3224
      %3319 = vmax.xlane.f32.xlu0 %v3318
      %v3320 = vpop.xlane.xlu0 %3319
      %v3321 = vmax.f32 %v3137, %v3226
      %3322 = vmax.xlane.f32.xlu0 %v3321
      %v3323 = vpop.xlane.xlu0 %3322
      %v3324 = vsub.f32 %v3060, %v3230
      %v3325 = vsub.f32 %v3149, %v3230
      %v3326 = vsub.f32 %v3062, %v3233
      %v3327 = vsub.f32 %v3151, %v3233
      %v3328 = vsub.f32 %v3065, %v3236
      %v3329 = vsub.f32 %v3154, %v3236
      %v3330 = vsub.f32 %v3067, %v3239
      %v3331 = vsub.f32 %v3156, %v3239
      %v3332 = vsub.f32 %v3070, %v3242
      %v3333 = vsub.f32 %v3159, %v3242
      %v3334 = vsub.f32 %v3072, %v3245
      %v3335 = vsub.f32 %v3161, %v3245
      %v3336 = vsub.f32 %v3075, %v3248
      %v3337 = vsub.f32 %v3164, %v3248
      %v3338 = vsub.f32 %v3077, %v3251
      %v3339 = vsub.f32 %v3166, %v3251
      %v3340 = vsub.f32 %v3080, %v3254
      %v3341 = vsub.f32 %v3169, %v3254
      %v3342 = vsub.f32 %v3082, %v3257
      %v3343 = vsub.f32 %v3171, %v3257
      %v3344 = vsub.f32 %v3085, %v3260
      %v3345 = vsub.f32 %v3174, %v3260
      %v3346 = vsub.f32 %v3087, %v3263
      %v3347 = vsub.f32 %v3176, %v3263
      %v3348 = vsub.f32 %v3090, %v3266
      %v3349 = vsub.f32 %v3179, %v3266
      %v3350 = vsub.f32 %v3092, %v3269
      %v3351 = vsub.f32 %v3181, %v3269
      %v3352 = vsub.f32 %v3095, %v3272
      %v3353 = vsub.f32 %v3184, %v3272
      %v3354 = vsub.f32 %v3097, %v3275
      %v3355 = vsub.f32 %v3186, %v3275
      %v3356 = vsub.f32 %v3100, %v3278
      %v3357 = vsub.f32 %v3189, %v3278
      %v3358 = vsub.f32 %v3102, %v3281
      %v3359 = vsub.f32 %v3191, %v3281
      %v3360 = vsub.f32 %v3105, %v3284
      %v3361 = vsub.f32 %v3194, %v3284
      %v3362 = vsub.f32 %v3107, %v3287
      %v3363 = vsub.f32 %v3196, %v3287
      %v3364 = vsub.f32 %v3110, %v3290
      %v3365 = vsub.f32 %v3199, %v3290
      %v3366 = vsub.f32 %v3112, %v3293
      %v3367 = vsub.f32 %v3201, %v3293
      %v3368 = vsub.f32 %v3115, %v3296
      %v3369 = vsub.f32 %v3204, %v3296
      %v3370 = vsub.f32 %v3117, %v3299
      %v3371 = vsub.f32 %v3206, %v3299
      %v3372 = vsub.f32 %v3120, %v3302
      %v3373 = vsub.f32 %v3209, %v3302
      %v3374 = vsub.f32 %v3122, %v3305
      %v3375 = vsub.f32 %v3211, %v3305
      %v3376 = vsub.f32 %v3125, %v3308
      %v3377 = vsub.f32 %v3214, %v3308
      %v3378 = vsub.f32 %v3127, %v3311
      %v3379 = vsub.f32 %v3216, %v3311
      %v3380 = vsub.f32 %v3130, %v3314
      %v3381 = vsub.f32 %v3219, %v3314
      %v3382 = vsub.f32 %v3132, %v3317
      %v3383 = vsub.f32 %v3221, %v3317
      %v3384 = vsub.f32 %v3135, %v3320
      %v3385 = vsub.f32 %v3224, %v3320
      %v3386 = vsub.f32 %v3137, %v3323
      %v3387 = vsub.f32 %v3226, %v3323
      %v3388 = vmul.f32 %v3324, 1.442695
      %v3389 = vpow.pop %v3388
      %v3390 = vmul.f32 %v3325, 1.442695
      %v3391 = vpow.pop %v3390
      %v3392 = vmul.f32 %v3326, 1.442695
      %v3393 = vpow.pop %v3392
      %v3394 = vmul.f32 %v3327, 1.442695
      %v3395 = vpow.pop %v3394
      %v3396 = vmul.f32 %v3328, 1.442695
      %v3397 = vpow.pop %v3396
      %v3398 = vmul.f32 %v3329, 1.442695
      %v3399 = vpow.pop %v3398
      %v3400 = vmul.f32 %v3330, 1.442695
      %v3401 = vpow.pop %v3400
      %v3402 = vmul.f32 %v3331, 1.442695
      %v3403 = vpow.pop %v3402
      %v3404 = vmul.f32 %v3332, 1.442695
      %v3405 = vpow.pop %v3404
      %v3406 = vmul.f32 %v3333, 1.442695
      %v3407 = vpow.pop %v3406
      %v3408 = vmul.f32 %v3334, 1.442695
      %v3409 = vpow.pop %v3408
      %v3410 = vmul.f32 %v3335, 1.442695
      %v3411 = vpow.pop %v3410
      %v3412 = vmul.f32 %v3336, 1.442695
      %v3413 = vpow.pop %v3412
      %v3414 = vmul.f32 %v3337, 1.442695
      %v3415 = vpow.pop %v3414
      %v3416 = vmul.f32 %v3338, 1.442695
      %v3417 = vpow.pop %v3416
      %v3418 = vmul.f32 %v3339, 1.442695
      %v3419 = vpow.pop %v3418
      %v3420 = vmul.f32 %v3340, 1.442695
      %v3421 = vpow.pop %v3420
      %v3422 = vmul.f32 %v3341, 1.442695
      %v3423 = vpow.pop %v3422
      %v3424 = vmul.f32 %v3342, 1.442695
      %v3425 = vpow.pop %v3424
      %v3426 = vmul.f32 %v3343, 1.442695
      %v3427 = vpow.pop %v3426
      %v3428 = vmul.f32 %v3344, 1.442695
      %v3429 = vpow.pop %v3428
      %v3430 = vmul.f32 %v3345, 1.442695
      %v3431 = vpow.pop %v3430
      %v3432 = vmul.f32 %v3346, 1.442695
      %v3433 = vpow.pop %v3432
      %v3434 = vmul.f32 %v3347, 1.442695
      %v3435 = vpow.pop %v3434
      %v3436 = vmul.f32 %v3348, 1.442695
      %v3437 = vpow.pop %v3436
      %v3438 = vmul.f32 %v3349, 1.442695
      %v3439 = vpow.pop %v3438
      %v3440 = vmul.f32 %v3350, 1.442695
      %v3441 = vpow.pop %v3440
      %v3442 = vmul.f32 %v3351, 1.442695
      %v3443 = vpow.pop %v3442
      %v3444 = vmul.f32 %v3352, 1.442695
      %v3445 = vpow.pop %v3444
      %v3446 = vmul.f32 %v3353, 1.442695
      %v3447 = vpow.pop %v3446
      %v3448 = vmul.f32 %v3354, 1.442695
      %v3449 = vpow.pop %v3448
      %v3450 = vmul.f32 %v3355, 1.442695
      %v3451 = vpow.pop %v3450
      %v3452 = vmul.f32 %v3356, 1.442695
      %v3453 = vpow.pop %v3452
      %v3454 = vmul.f32 %v3357, 1.442695
      %v3455 = vpow.pop %v3454
      %v3456 = vmul.f32 %v3358, 1.442695
      %v3457 = vpow.pop %v3456
      %v3458 = vmul.f32 %v3359, 1.442695
      %v3459 = vpow.pop %v3458
      %v3460 = vmul.f32 %v3360, 1.442695
      %v3461 = vpow.pop %v3460
      %v3462 = vmul.f32 %v3361, 1.442695
      %v3463 = vpow.pop %v3462
      %v3464 = vmul.f32 %v3362, 1.442695
      %v3465 = vpow.pop %v3464
      %v3466 = vmul.f32 %v3363, 1.442695
      %v3467 = vpow.pop %v3466
      %v3468 = vmul.f32 %v3364, 1.442695
      %v3469 = vpow.pop %v3468
      %v3470 = vmul.f32 %v3365, 1.442695
      %v3471 = vpow.pop %v3470
      %v3472 = vmul.f32 %v3366, 1.442695
      %v3473 = vpow.pop %v3472
      %v3474 = vmul.f32 %v3367, 1.442695
      %v3475 = vpow.pop %v3474
      %v3476 = vmul.f32 %v3368, 1.442695
      %v3477 = vpow.pop %v3476
      %v3478 = vmul.f32 %v3369, 1.442695
      %v3479 = vpow.pop %v3478
      %v3480 = vmul.f32 %v3370, 1.442695
      %v3481 = vpow.pop %v3480
      %v3482 = vmul.f32 %v3371, 1.442695
      %v3483 = vpow.pop %v3482
      %v3484 = vmul.f32 %v3372, 1.442695
      %v3485 = vpow.pop %v3484
      %v3486 = vmul.f32 %v3373, 1.442695
      %v3487 = vpow.pop %v3486
      %v3488 = vmul.f32 %v3374, 1.442695
      %v3489 = vpow.pop %v3488
      %v3490 = vmul.f32 %v3375, 1.442695
      %v3491 = vpow.pop %v3490
      %v3492 = vmul.f32 %v3376, 1.442695
      %v3493 = vpow.pop %v3492
      %v3494 = vmul.f32 %v3377, 1.442695
      %v3495 = vpow.pop %v3494
      %v3496 = vmul.f32 %v3378, 1.442695
      %v3497 = vpow.pop %v3496
      %v3498 = vmul.f32 %v3379, 1.442695
      %v3499 = vpow.pop %v3498
      %v3500 = vmul.f32 %v3380, 1.442695
      %v3501 = vpow.pop %v3500
      %v3502 = vmul.f32 %v3381, 1.442695
      %v3503 = vpow.pop %v3502
      %v3504 = vmul.f32 %v3382, 1.442695
      %v3505 = vpow.pop %v3504
      %v3506 = vmul.f32 %v3383, 1.442695
      %v3507 = vpow.pop %v3506
      %v3508 = vmul.f32 %v3384, 1.442695
      %v3509 = vpow.pop %v3508
      %v3510 = vmul.f32 %v3385, 1.442695
      %v3511 = vpow.pop %v3510
      %v3512 = vmul.f32 %v3386, 1.442695
      %v3513 = vpow.pop %v3512
      %v3514 = vmul.f32 %v3387, 1.442695
      %v3515 = vpow.pop %v3514
      %v3516 = vadd.f32 %v3389, %v3391
      %3517 = vadd.xlane.f32.xlu0 %v3516
      %v3518 = vpop.xlane.xlu0 %3517
      %v3519 = vadd.f32 %v3393, %v3395
      %3520 = vadd.xlane.f32.xlu0 %v3519
      %v3521 = vpop.xlane.xlu0 %3520
      %v3522 = vadd.f32 %v3397, %v3399
      %3523 = vadd.xlane.f32.xlu0 %v3522
      %v3524 = vpop.xlane.xlu0 %3523
      %v3525 = vadd.f32 %v3401, %v3403
      %3526 = vadd.xlane.f32.xlu0 %v3525
      %v3527 = vpop.xlane.xlu0 %3526
      %v3528 = vadd.f32 %v3405, %v3407
      %3529 = vadd.xlane.f32.xlu0 %v3528
      %v3530 = vpop.xlane.xlu0 %3529
      %v3531 = vadd.f32 %v3409, %v3411
      %3532 = vadd.xlane.f32.xlu0 %v3531
      %v3533 = vpop.xlane.xlu0 %3532
      %v3534 = vadd.f32 %v3413, %v3415
      %3535 = vadd.xlane.f32.xlu0 %v3534
      %v3536 = vpop.xlane.xlu0 %3535
      %v3537 = vadd.f32 %v3417, %v3419
      %3538 = vadd.xlane.f32.xlu0 %v3537
      %v3539 = vpop.xlane.xlu0 %3538
      %v3540 = vadd.f32 %v3421, %v3423
      %3541 = vadd.xlane.f32.xlu0 %v3540
      %v3542 = vpop.xlane.xlu0 %3541
      %v3543 = vadd.f32 %v3425, %v3427
      %3544 = vadd.xlane.f32.xlu0 %v3543
      %v3545 = vpop.xlane.xlu0 %3544
      %v3546 = vadd.f32 %v3429, %v3431
      %3547 = vadd.xlane.f32.xlu0 %v3546
      %v3548 = vpop.xlane.xlu0 %3547
      %v3549 = vadd.f32 %v3433, %v3435
      %3550 = vadd.xlane.f32.xlu0 %v3549
      %v3551 = vpop.xlane.xlu0 %3550
      %v3552 = vadd.f32 %v3437, %v3439
      %3553 = vadd.xlane.f32.xlu0 %v3552
      %v3554 = vpop.xlane.xlu0 %3553
      %v3555 = vadd.f32 %v3441, %v3443
      %3556 = vadd.xlane.f32.xlu0 %v3555
      %v3557 = vpop.xlane.xlu0 %3556
      %v3558 = vadd.f32 %v3445, %v3447
      %3559 = vadd.xlane.f32.xlu0 %v3558
      %v3560 = vpop.xlane.xlu0 %3559
      %v3561 = vadd.f32 %v3449, %v3451
      %3562 = vadd.xlane.f32.xlu0 %v3561
      %v3563 = vpop.xlane.xlu0 %3562
      %v3564 = vadd.f32 %v3453, %v3455
      %3565 = vadd.xlane.f32.xlu0 %v3564
      %v3566 = vpop.xlane.xlu0 %3565
      %v3567 = vadd.f32 %v3457, %v3459
      %3568 = vadd.xlane.f32.xlu0 %v3567
      %v3569 = vpop.xlane.xlu0 %3568
      %v3570 = vadd.f32 %v3461, %v3463
      %3571 = vadd.xlane.f32.xlu0 %v3570
      %v3572 = vpop.xlane.xlu0 %3571
      %v3573 = vadd.f32 %v3465, %v3467
      %3574 = vadd.xlane.f32.xlu0 %v3573
      %v3575 = vpop.xlane.xlu0 %3574
      %v3576 = vadd.f32 %v3469, %v3471
      %3577 = vadd.xlane.f32.xlu0 %v3576
      %v3578 = vpop.xlane.xlu0 %3577
      %v3579 = vadd.f32 %v3473, %v3475
      %3580 = vadd.xlane.f32.xlu0 %v3579
      %v3581 = vpop.xlane.xlu0 %3580
      %v3582 = vadd.f32 %v3477, %v3479
      %3583 = vadd.xlane.f32.xlu0 %v3582
      %v3584 = vpop.xlane.xlu0 %3583
      %v3585 = vadd.f32 %v3481, %v3483
      %3586 = vadd.xlane.f32.xlu0 %v3585
      %v3587 = vpop.xlane.xlu0 %3586
      %v3588 = vadd.f32 %v3485, %v3487
      %3589 = vadd.xlane.f32.xlu0 %v3588
      %v3590 = vpop.xlane.xlu0 %3589
      %v3591 = vadd.f32 %v3489, %v3491
      %3592 = vadd.xlane.f32.xlu0 %v3591
      %v3593 = vpop.xlane.xlu0 %3592
      %v3594 = vadd.f32 %v3493, %v3495
      %3595 = vadd.xlane.f32.xlu0 %v3594
      %v3596 = vpop.xlane.xlu0 %3595
      %v3597 = vadd.f32 %v3497, %v3499
      %3598 = vadd.xlane.f32.xlu0 %v3597
      %v3599 = vpop.xlane.xlu0 %3598
      %v3600 = vadd.f32 %v3501, %v3503
      %3601 = vadd.xlane.f32.xlu0 %v3600
      %v3602 = vpop.xlane.xlu0 %3601
      %v3603 = vadd.f32 %v3505, %v3507
      %3604 = vadd.xlane.f32.xlu0 %v3603
      %v3605 = vpop.xlane.xlu0 %3604
      %v3606 = vadd.f32 %v3509, %v3511
      %3607 = vadd.xlane.f32.xlu0 %v3606
      %v3608 = vpop.xlane.xlu0 %3607
      %v3609 = vadd.f32 %v3513, %v3515
      %3610 = vadd.xlane.f32.xlu0 %v3609
      %v3611 = vpop.xlane.xlu0 %3610
      %v3612 = vrcp.pop %v3518
      %v3613 = vrcp.pop %v3521
      %v3614 = vrcp.pop %v3524
      %v3615 = vrcp.pop %v3527
      %v3616 = vrcp.pop %v3530
      %v3617 = vrcp.pop %v3533
      %v3618 = vrcp.pop %v3536
      %v3619 = vrcp.pop %v3539
      %v3620 = vrcp.pop %v3542
      %v3621 = vrcp.pop %v3545
      %v3622 = vrcp.pop %v3548
      %v3623 = vrcp.pop %v3551
      %v3624 = vrcp.pop %v3554
      %v3625 = vrcp.pop %v3557
      %v3626 = vrcp.pop %v3560
      %v3627 = vrcp.pop %v3563
      %v3628 = vrcp.pop %v3566
      %v3629 = vrcp.pop %v3569
      %v3630 = vrcp.pop %v3572
      %v3631 = vrcp.pop %v3575
      %v3632 = vrcp.pop %v3578
      %v3633 = vrcp.pop %v3581
      %v3634 = vrcp.pop %v3584
      %v3635 = vrcp.pop %v3587
      %v3636 = vrcp.pop %v3590
      %v3637 = vrcp.pop %v3593
      %v3638 = vrcp.pop %v3596
      %v3639 = vrcp.pop %v3599
      %v3640 = vrcp.pop %v3602
      %v3641 = vrcp.pop %v3605
      %v3642 = vrcp.pop %v3608
      %v3643 = vrcp.pop %v3611
      %v3644 = vmul.f32 %v3389, %v3612
      %v3645 = vmul.f32 %v3391, %v3612
      %v3646 = vmul.f32 %v3393, %v3613
      %v3647 = vmul.f32 %v3395, %v3613
      %v3648 = vmul.f32 %v3397, %v3614
      %v3649 = vmul.f32 %v3399, %v3614
      %v3650 = vmul.f32 %v3401, %v3615
      %v3651 = vmul.f32 %v3403, %v3615
      %v3652 = vmul.f32 %v3405, %v3616
      %v3653 = vmul.f32 %v3407, %v3616
      %v3654 = vmul.f32 %v3409, %v3617
      %v3655 = vmul.f32 %v3411, %v3617
      %v3656 = vmul.f32 %v3413, %v3618
      %v3657 = vmul.f32 %v3415, %v3618
      %v3658 = vmul.f32 %v3417, %v3619
      %v3659 = vmul.f32 %v3419, %v3619
      %v3660 = vmul.f32 %v3421, %v3620
      %v3661 = vmul.f32 %v3423, %v3620
      %v3662 = vmul.f32 %v3425, %v3621
      %v3663 = vmul.f32 %v3427, %v3621
      %v3664 = vmul.f32 %v3429, %v3622
      %v3665 = vmul.f32 %v3431, %v3622
      %v3666 = vmul.f32 %v3433, %v3623
      %v3667 = vmul.f32 %v3435, %v3623
      %v3668 = vmul.f32 %v3437, %v3624
      %v3669 = vmul.f32 %v3439, %v3624
      %v3670 = vmul.f32 %v3441, %v3625
      %v3671 = vmul.f32 %v3443, %v3625
      %v3672 = vmul.f32 %v3445, %v3626
      %v3673 = vmul.f32 %v3447, %v3626
      %v3674 = vmul.f32 %v3449, %v3627
      %v3675 = vmul.f32 %v3451, %v3627
      %v3676 = vmul.f32 %v3453, %v3628
      %v3677 = vmul.f32 %v3455, %v3628
      %v3678 = vmul.f32 %v3457, %v3629
      %v3679 = vmul.f32 %v3459, %v3629
      %v3680 = vmul.f32 %v3461, %v3630
      %v3681 = vmul.f32 %v3463, %v3630
      %v3682 = vmul.f32 %v3465, %v3631
      %v3683 = vmul.f32 %v3467, %v3631
      %v3684 = vmul.f32 %v3469, %v3632
      %v3685 = vmul.f32 %v3471, %v3632
      %v3686 = vmul.f32 %v3473, %v3633
      %v3687 = vmul.f32 %v3475, %v3633
      %v3688 = vmul.f32 %v3477, %v3634
      %v3689 = vmul.f32 %v3479, %v3634
      %v3690 = vmul.f32 %v3481, %v3635
      %v3691 = vmul.f32 %v3483, %v3635
      %v3692 = vmul.f32 %v3485, %v3636
      %v3693 = vmul.f32 %v3487, %v3636
      %v3694 = vmul.f32 %v3489, %v3637
      %v3695 = vmul.f32 %v3491, %v3637
      %v3696 = vmul.f32 %v3493, %v3638
      %v3697 = vmul.f32 %v3495, %v3638
      %v3698 = vmul.f32 %v3497, %v3639
      %v3699 = vmul.f32 %v3499, %v3639
      %v3700 = vmul.f32 %v3501, %v3640
      %v3701 = vmul.f32 %v3503, %v3640
      %v3702 = vmul.f32 %v3505, %v3641
      %v3703 = vmul.f32 %v3507, %v3641
      %v3704 = vmul.f32 %v3509, %v3642
      %v3705 = vmul.f32 %v3511, %v3642
      %v3706 = vmul.f32 %v3513, %v3643
      %v3707 = vmul.f32 %v3515, %v3643
      %v3708 = vpack.c.bf16 %v3646, %v3644
      %v3709 = vpack.c.bf16 %v3647, %v3645
      %v3710 = vpack.c.bf16 %v3650, %v3648
      %v3711 = vpack.c.bf16 %v3651, %v3649
      %v3712 = vpack.c.bf16 %v3654, %v3652
      %v3713 = vpack.c.bf16 %v3655, %v3653
      %v3714 = vpack.c.bf16 %v3658, %v3656
      %v3715 = vpack.c.bf16 %v3659, %v3657
      %v3716 = vpack.c.bf16 %v3662, %v3660
      %v3717 = vpack.c.bf16 %v3663, %v3661
      %v3718 = vpack.c.bf16 %v3666, %v3664
      %v3719 = vpack.c.bf16 %v3667, %v3665
      %v3720 = vpack.c.bf16 %v3670, %v3668
      %v3721 = vpack.c.bf16 %v3671, %v3669
      %v3722 = vpack.c.bf16 %v3674, %v3672
      %v3723 = vpack.c.bf16 %v3675, %v3673
      %v3724 = vpack.c.bf16 %v3678, %v3676
      %v3725 = vpack.c.bf16 %v3679, %v3677
      %v3726 = vpack.c.bf16 %v3682, %v3680
      %v3727 = vpack.c.bf16 %v3683, %v3681
      %v3728 = vpack.c.bf16 %v3686, %v3684
      %v3729 = vpack.c.bf16 %v3687, %v3685
      %v3730 = vpack.c.bf16 %v3690, %v3688
      %v3731 = vpack.c.bf16 %v3691, %v3689
      %v3732 = vpack.c.bf16 %v3694, %v3692
      %v3733 = vpack.c.bf16 %v3695, %v3693
      %v3734 = vpack.c.bf16 %v3698, %v3696
      %v3735 = vpack.c.bf16 %v3699, %v3697
      %v3736 = vpack.c.bf16 %v3702, %v3700
      %v3737 = vpack.c.bf16 %v3703, %v3701
      %v3738 = vpack.c.bf16 %v3706, %v3704
      %v3739 = vpack.c.bf16 %v3707, %v3705
      %3740 = vmatpush.bf16.xpose.msra.mxu0 %v3722
      %3741 = vmatpush.bf16.xpose.msra.mxu0 %v3720
      %3742 = vmatpush.bf16.xpose.msra.mxu0 %v3718
      %3743 = vmatpush.bf16.xpose.msra.mxu0 %v3716
      %3744 = vmatpush.bf16.xpose.msra.mxu0 %v3714
      %3745 = vmatpush.bf16.xpose.msra.mxu0 %v3712
      %3746 = vmatpush.bf16.xpose.msra.mxu0 %v3710
      %3747 = vmatpush.bf16.xpose.msra.mxu0 %v3708
      %3748 = vmatmul.bf16.gmra.mxu0 %v3000
      %v3749 = vpop.f32.mrf.mxu0
      %v3750 = vadd.f32 0.0, %v3749
      %v3751 = vpop.f32.mrf.mxu0
      %v3752 = vadd.f32 0.0, %v3751
      %3753 = vdwg.mxu0
      %3754 = vmatpush.bf16.xpose.msra.mxu0 %v3723
      %3755 = vmatpush.bf16.xpose.msra.mxu0 %v3721
      %3756 = vmatpush.bf16.xpose.msra.mxu0 %v3719
      %3757 = vmatpush.bf16.xpose.msra.mxu0 %v3717
      %3758 = vmatpush.bf16.xpose.msra.mxu0 %v3715
      %3759 = vmatpush.bf16.xpose.msra.mxu0 %v3713
      %3760 = vmatpush.bf16.xpose.msra.mxu0 %v3711
      %3761 = vmatpush.bf16.xpose.msra.mxu0 %v3709
      %3762 = vmatmul.bf16.gmra.mxu0 %v3001
      %v3763 = vpop.f32.mrf.mxu0
      %v3764 = vadd.f32 %v3750, %v3763
      %v3765 = vpop.f32.mrf.mxu0
      %v3766 = vadd.f32 %v3752, %v3765
      %3767 = vdwg.mxu0
      %3768 = vmatpush.bf16.xpose.msra.mxu0 %v3738
      %3769 = vmatpush.bf16.xpose.msra.mxu0 %v3736
      %3770 = vmatpush.bf16.xpose.msra.mxu0 %v3734
      %3771 = vmatpush.bf16.xpose.msra.mxu0 %v3732
      %3772 = vmatpush.bf16.xpose.msra.mxu0 %v3730
      %3773 = vmatpush.bf16.xpose.msra.mxu0 %v3728
      %3774 = vmatpush.bf16.xpose.msra.mxu0 %v3726
      %3775 = vmatpush.bf16.xpose.msra.mxu0 %v3724
      %3776 = vmatmul.bf16.gmra.mxu0 %v3000
      %v3777 = vpop.f32.mrf.mxu0
      %v3778 = vadd.f32 0.0, %v3777
      %v3779 = vpop.f32.mrf.mxu0
      %v3780 = vadd.f32 0.0, %v3779
      %3781 = vdwg.mxu0
      %3782 = vmatpush.bf16.xpose.msra.mxu0 %v3739
      %3783 = vmatpush.bf16.xpose.msra.mxu0 %v3737
      %3784 = vmatpush.bf16.xpose.msra.mxu0 %v3735
      %3785 = vmatpush.bf16.xpose.msra.mxu0 %v3733
      %3786 = vmatpush.bf16.xpose.msra.mxu0 %v3731
      %3787 = vmatpush.bf16.xpose.msra.mxu0 %v3729
      %3788 = vmatpush.bf16.xpose.msra.mxu0 %v3727
      %3789 = vmatpush.bf16.xpose.msra.mxu0 %v3725
      %3790 = vmatmul.bf16.gmra.mxu0 %v3001
      %v3791 = vpop.f32.mrf.mxu0
      %v3792 = vadd.f32 %v3778, %v3791
      %v3793 = vpop.f32.mrf.mxu0
      %v3794 = vadd.f32 %v3780, %v3793
      %3795 = vdwg.mxu0
      %3796 = vxpose.xlu0.b32.start [1/16] %v1048, 128
      %3797 = vxpose.xlu0.b32.cont [2/16] %v1050, 128
      %3798 = vxpose.xlu0.b32.cont [3/16] 0.0, 128
      %3799 = vxpose.xlu0.b32.cont [4/16] 0.0, 128
      %3800 = vxpose.xlu0.b32.cont [5/16] 0.0, 128
      %3801 = vxpose.xlu0.b32.cont [6/16] 0.0, 128
      %3802 = vxpose.xlu0.b32.cont [7/16] 0.0, 128
      %3803 = vxpose.xlu0.b32.cont [8/16] 0.0, 128
      %3804 = vxpose.xlu0.b32.cont [9/16] 0.0, 128
      %3805 = vxpose.xlu0.b32.cont [10/16] 0.0, 128
      %3806 = vxpose.xlu0.b32.cont [11/16] 0.0, 128
      %3807 = vxpose.xlu0.b32.cont [12/16] 0.0, 128
      %3808 = vxpose.xlu0.b32.cont [13/16] 0.0, 128
      %3809 = vxpose.xlu0.b32.cont [14/16] 0.0, 128
      %3810 = vxpose.xlu0.b32.cont [15/16] 0.0, 128
      %3811 = vxpose.xlu0.b32.end [16/16] 0.0, 128
      %v3812 = vpop.trf.xlu0
      %v3813 = vpop.trf.xlu0
      %v3814 = vpop.trf.xlu0
      %v3815 = vpop.trf.xlu0
      %v3816 = vpop.trf.xlu0
      %v3817 = vpop.trf.xlu0
      %v3818 = vpop.trf.xlu0
      %v3819 = vpop.trf.xlu0
      %v3820 = vpop.trf.xlu0
      %v3821 = vpop.trf.xlu0
      %v3822 = vpop.trf.xlu0
      %v3823 = vpop.trf.xlu0
      %v3824 = vpop.trf.xlu0
      %v3825 = vpop.trf.xlu0
      %v3826 = vpop.trf.xlu0
      %v3827 = vpop.trf.xlu0
      %3828 = vxpose.xlu0.b32.start [1/16] %v1117, 128
      %3829 = vxpose.xlu0.b32.cont [2/16] %v1119, 128
      %3830 = vxpose.xlu0.b32.cont [3/16] 0.0, 128
      %3831 = vxpose.xlu0.b32.cont [4/16] 0.0, 128
      %3832 = vxpose.xlu0.b32.cont [5/16] 0.0, 128
      %3833 = vxpose.xlu0.b32.cont [6/16] 0.0, 128
      %3834 = vxpose.xlu0.b32.cont [7/16] 0.0, 128
      %3835 = vxpose.xlu0.b32.cont [8/16] 0.0, 128
      %3836 = vxpose.xlu0.b32.cont [9/16] 0.0, 128
      %3837 = vxpose.xlu0.b32.cont [10/16] 0.0, 128
      %3838 = vxpose.xlu0.b32.cont [11/16] 0.0, 128
      %3839 = vxpose.xlu0.b32.cont [12/16] 0.0, 128
      %3840 = vxpose.xlu0.b32.cont [13/16] 0.0, 128
      %3841 = vxpose.xlu0.b32.cont [14/16] 0.0, 128
      %3842 = vxpose.xlu0.b32.cont [15/16] 0.0, 128
      %3843 = vxpose.xlu0.b32.end [16/16] 0.0, 128
      %v3844 = vpop.trf.xlu0
      %v3845 = vpop.trf.xlu0
      %v3846 = vpop.trf.xlu0
      %v3847 = vpop.trf.xlu0
      %v3848 = vpop.trf.xlu0
      %v3849 = vpop.trf.xlu0
      %v3850 = vpop.trf.xlu0
      %v3851 = vpop.trf.xlu0
      %v3852 = vpop.trf.xlu0
      %v3853 = vpop.trf.xlu0
      %v3854 = vpop.trf.xlu0
      %v3855 = vpop.trf.xlu0
      %v3856 = vpop.trf.xlu0
      %v3857 = vpop.trf.xlu0
      %v3858 = vpop.trf.xlu0
      %v3859 = vpop.trf.xlu0
      %v3860 = vpack.c.bf16 %v3813, %v3812
      %v3861 = vpack.c.bf16 %v3815, %v3814
      %v3862 = vpack.c.bf16 %v3817, %v3816
      %v3863 = vpack.c.bf16 %v3819, %v3818
      %v3864 = vpack.c.bf16 %v3821, %v3820
      %v3865 = vpack.c.bf16 %v3823, %v3822
      %v3866 = vpack.c.bf16 %v3825, %v3824
      %v3867 = vpack.c.bf16 %v3827, %v3826
      %v3868 = vpack.c.bf16 %v3845, %v3844
      %v3869 = vpack.c.bf16 %v3847, %v3846
      %v3870 = vpack.c.bf16 %v3849, %v3848
      %v3871 = vpack.c.bf16 %v3851, %v3850
      %v3872 = vpack.c.bf16 %v3853, %v3852
      %v3873 = vpack.c.bf16 %v3855, %v3854
      %v3874 = vpack.c.bf16 %v3857, %v3856
      %v3875 = vpack.c.bf16 %v3859, %v3858
      %v3876 = vpack.c.bf16 %v1070, %v1068
      %v3877 = vpack.c.bf16 %v1139, %v1137
      %v3878 = vpack.c.bf16 %v1090, %v1088
      %v3879 = vpack.c.bf16 %v1159, %v1157
      %v3881 = vsel %vm1245, %v3860, 0
      %v3884 = vsel %vm1245, %v3861, 0
      %v3887 = vsel %vm1245, %v3862, 0
      %v3890 = vsel %vm1245, %v3863, 0
      %v3893 = vsel %vm1245, %v3864, 0
      %v3896 = vsel %vm1245, %v3865, 0
      %v3899 = vsel %vm1245, %v3866, 0
      %v3902 = vsel %vm1245, %v3867, 0
      %v3905 = vsel %vm1245, %v3868, 0
      %v3908 = vsel %vm1245, %v3869, 0
      %v3911 = vsel %vm1245, %v3870, 0
      %v3914 = vsel %vm1245, %v3871, 0
      %v3917 = vsel %vm1245, %v3872, 0
      %v3920 = vsel %vm1245, %v3873, 0
      %v3923 = vsel %vm1245, %v3874, 0
      %v3926 = vsel %vm1245, %v3875, 0
      %3928 = vmatpush.bf16.msra.mxu0 0
      %3929 = vmatpush.bf16.msra.mxu0 0
      %3930 = vmatpush.bf16.msra.mxu0 0
      %3931 = vmatpush.bf16.msra.mxu0 0
      %3932 = vmatpush.bf16.msra.mxu0 0
      %3933 = vmatpush.bf16.msra.mxu0 0
      %3934 = vmatpush.bf16.msra.mxu0 0
      %3935 = vmatpush.bf16.msra.mxu0 %v3876
      %3936 = vmatmul.bf16.gmra.mxu0 %v3881
      %v3937 = vpop.f32.mrf.mxu0
      %v3938 = vadd.f32 0.0, %v3937
      %v3939 = vpop.f32.mrf.mxu0
      %v3940 = vadd.f32 0.0, %v3939
      %3941 = vmatmul.bf16.gmra.mxu0 %v3884
      %v3942 = vpop.f32.mrf.mxu0
      %v3943 = vadd.f32 0.0, %v3942
      %v3944 = vpop.f32.mrf.mxu0
      %v3945 = vadd.f32 0.0, %v3944
      %3946 = vmatmul.bf16.gmra.mxu0 %v3887
      %v3947 = vpop.f32.mrf.mxu0
      %v3948 = vadd.f32 0.0, %v3947
      %v3949 = vpop.f32.mrf.mxu0
      %v3950 = vadd.f32 0.0, %v3949
      %3951 = vmatmul.bf16.gmra.mxu0 %v3890
      %v3952 = vpop.f32.mrf.mxu0
      %v3953 = vadd.f32 0.0, %v3952
      %v3954 = vpop.f32.mrf.mxu0
      %v3955 = vadd.f32 0.0, %v3954
      %3956 = vmatmul.bf16.gmra.mxu0 %v3893
      %v3957 = vpop.f32.mrf.mxu0
      %v3958 = vadd.f32 0.0, %v3957
      %v3959 = vpop.f32.mrf.mxu0
      %v3960 = vadd.f32 0.0, %v3959
      %3961 = vmatmul.bf16.gmra.mxu0 %v3896
      %v3962 = vpop.f32.mrf.mxu0
      %v3963 = vadd.f32 0.0, %v3962
      %v3964 = vpop.f32.mrf.mxu0
      %v3965 = vadd.f32 0.0, %v3964
      %3966 = vmatmul.bf16.gmra.mxu0 %v3899
      %v3967 = vpop.f32.mrf.mxu0
      %v3968 = vadd.f32 0.0, %v3967
      %v3969 = vpop.f32.mrf.mxu0
      %v3970 = vadd.f32 0.0, %v3969
      %3971 = vmatmul.bf16.gmra.mxu0 %v3902
      %v3972 = vpop.f32.mrf.mxu0
      %v3973 = vadd.f32 0.0, %v3972
      %v3974 = vpop.f32.mrf.mxu0
      %v3975 = vadd.f32 0.0, %v3974
      %3976 = vmatmul.bf16.gmra.mxu0 %v3905
      %v3977 = vpop.f32.mrf.mxu0
      %v3978 = vadd.f32 0.0, %v3977
      %v3979 = vpop.f32.mrf.mxu0
      %v3980 = vadd.f32 0.0, %v3979
      %3981 = vmatmul.bf16.gmra.mxu0 %v3908
      %v3982 = vpop.f32.mrf.mxu0
      %v3983 = vadd.f32 0.0, %v3982
      %v3984 = vpop.f32.mrf.mxu0
      %v3985 = vadd.f32 0.0, %v3984
      %3986 = vmatmul.bf16.gmra.mxu0 %v3911
      %v3987 = vpop.f32.mrf.mxu0
      %v3988 = vadd.f32 0.0, %v3987
      %v3989 = vpop.f32.mrf.mxu0
      %v3990 = vadd.f32 0.0, %v3989
      %3991 = vmatmul.bf16.gmra.mxu0 %v3914
      %v3992 = vpop.f32.mrf.mxu0
      %v3993 = vadd.f32 0.0, %v3992
      %v3994 = vpop.f32.mrf.mxu0
      %v3995 = vadd.f32 0.0, %v3994
      %3996 = vmatmul.bf16.gmra.mxu0 %v3917
      %v3997 = vpop.f32.mrf.mxu0
      %v3998 = vadd.f32 0.0, %v3997
      %v3999 = vpop.f32.mrf.mxu0
      %v4000 = vadd.f32 0.0, %v3999
      %4001 = vmatmul.bf16.gmra.mxu0 %v3920
      %v4002 = vpop.f32.mrf.mxu0
      %v4003 = vadd.f32 0.0, %v4002
      %v4004 = vpop.f32.mrf.mxu0
      %v4005 = vadd.f32 0.0, %v4004
      %4006 = vmatmul.bf16.gmra.mxu0 %v3923
      %v4007 = vpop.f32.mrf.mxu0
      %v4008 = vadd.f32 0.0, %v4007
      %v4009 = vpop.f32.mrf.mxu0
      %v4010 = vadd.f32 0.0, %v4009
      %4011 = vmatmul.bf16.gmra.mxu0 %v3926
      %v4012 = vpop.f32.mrf.mxu0
      %v4013 = vadd.f32 0.0, %v4012
      %v4014 = vpop.f32.mrf.mxu0
      %v4015 = vadd.f32 0.0, %v4014
      %4016 = vdwg.mxu0
      %4017 = vmatpush.bf16.msra.mxu0 0
      %4018 = vmatpush.bf16.msra.mxu0 0
      %4019 = vmatpush.bf16.msra.mxu0 0
      %4020 = vmatpush.bf16.msra.mxu0 0
      %4021 = vmatpush.bf16.msra.mxu0 0
      %4022 = vmatpush.bf16.msra.mxu0 0
      %4023 = vmatpush.bf16.msra.mxu0 0
      %4024 = vmatpush.bf16.msra.mxu0 %v3877
      %4025 = vmatmul.bf16.gmra.mxu0 %v3881
      %v4026 = vpop.f32.mrf.mxu0
      %v4027 = vadd.f32 0.0, %v4026
      %v4028 = vpop.f32.mrf.mxu0
      %v4029 = vadd.f32 0.0, %v4028
      %4030 = vmatmul.bf16.gmra.mxu0 %v3884
      %v4031 = vpop.f32.mrf.mxu0
      %v4032 = vadd.f32 0.0, %v4031
      %v4033 = vpop.f32.mrf.mxu0
      %v4034 = vadd.f32 0.0, %v4033
      %4035 = vmatmul.bf16.gmra.mxu0 %v3887
      %v4036 = vpop.f32.mrf.mxu0
      %v4037 = vadd.f32 0.0, %v4036
      %v4038 = vpop.f32.mrf.mxu0
      %v4039 = vadd.f32 0.0, %v4038
      %4040 = vmatmul.bf16.gmra.mxu0 %v3890
      %v4041 = vpop.f32.mrf.mxu0
      %v4042 = vadd.f32 0.0, %v4041
      %v4043 = vpop.f32.mrf.mxu0
      %v4044 = vadd.f32 0.0, %v4043
      %4045 = vmatmul.bf16.gmra.mxu0 %v3893
      %v4046 = vpop.f32.mrf.mxu0
      %v4047 = vadd.f32 0.0, %v4046
      %v4048 = vpop.f32.mrf.mxu0
      %v4049 = vadd.f32 0.0, %v4048
      %4050 = vmatmul.bf16.gmra.mxu0 %v3896
      %v4051 = vpop.f32.mrf.mxu0
      %v4052 = vadd.f32 0.0, %v4051
      %v4053 = vpop.f32.mrf.mxu0
      %v4054 = vadd.f32 0.0, %v4053
      %4055 = vmatmul.bf16.gmra.mxu0 %v3899
      %v4056 = vpop.f32.mrf.mxu0
      %v4057 = vadd.f32 0.0, %v4056
      %v4058 = vpop.f32.mrf.mxu0
      %v4059 = vadd.f32 0.0, %v4058
      %4060 = vmatmul.bf16.gmra.mxu0 %v3902
      %v4061 = vpop.f32.mrf.mxu0
      %v4062 = vadd.f32 0.0, %v4061
      %v4063 = vpop.f32.mrf.mxu0
      %v4064 = vadd.f32 0.0, %v4063
      %4065 = vmatmul.bf16.gmra.mxu0 %v3905
      %v4066 = vpop.f32.mrf.mxu0
      %v4067 = vadd.f32 0.0, %v4066
      %v4068 = vpop.f32.mrf.mxu0
      %v4069 = vadd.f32 0.0, %v4068
      %4070 = vmatmul.bf16.gmra.mxu0 %v3908
      %v4071 = vpop.f32.mrf.mxu0
      %v4072 = vadd.f32 0.0, %v4071
      %v4073 = vpop.f32.mrf.mxu0
      %v4074 = vadd.f32 0.0, %v4073
      %4075 = vmatmul.bf16.gmra.mxu0 %v3911
      %v4076 = vpop.f32.mrf.mxu0
      %v4077 = vadd.f32 0.0, %v4076
      %v4078 = vpop.f32.mrf.mxu0
      %v4079 = vadd.f32 0.0, %v4078
      %4080 = vmatmul.bf16.gmra.mxu0 %v3914
      %v4081 = vpop.f32.mrf.mxu0
      %v4082 = vadd.f32 0.0, %v4081
      %v4083 = vpop.f32.mrf.mxu0
      %v4084 = vadd.f32 0.0, %v4083
      %4085 = vmatmul.bf16.gmra.mxu0 %v3917
      %v4086 = vpop.f32.mrf.mxu0
      %v4087 = vadd.f32 0.0, %v4086
      %v4088 = vpop.f32.mrf.mxu0
      %v4089 = vadd.f32 0.0, %v4088
      %4090 = vmatmul.bf16.gmra.mxu0 %v3920
      %v4091 = vpop.f32.mrf.mxu0
      %v4092 = vadd.f32 0.0, %v4091
      %v4093 = vpop.f32.mrf.mxu0
      %v4094 = vadd.f32 0.0, %v4093
      %4095 = vmatmul.bf16.gmra.mxu0 %v3923
      %v4096 = vpop.f32.mrf.mxu0
      %v4097 = vadd.f32 0.0, %v4096
      %v4098 = vpop.f32.mrf.mxu0
      %v4099 = vadd.f32 0.0, %v4098
      %4100 = vmatmul.bf16.gmra.mxu0 %v3926
      %v4101 = vpop.f32.mrf.mxu0
      %v4102 = vadd.f32 0.0, %v4101
      %v4103 = vpop.f32.mrf.mxu0
      %v4104 = vadd.f32 0.0, %v4103
      %4105 = vdwg.mxu0
      %v4106 = vmax.f32 %v3938, %v4027
      %4107 = vmax.xlane.f32.xlu0 %v4106
      %v4108 = vpop.xlane.xlu0 %4107
      %v4109 = vmax.f32 %v3940, %v4029
      %4110 = vmax.xlane.f32.xlu0 %v4109
      %v4111 = vpop.xlane.xlu0 %4110
      %v4112 = vmax.f32 %v3943, %v4032
      %4113 = vmax.xlane.f32.xlu0 %v4112
      %v4114 = vpop.xlane.xlu0 %4113
      %v4115 = vmax.f32 %v3945, %v4034
      %4116 = vmax.xlane.f32.xlu0 %v4115
      %v4117 = vpop.xlane.xlu0 %4116
      %v4118 = vmax.f32 %v3948, %v4037
      %4119 = vmax.xlane.f32.xlu0 %v4118
      %v4120 = vpop.xlane.xlu0 %4119
      %v4121 = vmax.f32 %v3950, %v4039
      %4122 = vmax.xlane.f32.xlu0 %v4121
      %v4123 = vpop.xlane.xlu0 %4122
      %v4124 = vmax.f32 %v3953, %v4042
      %4125 = vmax.xlane.f32.xlu0 %v4124
      %v4126 = vpop.xlane.xlu0 %4125
      %v4127 = vmax.f32 %v3955, %v4044
      %4128 = vmax.xlane.f32.xlu0 %v4127
      %v4129 = vpop.xlane.xlu0 %4128
      %v4130 = vmax.f32 %v3958, %v4047
      %4131 = vmax.xlane.f32.xlu0 %v4130
      %v4132 = vpop.xlane.xlu0 %4131
      %v4133 = vmax.f32 %v3960, %v4049
      %4134 = vmax.xlane.f32.xlu0 %v4133
      %v4135 = vpop.xlane.xlu0 %4134
      %v4136 = vmax.f32 %v3963, %v4052
      %4137 = vmax.xlane.f32.xlu0 %v4136
      %v4138 = vpop.xlane.xlu0 %4137
      %v4139 = vmax.f32 %v3965, %v4054
      %4140 = vmax.xlane.f32.xlu0 %v4139
      %v4141 = vpop.xlane.xlu0 %4140
      %v4142 = vmax.f32 %v3968, %v4057
      %4143 = vmax.xlane.f32.xlu0 %v4142
      %v4144 = vpop.xlane.xlu0 %4143
      %v4145 = vmax.f32 %v3970, %v4059
      %4146 = vmax.xlane.f32.xlu0 %v4145
      %v4147 = vpop.xlane.xlu0 %4146
      %v4148 = vmax.f32 %v3973, %v4062
      %4149 = vmax.xlane.f32.xlu0 %v4148
      %v4150 = vpop.xlane.xlu0 %4149
      %v4151 = vmax.f32 %v3975, %v4064
      %4152 = vmax.xlane.f32.xlu0 %v4151
      %v4153 = vpop.xlane.xlu0 %4152
      %v4154 = vmax.f32 %v3978, %v4067
      %4155 = vmax.xlane.f32.xlu0 %v4154
      %v4156 = vpop.xlane.xlu0 %4155
      %v4157 = vmax.f32 %v3980, %v4069
      %4158 = vmax.xlane.f32.xlu0 %v4157
      %v4159 = vpop.xlane.xlu0 %4158
      %v4160 = vmax.f32 %v3983, %v4072
      %4161 = vmax.xlane.f32.xlu0 %v4160
      %v4162 = vpop.xlane.xlu0 %4161
      %v4163 = vmax.f32 %v3985, %v4074
      %4164 = vmax.xlane.f32.xlu0 %v4163
      %v4165 = vpop.xlane.xlu0 %4164
      %v4166 = vmax.f32 %v3988, %v4077
      %4167 = vmax.xlane.f32.xlu0 %v4166
      %v4168 = vpop.xlane.xlu0 %4167
      %v4169 = vmax.f32 %v3990, %v4079
      %4170 = vmax.xlane.f32.xlu0 %v4169
      %v4171 = vpop.xlane.xlu0 %4170
      %v4172 = vmax.f32 %v3993, %v4082
      %4173 = vmax.xlane.f32.xlu0 %v4172
      %v4174 = vpop.xlane.xlu0 %4173
      %v4175 = vmax.f32 %v3995, %v4084
      %4176 = vmax.xlane.f32.xlu0 %v4175
      %v4177 = vpop.xlane.xlu0 %4176
      %v4178 = vmax.f32 %v3998, %v4087
      %4179 = vmax.xlane.f32.xlu0 %v4178
      %v4180 = vpop.xlane.xlu0 %4179
      %v4181 = vmax.f32 %v4000, %v4089
      %4182 = vmax.xlane.f32.xlu0 %v4181
      %v4183 = vpop.xlane.xlu0 %4182
      %v4184 = vmax.f32 %v4003, %v4092
      %4185 = vmax.xlane.f32.xlu0 %v4184
      %v4186 = vpop.xlane.xlu0 %4185
      %v4187 = vmax.f32 %v4005, %v4094
      %4188 = vmax.xlane.f32.xlu0 %v4187
      %v4189 = vpop.xlane.xlu0 %4188
      %v4190 = vmax.f32 %v4008, %v4097
      %4191 = vmax.xlane.f32.xlu0 %v4190
      %v4192 = vpop.xlane.xlu0 %4191
      %v4193 = vmax.f32 %v4010, %v4099
      %4194 = vmax.xlane.f32.xlu0 %v4193
      %v4195 = vpop.xlane.xlu0 %4194
      %v4196 = vmax.f32 %v4013, %v4102
      %4197 = vmax.xlane.f32.xlu0 %v4196
      %v4198 = vpop.xlane.xlu0 %4197
      %v4199 = vmax.f32 %v4015, %v4104
      %4200 = vmax.xlane.f32.xlu0 %v4199
      %v4201 = vpop.xlane.xlu0 %4200
      %v4202 = vsub.f32 %v3938, %v4108
      %v4203 = vsub.f32 %v4027, %v4108
      %v4204 = vsub.f32 %v3940, %v4111
      %v4205 = vsub.f32 %v4029, %v4111
      %v4206 = vsub.f32 %v3943, %v4114
      %v4207 = vsub.f32 %v4032, %v4114
      %v4208 = vsub.f32 %v3945, %v4117
      %v4209 = vsub.f32 %v4034, %v4117
      %v4210 = vsub.f32 %v3948, %v4120
      %v4211 = vsub.f32 %v4037, %v4120
      %v4212 = vsub.f32 %v3950, %v4123
      %v4213 = vsub.f32 %v4039, %v4123
      %v4214 = vsub.f32 %v3953, %v4126
      %v4215 = vsub.f32 %v4042, %v4126
      %v4216 = vsub.f32 %v3955, %v4129
      %v4217 = vsub.f32 %v4044, %v4129
      %v4218 = vsub.f32 %v3958, %v4132
      %v4219 = vsub.f32 %v4047, %v4132
      %v4220 = vsub.f32 %v3960, %v4135
      %v4221 = vsub.f32 %v4049, %v4135
      %v4222 = vsub.f32 %v3963, %v4138
      %v4223 = vsub.f32 %v4052, %v4138
      %v4224 = vsub.f32 %v3965, %v4141
      %v4225 = vsub.f32 %v4054, %v4141
      %v4226 = vsub.f32 %v3968, %v4144
      %v4227 = vsub.f32 %v4057, %v4144
      %v4228 = vsub.f32 %v3970, %v4147
      %v4229 = vsub.f32 %v4059, %v4147
      %v4230 = vsub.f32 %v3973, %v4150
      %v4231 = vsub.f32 %v4062, %v4150
      %v4232 = vsub.f32 %v3975, %v4153
      %v4233 = vsub.f32 %v4064, %v4153
      %v4234 = vsub.f32 %v3978, %v4156
      %v4235 = vsub.f32 %v4067, %v4156
      %v4236 = vsub.f32 %v3980, %v4159
      %v4237 = vsub.f32 %v4069, %v4159
      %v4238 = vsub.f32 %v3983, %v4162
      %v4239 = vsub.f32 %v4072, %v4162
      %v4240 = vsub.f32 %v3985, %v4165
      %v4241 = vsub.f32 %v4074, %v4165
      %v4242 = vsub.f32 %v3988, %v4168
      %v4243 = vsub.f32 %v4077, %v4168
      %v4244 = vsub.f32 %v3990, %v4171
      %v4245 = vsub.f32 %v4079, %v4171
      %v4246 = vsub.f32 %v3993, %v4174
      %v4247 = vsub.f32 %v4082, %v4174
      %v4248 = vsub.f32 %v3995, %v4177
      %v4249 = vsub.f32 %v4084, %v4177
      %v4250 = vsub.f32 %v3998, %v4180
      %v4251 = vsub.f32 %v4087, %v4180
      %v4252 = vsub.f32 %v4000, %v4183
      %v4253 = vsub.f32 %v4089, %v4183
      %v4254 = vsub.f32 %v4003, %v4186
      %v4255 = vsub.f32 %v4092, %v4186
      %v4256 = vsub.f32 %v4005, %v4189
      %v4257 = vsub.f32 %v4094, %v4189
      %v4258 = vsub.f32 %v4008, %v4192
      %v4259 = vsub.f32 %v4097, %v4192
      %v4260 = vsub.f32 %v4010, %v4195
      %v4261 = vsub.f32 %v4099, %v4195
      %v4262 = vsub.f32 %v4013, %v4198
      %v4263 = vsub.f32 %v4102, %v4198
      %v4264 = vsub.f32 %v4015, %v4201
      %v4265 = vsub.f32 %v4104, %v4201
      %v4266 = vmul.f32 %v4202, 1.442695
      %v4267 = vpow.pop %v4266
      %v4268 = vmul.f32 %v4203, 1.442695
      %v4269 = vpow.pop %v4268
      %v4270 = vmul.f32 %v4204, 1.442695
      %v4271 = vpow.pop %v4270
      %v4272 = vmul.f32 %v4205, 1.442695
      %v4273 = vpow.pop %v4272
      %v4274 = vmul.f32 %v4206, 1.442695
      %v4275 = vpow.pop %v4274
      %v4276 = vmul.f32 %v4207, 1.442695
      %v4277 = vpow.pop %v4276
      %v4278 = vmul.f32 %v4208, 1.442695
      %v4279 = vpow.pop %v4278
      %v4280 = vmul.f32 %v4209, 1.442695
      %v4281 = vpow.pop %v4280
      %v4282 = vmul.f32 %v4210, 1.442695
      %v4283 = vpow.pop %v4282
      %v4284 = vmul.f32 %v4211, 1.442695
      %v4285 = vpow.pop %v4284
      %v4286 = vmul.f32 %v4212, 1.442695
      %v4287 = vpow.pop %v4286
      %v4288 = vmul.f32 %v4213, 1.442695
      %v4289 = vpow.pop %v4288
      %v4290 = vmul.f32 %v4214, 1.442695
      %v4291 = vpow.pop %v4290
      %v4292 = vmul.f32 %v4215, 1.442695
      %v4293 = vpow.pop %v4292
      %v4294 = vmul.f32 %v4216, 1.442695
      %v4295 = vpow.pop %v4294
      %v4296 = vmul.f32 %v4217, 1.442695
      %v4297 = vpow.pop %v4296
      %v4298 = vmul.f32 %v4218, 1.442695
      %v4299 = vpow.pop %v4298
      %v4300 = vmul.f32 %v4219, 1.442695
      %v4301 = vpow.pop %v4300
      %v4302 = vmul.f32 %v4220, 1.442695
      %v4303 = vpow.pop %v4302
      %v4304 = vmul.f32 %v4221, 1.442695
      %v4305 = vpow.pop %v4304
      %v4306 = vmul.f32 %v4222, 1.442695
      %v4307 = vpow.pop %v4306
      %v4308 = vmul.f32 %v4223, 1.442695
      %v4309 = vpow.pop %v4308
      %v4310 = vmul.f32 %v4224, 1.442695
      %v4311 = vpow.pop %v4310
      %v4312 = vmul.f32 %v4225, 1.442695
      %v4313 = vpow.pop %v4312
      %v4314 = vmul.f32 %v4226, 1.442695
      %v4315 = vpow.pop %v4314
      %v4316 = vmul.f32 %v4227, 1.442695
      %v4317 = vpow.pop %v4316
      %v4318 = vmul.f32 %v4228, 1.442695
      %v4319 = vpow.pop %v4318
      %v4320 = vmul.f32 %v4229, 1.442695
      %v4321 = vpow.pop %v4320
      %v4322 = vmul.f32 %v4230, 1.442695
      %v4323 = vpow.pop %v4322
      %v4324 = vmul.f32 %v4231, 1.442695
      %v4325 = vpow.pop %v4324
      %v4326 = vmul.f32 %v4232, 1.442695
      %v4327 = vpow.pop %v4326
      %v4328 = vmul.f32 %v4233, 1.442695
      %v4329 = vpow.pop %v4328
      %v4330 = vmul.f32 %v4234, 1.442695
      %v4331 = vpow.pop %v4330
      %v4332 = vmul.f32 %v4235, 1.442695
      %v4333 = vpow.pop %v4332
      %v4334 = vmul.f32 %v4236, 1.442695
      %v4335 = vpow.pop %v4334
      %v4336 = vmul.f32 %v4237, 1.442695
      %v4337 = vpow.pop %v4336
      %v4338 = vmul.f32 %v4238, 1.442695
      %v4339 = vpow.pop %v4338
      %v4340 = vmul.f32 %v4239, 1.442695
      %v4341 = vpow.pop %v4340
      %v4342 = vmul.f32 %v4240, 1.442695
      %v4343 = vpow.pop %v4342
      %v4344 = vmul.f32 %v4241, 1.442695
      %v4345 = vpow.pop %v4344
      %v4346 = vmul.f32 %v4242, 1.442695
      %v4347 = vpow.pop %v4346
      %v4348 = vmul.f32 %v4243, 1.442695
      %v4349 = vpow.pop %v4348
      %v4350 = vmul.f32 %v4244, 1.442695
      %v4351 = vpow.pop %v4350
      %v4352 = vmul.f32 %v4245, 1.442695
      %v4353 = vpow.pop %v4352
      %v4354 = vmul.f32 %v4246, 1.442695
      %v4355 = vpow.pop %v4354
      %v4356 = vmul.f32 %v4247, 1.442695
      %v4357 = vpow.pop %v4356
      %v4358 = vmul.f32 %v4248, 1.442695
      %v4359 = vpow.pop %v4358
      %v4360 = vmul.f32 %v4249, 1.442695
      %v4361 = vpow.pop %v4360
      %v4362 = vmul.f32 %v4250, 1.442695
      %v4363 = vpow.pop %v4362
      %v4364 = vmul.f32 %v4251, 1.442695
      %v4365 = vpow.pop %v4364
      %v4366 = vmul.f32 %v4252, 1.442695
      %v4367 = vpow.pop %v4366
      %v4368 = vmul.f32 %v4253, 1.442695
      %v4369 = vpow.pop %v4368
      %v4370 = vmul.f32 %v4254, 1.442695
      %v4371 = vpow.pop %v4370
      %v4372 = vmul.f32 %v4255, 1.442695
      %v4373 = vpow.pop %v4372
      %v4374 = vmul.f32 %v4256, 1.442695
      %v4375 = vpow.pop %v4374
      %v4376 = vmul.f32 %v4257, 1.442695
      %v4377 = vpow.pop %v4376
      %v4378 = vmul.f32 %v4258, 1.442695
      %v4379 = vpow.pop %v4378
      %v4380 = vmul.f32 %v4259, 1.442695
      %v4381 = vpow.pop %v4380
      %v4382 = vmul.f32 %v4260, 1.442695
      %v4383 = vpow.pop %v4382
      %v4384 = vmul.f32 %v4261, 1.442695
      %v4385 = vpow.pop %v4384
      %v4386 = vmul.f32 %v4262, 1.442695
      %v4387 = vpow.pop %v4386
      %v4388 = vmul.f32 %v4263, 1.442695
      %v4389 = vpow.pop %v4388
      %v4390 = vmul.f32 %v4264, 1.442695
      %v4391 = vpow.pop %v4390
      %v4392 = vmul.f32 %v4265, 1.442695
      %v4393 = vpow.pop %v4392
      %v4394 = vadd.f32 %v4267, %v4269
      %4395 = vadd.xlane.f32.xlu0 %v4394
      %v4396 = vpop.xlane.xlu0 %4395
      %v4397 = vadd.f32 %v4271, %v4273
      %4398 = vadd.xlane.f32.xlu0 %v4397
      %v4399 = vpop.xlane.xlu0 %4398
      %v4400 = vadd.f32 %v4275, %v4277
      %4401 = vadd.xlane.f32.xlu0 %v4400
      %v4402 = vpop.xlane.xlu0 %4401
      %v4403 = vadd.f32 %v4279, %v4281
      %4404 = vadd.xlane.f32.xlu0 %v4403
      %v4405 = vpop.xlane.xlu0 %4404
      %v4406 = vadd.f32 %v4283, %v4285
      %4407 = vadd.xlane.f32.xlu0 %v4406
      %v4408 = vpop.xlane.xlu0 %4407
      %v4409 = vadd.f32 %v4287, %v4289
      %4410 = vadd.xlane.f32.xlu0 %v4409
      %v4411 = vpop.xlane.xlu0 %4410
      %v4412 = vadd.f32 %v4291, %v4293
      %4413 = vadd.xlane.f32.xlu0 %v4412
      %v4414 = vpop.xlane.xlu0 %4413
      %v4415 = vadd.f32 %v4295, %v4297
      %4416 = vadd.xlane.f32.xlu0 %v4415
      %v4417 = vpop.xlane.xlu0 %4416
      %v4418 = vadd.f32 %v4299, %v4301
      %4419 = vadd.xlane.f32.xlu0 %v4418
      %v4420 = vpop.xlane.xlu0 %4419
      %v4421 = vadd.f32 %v4303, %v4305
      %4422 = vadd.xlane.f32.xlu0 %v4421
      %v4423 = vpop.xlane.xlu0 %4422
      %v4424 = vadd.f32 %v4307, %v4309
      %4425 = vadd.xlane.f32.xlu0 %v4424
      %v4426 = vpop.xlane.xlu0 %4425
      %v4427 = vadd.f32 %v4311, %v4313
      %4428 = vadd.xlane.f32.xlu0 %v4427
      %v4429 = vpop.xlane.xlu0 %4428
      %v4430 = vadd.f32 %v4315, %v4317
      %4431 = vadd.xlane.f32.xlu0 %v4430
      %v4432 = vpop.xlane.xlu0 %4431
      %v4433 = vadd.f32 %v4319, %v4321
      %4434 = vadd.xlane.f32.xlu0 %v4433
      %v4435 = vpop.xlane.xlu0 %4434
      %v4436 = vadd.f32 %v4323, %v4325
      %4437 = vadd.xlane.f32.xlu0 %v4436
      %v4438 = vpop.xlane.xlu0 %4437
      %v4439 = vadd.f32 %v4327, %v4329
      %4440 = vadd.xlane.f32.xlu0 %v4439
      %v4441 = vpop.xlane.xlu0 %4440
      %v4442 = vadd.f32 %v4331, %v4333
      %4443 = vadd.xlane.f32.xlu0 %v4442
      %v4444 = vpop.xlane.xlu0 %4443
      %v4445 = vadd.f32 %v4335, %v4337
      %4446 = vadd.xlane.f32.xlu0 %v4445
      %v4447 = vpop.xlane.xlu0 %4446
      %v4448 = vadd.f32 %v4339, %v4341
      %4449 = vadd.xlane.f32.xlu0 %v4448
      %v4450 = vpop.xlane.xlu0 %4449
      %v4451 = vadd.f32 %v4343, %v4345
      %4452 = vadd.xlane.f32.xlu0 %v4451
      %v4453 = vpop.xlane.xlu0 %4452
      %v4454 = vadd.f32 %v4347, %v4349
      %4455 = vadd.xlane.f32.xlu0 %v4454
      %v4456 = vpop.xlane.xlu0 %4455
      %v4457 = vadd.f32 %v4351, %v4353
      %4458 = vadd.xlane.f32.xlu0 %v4457
      %v4459 = vpop.xlane.xlu0 %4458
      %v4460 = vadd.f32 %v4355, %v4357
      %4461 = vadd.xlane.f32.xlu0 %v4460
      %v4462 = vpop.xlane.xlu0 %4461
      %v4463 = vadd.f32 %v4359, %v4361
      %4464 = vadd.xlane.f32.xlu0 %v4463
      %v4465 = vpop.xlane.xlu0 %4464
      %v4466 = vadd.f32 %v4363, %v4365
      %4467 = vadd.xlane.f32.xlu0 %v4466
      %v4468 = vpop.xlane.xlu0 %4467
      %v4469 = vadd.f32 %v4367, %v4369
      %4470 = vadd.xlane.f32.xlu0 %v4469
      %v4471 = vpop.xlane.xlu0 %4470
      %v4472 = vadd.f32 %v4371, %v4373
      %4473 = vadd.xlane.f32.xlu0 %v4472
      %v4474 = vpop.xlane.xlu0 %4473
      %v4475 = vadd.f32 %v4375, %v4377
      %4476 = vadd.xlane.f32.xlu0 %v4475
      %v4477 = vpop.xlane.xlu0 %4476
      %v4478 = vadd.f32 %v4379, %v4381
      %4479 = vadd.xlane.f32.xlu0 %v4478
      %v4480 = vpop.xlane.xlu0 %4479
      %v4481 = vadd.f32 %v4383, %v4385
      %4482 = vadd.xlane.f32.xlu0 %v4481
      %v4483 = vpop.xlane.xlu0 %4482
      %v4484 = vadd.f32 %v4387, %v4389
      %4485 = vadd.xlane.f32.xlu0 %v4484
      %v4486 = vpop.xlane.xlu0 %4485
      %v4487 = vadd.f32 %v4391, %v4393
      %4488 = vadd.xlane.f32.xlu0 %v4487
      %v4489 = vpop.xlane.xlu0 %4488
      %v4490 = vrcp.pop %v4396
      %v4491 = vrcp.pop %v4399
      %v4492 = vrcp.pop %v4402
      %v4493 = vrcp.pop %v4405
      %v4494 = vrcp.pop %v4408
      %v4495 = vrcp.pop %v4411
      %v4496 = vrcp.pop %v4414
      %v4497 = vrcp.pop %v4417
      %v4498 = vrcp.pop %v4420
      %v4499 = vrcp.pop %v4423
      %v4500 = vrcp.pop %v4426
      %v4501 = vrcp.pop %v4429
      %v4502 = vrcp.pop %v4432
      %v4503 = vrcp.pop %v4435
      %v4504 = vrcp.pop %v4438
      %v4505 = vrcp.pop %v4441
      %v4506 = vrcp.pop %v4444
      %v4507 = vrcp.pop %v4447
      %v4508 = vrcp.pop %v4450
      %v4509 = vrcp.pop %v4453
      %v4510 = vrcp.pop %v4456
      %v4511 = vrcp.pop %v4459
      %v4512 = vrcp.pop %v4462
      %v4513 = vrcp.pop %v4465
      %v4514 = vrcp.pop %v4468
      %v4515 = vrcp.pop %v4471
      %v4516 = vrcp.pop %v4474
      %v4517 = vrcp.pop %v4477
      %v4518 = vrcp.pop %v4480
      %v4519 = vrcp.pop %v4483
      %v4520 = vrcp.pop %v4486
      %v4521 = vrcp.pop %v4489
      %v4522 = vmul.f32 %v4267, %v4490
      %v4523 = vmul.f32 %v4269, %v4490
      %v4524 = vmul.f32 %v4271, %v4491
      %v4525 = vmul.f32 %v4273, %v4491
      %v4526 = vmul.f32 %v4275, %v4492
      %v4527 = vmul.f32 %v4277, %v4492
      %v4528 = vmul.f32 %v4279, %v4493
      %v4529 = vmul.f32 %v4281, %v4493
      %v4530 = vmul.f32 %v4283, %v4494
      %v4531 = vmul.f32 %v4285, %v4494
      %v4532 = vmul.f32 %v4287, %v4495
      %v4533 = vmul.f32 %v4289, %v4495
      %v4534 = vmul.f32 %v4291, %v4496
      %v4535 = vmul.f32 %v4293, %v4496
      %v4536 = vmul.f32 %v4295, %v4497
      %v4537 = vmul.f32 %v4297, %v4497
      %v4538 = vmul.f32 %v4299, %v4498
      %v4539 = vmul.f32 %v4301, %v4498
      %v4540 = vmul.f32 %v4303, %v4499
      %v4541 = vmul.f32 %v4305, %v4499
      %v4542 = vmul.f32 %v4307, %v4500
      %v4543 = vmul.f32 %v4309, %v4500
      %v4544 = vmul.f32 %v4311, %v4501
      %v4545 = vmul.f32 %v4313, %v4501
      %v4546 = vmul.f32 %v4315, %v4502
      %v4547 = vmul.f32 %v4317, %v4502
      %v4548 = vmul.f32 %v4319, %v4503
      %v4549 = vmul.f32 %v4321, %v4503
      %v4550 = vmul.f32 %v4323, %v4504
      %v4551 = vmul.f32 %v4325, %v4504
      %v4552 = vmul.f32 %v4327, %v4505
      %v4553 = vmul.f32 %v4329, %v4505
      %v4554 = vmul.f32 %v4331, %v4506
      %v4555 = vmul.f32 %v4333, %v4506
      %v4556 = vmul.f32 %v4335, %v4507
      %v4557 = vmul.f32 %v4337, %v4507
      %v4558 = vmul.f32 %v4339, %v4508
      %v4559 = vmul.f32 %v4341, %v4508
      %v4560 = vmul.f32 %v4343, %v4509
      %v4561 = vmul.f32 %v4345, %v4509
      %v4562 = vmul.f32 %v4347, %v4510
      %v4563 = vmul.f32 %v4349, %v4510
      %v4564 = vmul.f32 %v4351, %v4511
      %v4565 = vmul.f32 %v4353, %v4511
      %v4566 = vmul.f32 %v4355, %v4512
      %v4567 = vmul.f32 %v4357, %v4512
      %v4568 = vmul.f32 %v4359, %v4513
      %v4569 = vmul.f32 %v4361, %v4513
      %v4570 = vmul.f32 %v4363, %v4514
      %v4571 = vmul.f32 %v4365, %v4514
      %v4572 = vmul.f32 %v4367, %v4515
      %v4573 = vmul.f32 %v4369, %v4515
      %v4574 = vmul.f32 %v4371, %v4516
      %v4575 = vmul.f32 %v4373, %v4516
      %v4576 = vmul.f32 %v4375, %v4517
      %v4577 = vmul.f32 %v4377, %v4517
      %v4578 = vmul.f32 %v4379, %v4518
      %v4579 = vmul.f32 %v4381, %v4518
      %v4580 = vmul.f32 %v4383, %v4519
      %v4581 = vmul.f32 %v4385, %v4519
      %v4582 = vmul.f32 %v4387, %v4520
      %v4583 = vmul.f32 %v4389, %v4520
      %v4584 = vmul.f32 %v4391, %v4521
      %v4585 = vmul.f32 %v4393, %v4521
      %v4586 = vpack.c.bf16 %v4524, %v4522
      %v4587 = vpack.c.bf16 %v4525, %v4523
      %v4588 = vpack.c.bf16 %v4528, %v4526
      %v4589 = vpack.c.bf16 %v4529, %v4527
      %v4590 = vpack.c.bf16 %v4532, %v4530
      %v4591 = vpack.c.bf16 %v4533, %v4531
      %v4592 = vpack.c.bf16 %v4536, %v4534
      %v4593 = vpack.c.bf16 %v4537, %v4535
      %v4594 = vpack.c.bf16 %v4540, %v4538
      %v4595 = vpack.c.bf16 %v4541, %v4539
      %v4596 = vpack.c.bf16 %v4544, %v4542
      %v4597 = vpack.c.bf16 %v4545, %v4543
      %v4598 = vpack.c.bf16 %v4548, %v4546
      %v4599 = vpack.c.bf16 %v4549, %v4547
      %v4600 = vpack.c.bf16 %v4552, %v4550
      %v4601 = vpack.c.bf16 %v4553, %v4551
      %v4602 = vpack.c.bf16 %v4556, %v4554
      %v4603 = vpack.c.bf16 %v4557, %v4555
      %v4604 = vpack.c.bf16 %v4560, %v4558
      %v4605 = vpack.c.bf16 %v4561, %v4559
      %v4606 = vpack.c.bf16 %v4564, %v4562
      %v4607 = vpack.c.bf16 %v4565, %v4563
      %v4608 = vpack.c.bf16 %v4568, %v4566
      %v4609 = vpack.c.bf16 %v4569, %v4567
      %v4610 = vpack.c.bf16 %v4572, %v4570
      %v4611 = vpack.c.bf16 %v4573, %v4571
      %v4612 = vpack.c.bf16 %v4576, %v4574
      %v4613 = vpack.c.bf16 %v4577, %v4575
      %v4614 = vpack.c.bf16 %v4580, %v4578
      %v4615 = vpack.c.bf16 %v4581, %v4579
      %v4616 = vpack.c.bf16 %v4584, %v4582
      %v4617 = vpack.c.bf16 %v4585, %v4583
      %4618 = vmatpush.bf16.xpose.msra.mxu0 %v4600
      %4619 = vmatpush.bf16.xpose.msra.mxu0 %v4598
      %4620 = vmatpush.bf16.xpose.msra.mxu0 %v4596
      %4621 = vmatpush.bf16.xpose.msra.mxu0 %v4594
      %4622 = vmatpush.bf16.xpose.msra.mxu0 %v4592
      %4623 = vmatpush.bf16.xpose.msra.mxu0 %v4590
      %4624 = vmatpush.bf16.xpose.msra.mxu0 %v4588
      %4625 = vmatpush.bf16.xpose.msra.mxu0 %v4586
      %4626 = vmatmul.bf16.gmra.mxu0 %v3878
      %v4627 = vpop.f32.mrf.mxu0
      %v4628 = vadd.f32 0.0, %v4627
      %v4629 = vpop.f32.mrf.mxu0
      %v4630 = vadd.f32 0.0, %v4629
      %4631 = vdwg.mxu0
      %4632 = vmatpush.bf16.xpose.msra.mxu0 %v4601
      %4633 = vmatpush.bf16.xpose.msra.mxu0 %v4599
      %4634 = vmatpush.bf16.xpose.msra.mxu0 %v4597
      %4635 = vmatpush.bf16.xpose.msra.mxu0 %v4595
      %4636 = vmatpush.bf16.xpose.msra.mxu0 %v4593
      %4637 = vmatpush.bf16.xpose.msra.mxu0 %v4591
      %4638 = vmatpush.bf16.xpose.msra.mxu0 %v4589
      %4639 = vmatpush.bf16.xpose.msra.mxu0 %v4587
      %4640 = vmatmul.bf16.gmra.mxu0 %v3879
      %v4641 = vpop.f32.mrf.mxu0
      %v4642 = vadd.f32 %v4628, %v4641
      %v4643 = vpop.f32.mrf.mxu0
      %v4644 = vadd.f32 %v4630, %v4643
      %4645 = vdwg.mxu0
      %4646 = vmatpush.bf16.xpose.msra.mxu0 %v4616
      %4647 = vmatpush.bf16.xpose.msra.mxu0 %v4614
      %4648 = vmatpush.bf16.xpose.msra.mxu0 %v4612
      %4649 = vmatpush.bf16.xpose.msra.mxu0 %v4610
      %4650 = vmatpush.bf16.xpose.msra.mxu0 %v4608
      %4651 = vmatpush.bf16.xpose.msra.mxu0 %v4606
      %4652 = vmatpush.bf16.xpose.msra.mxu0 %v4604
      %4653 = vmatpush.bf16.xpose.msra.mxu0 %v4602
      %4654 = vmatmul.bf16.gmra.mxu0 %v3878
      %v4655 = vpop.f32.mrf.mxu0
      %v4656 = vadd.f32 0.0, %v4655
      %v4657 = vpop.f32.mrf.mxu0
      %v4658 = vadd.f32 0.0, %v4657
      %4659 = vdwg.mxu0
      %4660 = vmatpush.bf16.xpose.msra.mxu0 %v4617
      %4661 = vmatpush.bf16.xpose.msra.mxu0 %v4615
      %4662 = vmatpush.bf16.xpose.msra.mxu0 %v4613
      %4663 = vmatpush.bf16.xpose.msra.mxu0 %v4611
      %4664 = vmatpush.bf16.xpose.msra.mxu0 %v4609
      %4665 = vmatpush.bf16.xpose.msra.mxu0 %v4607
      %4666 = vmatpush.bf16.xpose.msra.mxu0 %v4605
      %4667 = vmatpush.bf16.xpose.msra.mxu0 %v4603
      %4668 = vmatmul.bf16.gmra.mxu0 %v3879
      %v4669 = vpop.f32.mrf.mxu0
      %v4670 = vadd.f32 %v4656, %v4669
      %v4671 = vpop.f32.mrf.mxu0
      %v4672 = vadd.f32 %v4658, %v4671
      %4673 = vdwg.mxu0
      %v4674 = vpack.c.bf16 %v2010, %v2008
      %v4675 = vpack.c.bf16 %v2038, %v2036
      %v4676 = vpack.c.bf16 %v2888, %v2886
      %v4677 = vpack.c.bf16 %v2916, %v2914
      %v4678 = vpack.c.bf16 %v3766, %v3764
      %v4679 = vpack.c.bf16 %v3794, %v3792
      %v4680 = vpack.c.bf16 %v4644, %v4642
      %v4681 = vpack.c.bf16 %v4672, %v4670
      %v4682 = vld [vmem:[%s5] sm:$0xf]
      %v4683 = vld [vmem:[%s5 + $0x4] sm:$0xf]
      %v4684 = vld [vmem:[%s5 + $0x8] sm:$0xf]
      %v4685 = vld [vmem:[%s5 + $0xc] sm:$0xf]
      %v4686 = vld [vmem:[%s5 + $0x10] sm:$0xf]
      %v4687 = vld [vmem:[%s5 + $0x14] sm:$0xf]
      %v4688 = vld [vmem:[%s5 + $0x18] sm:$0xf]
      %v4689 = vld [vmem:[%s5 + $0x1c] sm:$0xf]
      %v4690 = vld [vmem:[%s6] sm:$0xff]
      %v4691 = vld [vmem:[%s6 + $0x8] sm:$0xff]
      %v4692 = vld [vmem:[%s6 + $0x10] sm:$0xff]
      %v4693 = vld [vmem:[%s6 + $0x18] sm:$0xff]
      %v4694 = vld [vmem:[%s6 + $0x20] sm:$0xff]
      %v4695 = vld [vmem:[%s6 + $0x28] sm:$0xff]
      %v4696 = vld [vmem:[%s6 + $0x30] sm:$0xff]
      %v4697 = vld [vmem:[%s6 + $0x38] sm:$0xff]
      %4699 = vset.pattern.permute.xlu0 0
      %4700 = vperm.xlu0 %4699, %v4690
      %v4701 = vpop.permute.xlu0 %4700
      %4704 = vset.pattern.permute.xlu0 0
      %4705 = vperm.xlu0 %4704, %v4691
      %v4706 = vpop.permute.xlu0 %4705
      %4709 = vset.pattern.permute.xlu0 0
      %4710 = vperm.xlu0 %4709, %v4692
      %v4711 = vpop.permute.xlu0 %4710
      %4714 = vset.pattern.permute.xlu0 0
      %4715 = vperm.xlu0 %4714, %v4693
      %v4716 = vpop.permute.xlu0 %4715
      %4719 = vset.pattern.permute.xlu0 0
      %4720 = vperm.xlu0 %4719, %v4694
      %v4721 = vpop.permute.xlu0 %4720
      %4724 = vset.pattern.permute.xlu0 0
      %4725 = vperm.xlu0 %4724, %v4695
      %v4726 = vpop.permute.xlu0 %4725
      %4729 = vset.pattern.permute.xlu0 0
      %4730 = vperm.xlu0 %4729, %v4696
      %v4731 = vpop.permute.xlu0 %4730
      %4734 = vset.pattern.permute.xlu0 0
      %4735 = vperm.xlu0 %4734, %v4697
      %v4736 = vpop.permute.xlu0 %4735
      %v4746 = vunpack.c.l.b16 %v4682
      %v4747 = vunpack.c.l.b16 %v4683
      %v4748 = vunpack.c.l.b16 %v4684
      %v4749 = vunpack.c.l.b16 %v4685
      %v4750 = vunpack.c.l.b16 %v4686
      %v4751 = vunpack.c.l.b16 %v4687
      %v4752 = vunpack.c.l.b16 %v4688
      %v4753 = vunpack.c.l.b16 %v4689
      %v4754 = vpack.c.b16 %v4747, %v4746
      %v4755 = vpack.c.b16 %v4749, %v4748
      %v4756 = vpack.c.b16 %v4751, %v4750
      %v4757 = vpack.c.b16 %v4753, %v4752
      %v4759 = vsel %vm986, %v4754, 0
      %v4762 = vsel %vm986, %v4755, 0
      %v4765 = vsel %vm986, %v4756, 0
      %v4768 = vsel %vm986, %v4757, 0
      %4770 = vmatpush.bf16.msra.mxu0 0
      %4771 = vmatpush.bf16.msra.mxu0 0
      %4772 = vmatpush.bf16.msra.mxu0 0
      %4773 = vmatpush.bf16.msra.mxu0 0
      %4774 = vmatpush.bf16.msra.mxu0 %v4680
      %4775 = vmatpush.bf16.msra.mxu0 %v4678
      %4776 = vmatpush.bf16.msra.mxu0 %v4676
      %4777 = vmatpush.bf16.msra.mxu0 %v4674
      %4778 = vmatmul.bf16.gmra.mxu0 %v4759
      %v4779 = vpop.f32.mrf.mxu0
      %v4780 = vadd.f32 %v4701, %v4779
      %v4781 = vpop.f32.mrf.mxu0
      %v4782 = vadd.f32 %v4706, %v4781
      %4783 = vmatmul.bf16.gmra.mxu0 %v4762
      %v4784 = vpop.f32.mrf.mxu0
      %v4785 = vadd.f32 %v4711, %v4784
      %v4786 = vpop.f32.mrf.mxu0
      %v4787 = vadd.f32 %v4716, %v4786
      %4788 = vmatmul.bf16.gmra.mxu0 %v4765
      %v4789 = vpop.f32.mrf.mxu0
      %v4790 = vadd.f32 %v4721, %v4789
      %v4791 = vpop.f32.mrf.mxu0
      %v4792 = vadd.f32 %v4726, %v4791
      %4793 = vmatmul.bf16.gmra.mxu0 %v4768
      %v4794 = vpop.f32.mrf.mxu0
      %v4795 = vadd.f32 %v4731, %v4794
      %v4796 = vpop.f32.mrf.mxu0
      %v4797 = vadd.f32 %v4736, %v4796
      %4798 = vdwg.mxu0
      %4799 = vmatpush.bf16.msra.mxu0 0
      %4800 = vmatpush.bf16.msra.mxu0 0
      %4801 = vmatpush.bf16.msra.mxu0 0
      %4802 = vmatpush.bf16.msra.mxu0 0
      %4803 = vmatpush.bf16.msra.mxu0 %v4681
      %4804 = vmatpush.bf16.msra.mxu0 %v4679
      %4805 = vmatpush.bf16.msra.mxu0 %v4677
      %4806 = vmatpush.bf16.msra.mxu0 %v4675
      %4807 = vmatmul.bf16.gmra.mxu0 %v4759
      %v4808 = vpop.f32.mrf.mxu0
      %v4809 = vadd.f32 %v4701, %v4808
      %v4810 = vpop.f32.mrf.mxu0
      %v4811 = vadd.f32 %v4706, %v4810
      %4812 = vmatmul.bf16.gmra.mxu0 %v4762
      %v4813 = vpop.f32.mrf.mxu0
      %v4814 = vadd.f32 %v4711, %v4813
      %v4815 = vpop.f32.mrf.mxu0
      %v4816 = vadd.f32 %v4716, %v4815
      %4817 = vmatmul.bf16.gmra.mxu0 %v4765
      %v4818 = vpop.f32.mrf.mxu0
      %v4819 = vadd.f32 %v4721, %v4818
      %v4820 = vpop.f32.mrf.mxu0
      %v4821 = vadd.f32 %v4726, %v4820
      %4822 = vmatmul.bf16.gmra.mxu0 %v4768
      %v4823 = vpop.f32.mrf.mxu0
      %v4824 = vadd.f32 %v4731, %v4823
      %v4825 = vpop.f32.mrf.mxu0
      %v4826 = vadd.f32 %v4736, %v4825
      %4827 = vdwg.mxu0
      %v4828 = vadd.f32 %v280, %v4780
      %v4829 = vadd.f32 %v281, %v4809
      %v4830 = vadd.f32 %v282, %v4782
      %v4831 = vadd.f32 %v283, %v4811
      %v4832 = vadd.f32 %v284, %v4785
      %v4833 = vadd.f32 %v285, %v4814
      %v4834 = vadd.f32 %v286, %v4787
      %v4835 = vadd.f32 %v287, %v4816
      %v4836 = vadd.f32 %v288, %v4790
      %v4837 = vadd.f32 %v289, %v4819
      %v4838 = vadd.f32 %v290, %v4792
      %v4839 = vadd.f32 %v291, %v4821
      %v4840 = vadd.f32 %v292, %v4795
      %v4841 = vadd.f32 %v293, %v4824
      %v4842 = vadd.f32 %v294, %v4797
      %v4843 = vadd.f32 %v295, %v4826
      %4844 = vst [vmem:[%s278] sm:$0xff] %v4828
      %4845 = vst [vmem:[%s278 + $0x8] sm:$0xff] %v4829
      %4846 = vst [vmem:[%s278 + $0x10] sm:$0xff] %v4830
      %4847 = vst [vmem:[%s278 + $0x18] sm:$0xff] %v4831
      %4848 = vst [vmem:[%s278 + $0x20] sm:$0xff] %v4832
      %4849 = vst [vmem:[%s278 + $0x28] sm:$0xff] %v4833
      %4850 = vst [vmem:[%s278 + $0x30] sm:$0xff] %v4834
      %4851 = vst [vmem:[%s278 + $0x38] sm:$0xff] %v4835
      %4852 = vst [vmem:[%s278 + $0x40] sm:$0xff] %v4836
      %4853 = vst [vmem:[%s278 + $0x48] sm:$0xff] %v4837
      %4854 = vst [vmem:[%s278 + $0x50] sm:$0xff] %v4838
      %4855 = vst [vmem:[%s278 + $0x58] sm:$0xff] %v4839
      %4856 = vst [vmem:[%s278 + $0x60] sm:$0xff] %v4840
      %4857 = vst [vmem:[%s278 + $0x68] sm:$0xff] %v4841
      %4858 = vst [vmem:[%s278 + $0x70] sm:$0xff] %v4842
      %4859 = vst [vmem:[%s278 + $0x78] sm:$0xff] %v4843
      %p4860 = scmp.lt.s32.totalorder %s18, 1
      %s4861 = scalar_select %p4860, %s18, 1
      %s4862 = smul.addr %s4861, 16
      %s4863 = smul.addr %s4862, 8
      %s4864 = scalar_lea.vmem %s7, %s4863
      // Predicated region
      $region49: #{attention_block.1} parent=47 // pred_check
        %p4865 = pneg %p188
      $region50: #{attention_block.1} parent=47 // pred_check_branch
        %4867 = sbr.rel (%p4865) target = $region52
      $region51: #{attention_block.1} parent=47 // pred_region
        _
      $region52: #{attention_block.1} parent=47 // pred_fallthru
        _
    $region48: #{attention_block.1} parent=5 // pred_fallthru
      _
    %p4868 = scmp.le.s32.totalorder 2, %s13
    // Predicated region
    $region53: #{attention_block.1} parent=5 // pred_check
      %p4869 = pneg %p4868
    $region54: #{attention_block.1} parent=5 // pred_check_branch
      %4871 = sbr.rel (%p4869) target = $region56
    $region55: #{attention_block.1} parent=5 // pred_region
      %s4872 = ssub.s32 %s13, 2
      // Predicated region
      $region57: #{attention_block.1} parent=55 // pred_check
        %p4873 = pneg %p194
      $region58: #{attention_block.1} parent=55 // pred_check_branch
        %4875 = sbr.rel (%p4873) target = $region60
      $region59: #{attention_block.1} parent=55 // pred_region
        %p4876 = scmp.lt.s32.totalorder %s19, 1
        %s4877 = scalar_select %p4876, %s19, 1
        %s4878 = smul.addr %s4877, 16
        %s4879 = smul.addr %s4878, 8
        %s4880 = scalar_lea.vmem %s7, %s4879
      $region60: #{attention_block.1} parent=55 // pred_fallthru
        _
    $region56: #{attention_block.1} parent=5 // pred_fallthru
      _
  $region6: #{attention_block.1} parent=0 // loop_footer
    %s17 = sadd.s32 1, %s13
  $region7: #{attention_block.1} parent=0 // loop_footer_branch
    %12 = sbr.rel target = $region3
  $region8: #{attention_block.1} parent=0 // loop_exit
    _

</llo_original>
